<compile_context>
chip_gen: v7x
topology: tpu7x:2x2x1
jax: 0.10.0
libtpu: 0.0.40
codegen_flags: <defaults>
</compile_context>

<pallas_src>
import functools

import jax
import jax.numpy as jnp
from jax import lax
from jax.experimental import pallas as pl
from jax.experimental.pallas import tpu as pltpu


_LANE = 128      # vreg lane width  -> hidden size padded to a multiple of this
_SUBLANE = 8     # f32 sublane rows -> batch padded to a multiple of this


def _round_up(x, m):
    return ((x + m - 1) // m) * m


def _vmem_limit_bytes():
    """Generation-aware VMEM cap: ~80% of physical (64 MiB v7x, 128 MiB v5e/v6e)."""
    try:
        phys = pltpu.get_tpu_info().vmem_capacity_bytes
    except Exception:
        phys = 64 * 1024 * 1024          # conservative (v7x-sized) fallback
    return int(phys * 0.8)


def _pick_time_chunk(seq_len, per_step_bytes, budget_bytes):
    """Largest divisor of seq_len whose pipeline buffers fit the VMEM budget."""
    cap = max(1, int(budget_bytes) // max(1, int(per_step_bytes)))
    cap = min(cap, seq_len)
    for c in range(cap, 0, -1):
        if seq_len % c == 0:
            return c
    return 1


def _lstm_recurrence_kernel(gx_ref, whh_ref, out_ref, h_scr, c_scr,
                            *, hid_p, t_chunk, unroll):
    """One grid step = t_chunk LSTM timesteps; h/c persist in f32 VMEM scratch."""
    t = pl.program_id(0)

    @pl.when(t == 0)
    def _init():
        h_scr[...] = jnp.zeros_like(h_scr)
        c_scr[...] = jnp.zeros_like(c_scr)

    H = hid_p
    cdt = whh_ref.dtype     # MXU streaming dtype (bf16 by default, f32 optional)

    def step(tc, carry):
        h, c = carry
        # Only h @ W_hh is on the serial critical path (x @ W_ih precomputed
        # outside). W_hh is read from its VMEM-resident ref inside the loop
        # rather than hoisted as a live value (avoids vreg spills at large H).
        gates = gx_ref[tc].astype(jnp.float32) + jnp.dot(
            h.astype(cdt), whh_ref[...], preferred_element_type=jnp.float32)
        # Gate order (i, f, o, g); H is a multiple of 128, so the 3H sigmoid
        # slab / 1H tanh slab split is vreg-aligned (no masked lane selects).
        sig = jax.nn.sigmoid(gates[:, :3 * H])
        g_g = jnp.tanh(gates[:, 3 * H:])
        i_g = sig[:, 0 * H:1 * H]
        f_g = sig[:, 1 * H:2 * H]
        o_g = sig[:, 2 * H:3 * H]
        c = f_g * c + i_g * g_g
        h = o_g * jnp.tanh(c)
        out_ref[tc] = h.astype(out_ref.dtype)       # lane-dense (H % 128 == 0)
        return (h, c)

    # Bounded-unroll fori_loop: LLO scheduling visibility without the code-size
    # / vreg-pressure blowup of a fully unrolled Python loop.
    h, c = lax.fori_loop(0, t_chunk, step, (h_scr[...], c_scr[...]),
                         unroll=unroll)
    h_scr[...] = h
    c_scr[...] = c

    # TODO(synk): interleave 2 independent batch sub-tiles per timestep (two
    # h/c carries) to overlap MXU (h@W_hh) with EUP (sigmoid/tanh), and
    # optionally stage W_hh in the MXU once per chunk via
    # pltpu.matmul_push_rhs when H fits a single MXU pass.


def seq2seq_encoder_forward(x, params, *, compute_dtype=jnp.bfloat16):
    """x: [bs, seq_len, input_size] (batch_first, like the PyTorch module).

    `params` must come from pack_params(). `compute_dtype` is used for the
    HBM-streamed gate inputs and W_hh on the MXU; accumulation, gate math and
    the h/c carries stay float32.

    Returns:
      output_states: [bs, seq_len, enc_hid]
      final_h:       [num_layers=1, bs, dec_hid]
    """
    bs, seq_len, _ = x.shape
    H = params["enc_hid"]
    Hp = params["enc_hid_padded"]
    wih_t = params["wih_t"]                              # [input, 4Hp]
    whh_t = params["whh_t"].astype(compute_dtype)        # [Hp, 4Hp]
    b = params["b"]                                      # [1, 4Hp]
    wfc_t = params["wfc_t"]                              # [H, dec_hid]
    bfc = params["bfc"]                                  # [1, dec_hid]

    # Pad batch to the f32 sublane count (vregs fully populated; prerequisite
    # for future batch-subtile interleaving).
    bs_p = _round_up(max(bs, _SUBLANE), _SUBLANE)
    x_p = jnp.pad(x, ((0, bs_p - bs), (0, 0), (0, 0))) if bs_p != bs else x

    # (1) cuDNN-style hoist: input projection for every timestep as one large
    # MXU matmul, produced time-major so the per-timestep kernel access is a
    # leading-dim index. Streamed in compute_dtype (bf16 halves HBM traffic).
    gx_tm = (jnp.einsum('bti,ig->tbg', x_p, wih_t) + b).astype(compute_dtype)

    # (2) VMEM-budgeted time chunk.
    vmem_limit = _vmem_limit_bytes()
    gx_item = jnp.dtype(compute_dtype).itemsize
    out_item = jnp.dtype(x.dtype).itemsize
    per_step_bytes = (2 * bs_p * 4 * Hp * gx_item     # gx, double-buffered
                      + 2 * bs_p * Hp * out_item)     # out, double-buffered
    fixed_bytes = (whh_t.size * gx_item               # W_hh (single-buffered)
                   + 2 * bs_p * Hp * 4)               # h/c f32 scratch
    budget = max(per_step_bytes, int(vmem_limit * 0.6) - fixed_bytes)
    t_chunk = _pick_time_chunk(seq_len, per_step_bytes, budget)
    grid = (seq_len // t_chunk,)
    unroll = min(t_chunk, 8)

    kernel = functools.partial(_lstm_recurrence_kernel,
                               hid_p=Hp, t_chunk=t_chunk, unroll=unroll)

    def build_call(buffer_invariants):
        if buffer_invariants:
            # Grid-invariant W_hh: single-buffered (no useless second copy).
            whh_spec = pl.BlockSpec((Hp, 4 * Hp), lambda t: (0, 0),
                                    pipeline_mode=pl.Buffered(1))
        else:
            whh_spec = pl.BlockSpec((Hp, 4 * Hp), lambda t: (0, 0))
        return pl.pallas_call(
            kernel,
            out_shape=jax.ShapeDtypeStruct((seq_len, bs_p, Hp), x.dtype),
            grid_spec=pltpu.PrefetchScalarGridSpec(
                num_scalar_prefetch=0,
                grid=grid,
                in_specs=[
                    pl.BlockSpec((t_chunk, bs_p, 4 * Hp), lambda t: (t, 0, 0)),
                    whh_spec,
                ],
                out_specs=pl.BlockSpec((t_chunk, bs_p, Hp),
                                       lambda t: (t, 0, 0)),
                scratch_shapes=[
                    pltpu.VMEM((bs_p, Hp), jnp.float32),   # h carry
                    pltpu.VMEM((bs_p, Hp), jnp.float32),   # c carry
                ],
            ),
            compiler_params=pltpu.CompilerParams(
                # Time must stay serial: h/c scratch carries state.
                dimension_semantics=("arbitrary",),
                vmem_limit_bytes=vmem_limit,
            ),
        )

    # TODO(synk): for bs >= 16 on v7x (2 TensorCores), add a leading
    # "parallel" batch-tile grid axis with per-tile h/c scratch.
    try:
        out_tm = jax.block_until_ready(build_call(True)(gx_tm, whh_t))
    except Exception:
        # Fallback for environments without BlockSpec pipeline_mode support.
        out_tm = build_call(False)(gx_tm, whh_t)

    # (3) final_h = tanh(fc(h_T)): a trivial one-shot matmul — run it in XLA
    # on the last output row instead of keeping W_fc resident in kernel VMEM.
    output_states = jnp.transpose(out_tm, (1, 0, 2))[:bs, :, :H]
    h_T = out_tm[seq_len - 1, :bs, :H].astype(jnp.float32)
    final_h = jnp.tanh(h_T @ wfc_t + bfc)[None, :, :].astype(x.dtype)
    return output_states, final_h


def init_torch_params(key, input_size, enc_hid, dec_hid, dtype=jnp.float32):
    """Random parameters with the PyTorch shapes / gate order (i, f, g, o)."""
    ks = jax.random.split(key, 6)
    k = 1.0 / jnp.sqrt(enc_hid)
    u = lambda kk, shape: jax.random.uniform(kk, shape, dtype, -k, k)
    return {
        "w_ih": u(ks[0], (4 * enc_hid, input_size)),  # lstm.weight_ih_l0
        "w_hh": u(ks[1], (4 * enc_hid, enc_hid)),     # lstm.weight_hh_l0
        "b_ih": u(ks[2], (4 * enc_hid,)),             # lstm.bias_ih_l0
        "b_hh": u(ks[3], (4 * enc_hid,)),             # lstm.bias_hh_l0
        "w_fc": u(ks[4], (dec_hid, enc_hid)),         # fc.weight
        "b_fc": u(ks[5], (dec_hid,)),                 # fc.bias
    }


def pack_params(tp, *, lane=_LANE):
    """Repack PyTorch-layout params for the kernel:
       * reorder LSTM gates (i, f, g, o) -> (i, f, o, g) so the three sigmoid
         gates form one contiguous lane slab,
       * transpose weights for right-multiplication and fuse the two biases,
       * zero-pad the hidden size to a multiple of 128 so gate slabs are
         vreg-aligned and output stores are lane-dense. Padded hidden lanes
         stay exactly 0 through the recurrence (zero weights/bias => i*g = 0
         and o*tanh(c) = 0 on the pad), so results are bit-identical.
    TODO(synk): num_layers > 1 / inter-layer dropout not implemented
    (module defaults are num_layers=1, dropout=0.0)."""
    H = tp["w_hh"].shape[1]
    Hp = _round_up(H, lane)
    dec_hid = tp["w_fc"].shape[0]

    def reorder_pad_gates(w):
        # w: [4H, ...] grouped along axis 0 by gate in order (i, f, g, o).
        i, f, g, o = jnp.split(w, 4, axis=0)
        pad = ((0, Hp - H),) + ((0, 0),) * (w.ndim - 1)
        return jnp.concatenate([jnp.pad(p, pad) for p in (i, f, o, g)], axis=0)

    w_ih = reorder_pad_gates(tp["w_ih"])                         # [4Hp, input]
    w_hh = reorder_pad_gates(tp["w_hh"])                         # [4Hp, H]
    w_hh = jnp.pad(w_hh, ((0, 0), (0, Hp - H)))                  # [4Hp, Hp]
    b = reorder_pad_gates((tp["b_ih"] + tp["b_hh"])[:, None])[:, 0]  # [4Hp]

    return {
        "wih_t": w_ih.T,                 # [input, 4Hp]
        "whh_t": w_hh.T,                 # [Hp, 4Hp]
        "b": b[None, :],                 # [1, 4Hp]
        "wfc_t": tp["w_fc"].T,           # [H, dec_hid] (unpadded; fc runs in XLA)
        "bfc": tp["b_fc"][None, :],      # [1, dec_hid]
        "enc_hid": H,
        "enc_hid_padded": Hp,
        "dec_hid": dec_hid,
    }


def _reference_forward(x, tp):
    """Pure-JAX reference implementing exactly nn.LSTM semantics
    (gate order i, f, g, o) + tanh(fc(h_T)), for validation."""
    H = tp["w_hh"].shape[1]
    wih_t = tp["w_ih"].T
    whh_t = tp["w_hh"].T
    b = (tp["b_ih"] + tp["b_hh"])[None, :]
    bs = x.shape[0]

    def step(carry, x_t):
        h, c = carry
        gates = x_t @ wih_t + h @ whh_t + b
        i = jax.nn.sigmoid(gates[:, 0 * H:1 * H])
        f = jax.nn.sigmoid(gates[:, 1 * H:2 * H])
        g = jnp.tanh(gates[:, 2 * H:3 * H])
        o = jax.nn.sigmoid(gates[:, 3 * H:4 * H])
        c = f * c + i * g
        h = o * jnp.tanh(c)
        return (h, c), h

    h0 = jnp.zeros((bs, H), jnp.float32)
    (hT, _), hs = jax.lax.scan(step, (h0, h0), jnp.transpose(x, (1, 0, 2)))
    out = jnp.transpose(hs, (1, 0, 2))
    final_h = jnp.tanh(hT @ tp["w_fc"].T + tp["b_fc"])[None, :, :]
    return out, final_h


if __name__ == "__main__":
    bs, seq_len, input_size = 2, 8, 16
    enc_hid, dec_hid = 32, 32

    key = jax.random.PRNGKey(0)
    kx, kp = jax.random.split(key)
    x = jax.random.normal(kx, (bs, seq_len, input_size), jnp.float32)

    torch_params = init_torch_params(kp, input_size, enc_hid, dec_hid)
    params = pack_params(torch_params)
    ref_out, ref_fh = _reference_forward(x, torch_params)

    # 1) all-float32 path: must match the nn.LSTM reference tightly.
    out, final_h = seq2seq_encoder_forward(x, params, compute_dtype=jnp.float32)
    out = jax.block_until_ready(out)
    final_h = jax.block_until_ready(final_h)
    assert out.shape == (bs, seq_len, enc_hid)
    assert final_h.shape == (1, bs, dec_hid)
    assert jnp.allclose(out, ref_out, atol=1e-5, rtol=1e-5)
    assert jnp.allclose(final_h, ref_fh, atol=1e-5, rtol=1e-5)

    # 2) default bf16-streaming path (f32 accumulation + f32 h/c carries):
    #    looser tolerance consistent with bf16's 8-bit mantissa.
    out_bf, final_h_bf = seq2seq_encoder_forward(x, params)
    out_bf = jax.block_until_ready(out_bf)
    final_h_bf = jax.block_until_ready(final_h_bf)
    assert out_bf.shape == (bs, seq_len, enc_hid)
    assert final_h_bf.shape == (1, bs, dec_hid)
    assert jnp.allclose(out_bf, ref_out, atol=3e-2)
    assert jnp.allclose(final_h_bf, ref_fh, atol=3e-2)

    print("KERNEL_OK")
</pallas_src>

<mosaic_0001>
module attributes {stable_mosaic.version = 11 : i64} {
  func.func @_lstm_recurrence_kernel(%arg0: i32, %arg1: memref<8x8x512xf32, #tpu.memory_space<vmem>>, %arg2: memref<128x512xf32, #tpu.memory_space<vmem>>, %arg3: memref<8x8x128xf32, #tpu.memory_space<vmem>>, %arg4: memref<8x128xf32, #tpu.memory_space<vmem>>, %arg5: memref<8x128xf32, #tpu.memory_space<vmem>>) attributes {dimension_semantics = [#tpu.dimension_semantics<arbitrary>], iteration_bounds = array<i64: 1>, scalar_prefetch = 0 : i64, scratch_operands = 2 : i64, tpu.core_type = #tpu.core_type<tc>, window_params = [{transform_indices = @transform_0, window_bounds = array<i64: 8, 8, 512>}, {pipeline_mode = #tpu.pipeline_mode<synchronous>, transform_indices = @transform_1, window_bounds = array<i64: 128, 512>}, {transform_indices = @transform_2, window_bounds = array<i64: 8, 8, 128>}]} {
    %c0_i32 = arith.constant 0 : i32
    %0 = arith.cmpi eq, %arg0, %c0_i32 : i32
    %1 = arith.extui %0 : i1 to i32
    %c0_i32_0 = arith.constant 0 : i32
    %2 = arith.cmpi ne, %1, %c0_i32_0 : i32
    scf.if %2 {
      %cst_72 = arith.constant 0.000000e+00 : f32
      %215 = vector.broadcast %cst_72 : f32 to vector<8x128xf32>
      %c0_73 = arith.constant 0 : index
      %c0_74 = arith.constant 0 : index
      %216 = vector.load %arg4[%c0_73, %c0_74] : memref<8x128xf32, #tpu.memory_space<vmem>>, vector<8x128xf32>
      tpu.vector_store %arg4[%c0_73, %c0_74], %215 {strides = array<i32>} : memref<8x128xf32, #tpu.memory_space<vmem>>, vector<8x128xf32>,
      %cst_75 = arith.constant 0.000000e+00 : f32
      %217 = vector.broadcast %cst_75 : f32 to vector<8x128xf32>
      %c0_76 = arith.constant 0 : index
      %c0_77 = arith.constant 0 : index
      %218 = vector.load %arg5[%c0_76, %c0_77] : memref<8x128xf32, #tpu.memory_space<vmem>>, vector<8x128xf32>
      tpu.vector_store %arg5[%c0_76, %c0_77], %217 {strides = array<i32>} : memref<8x128xf32, #tpu.memory_space<vmem>>, vector<8x128xf32>,
    } else {
    }
    %c0 = arith.constant 0 : index
    %c0_1 = arith.constant 0 : index
    %3 = vector.load %arg4[%c0, %c0_1] : memref<8x128xf32, #tpu.memory_space<vmem>>, vector<8x128xf32>
    %c0_2 = arith.constant 0 : index
    %c0_3 = arith.constant 0 : index
    %4 = vector.load %arg5[%c0_2, %c0_3] : memref<8x128xf32, #tpu.memory_space<vmem>>, vector<8x128xf32>
    %c0_i32_4 = arith.constant 0 : i32
    %5 = arith.index_cast %c0_i32_4 : i32 to index
    %c0_5 = arith.constant 0 : index
    %c0_6 = arith.constant 0 : index
    %6 = vector.load %arg1[%5, %c0_5, %c0_6] : memref<8x8x512xf32, #tpu.memory_space<vmem>>, vector<1x8x512xf32>
    %7 = vector.shape_cast %6 : vector<1x8x512xf32> to vector<8x512xf32>
    %c0_7 = arith.constant 0 : index
    %c0_8 = arith.constant 0 : index
    %8 = vector.load %arg2[%c0_7, %c0_8] : memref<128x512xf32, #tpu.memory_space<vmem>>, vector<128x512xf32>
    %cst = arith.constant dense<0.000000e+00> : vector<8x512xf32>
    %9 = tpu.matmul %3, %8, %cst {dimension_numbers = #tpu.dot_dimension_numbers<[1], [0], [0], [1], [0, 0, 1, 1], [], []>} : vector<8x128xf32>, vector<128x512xf32>, vector<8x512xf32> -> vector<8x512xf32>
    %10 = arith.addf %7, %9 : vector<8x512xf32>
    %11 = vector.extract_strided_slice %10 {offsets = [0, 0], sizes = [8, 384], strides = [1, 1]} : vector<8x512xf32> to vector<8x384xf32>
    %12 = arith.negf %11 : vector<8x384xf32>
    %13 = math.exp %12 : vector<8x384xf32>
    %cst_9 = arith.constant 1.000000e+00 : f32
    %14 = vector.broadcast %cst_9 : f32 to vector<8x384xf32>
    %15 = arith.addf %14, %13 : vector<8x384xf32>
    %16 = arith.divf %14, %15 : vector<8x384xf32>
    %17 = vector.extract_strided_slice %10 {offsets = [0, 384], sizes = [8, 128], strides = [1, 1]} : vector<8x512xf32> to vector<8x128xf32>
    %18 = math.tanh %17 : vector<8x128xf32>
    %19 = vector.extract_strided_slice %16 {offsets = [0, 0], sizes = [8, 128], strides = [1, 1]} : vector<8x384xf32> to vector<8x128xf32>
    %20 = vector.extract_strided_slice %16 {offsets = [0, 128], sizes = [8, 128], strides = [1, 1]} : vector<8x384xf32> to vector<8x128xf32>
    %21 = vector.extract_strided_slice %16 {offsets = [0, 256], sizes = [8, 128], strides = [1, 1]} : vector<8x384xf32> to vector<8x128xf32>
    %22 = arith.mulf %20, %4 : vector<8x128xf32>
    %23 = arith.mulf %19, %18 : vector<8x128xf32>
    %24 = arith.addf %22, %23 : vector<8x128xf32>
    %25 = math.tanh %24 : vector<8x128xf32>
    %26 = arith.mulf %21, %25 : vector<8x128xf32>
    %27 = arith.index_cast %c0_i32_4 : i32 to index
    %c0_10 = arith.constant 0 : index
    %c0_11 = arith.constant 0 : index
    %28 = vector.load %arg3[%27, %c0_10, %c0_11] : memref<8x8x128xf32, #tpu.memory_space<vmem>>, vector<1x8x128xf32>
    %29 = vector.shape_cast %28 : vector<1x8x128xf32> to vector<8x128xf32>
    %30 = vector.shape_cast %26 : vector<8x128xf32> to vector<1x8x128xf32>
    tpu.vector_store %arg3[%27, %c0_10, %c0_11], %30 {strides = array<i32>} : memref<8x8x128xf32, #tpu.memory_space<vmem>>, vector<1x8x128xf32>,
    %c1_i32 = arith.constant 1 : i32
    %31 = arith.index_cast %c1_i32 : i32 to index
    %c0_12 = arith.constant 0 : index
    %c0_13 = arith.constant 0 : index
    %32 = vector.load %arg1[%31, %c0_12, %c0_13] : memref<8x8x512xf32, #tpu.memory_space<vmem>>, vector<1x8x512xf32>
    %33 = vector.shape_cast %32 : vector<1x8x512xf32> to vector<8x512xf32>
    %c0_14 = arith.constant 0 : index
    %c0_15 = arith.constant 0 : index
    %34 = vector.load %arg2[%c0_14, %c0_15] : memref<128x512xf32, #tpu.memory_space<vmem>>, vector<128x512xf32>
    %cst_16 = arith.constant dense<0.000000e+00> : vector<8x512xf32>
    %35 = tpu.matmul %26, %34, %cst_16 {dimension_numbers = #tpu.dot_dimension_numbers<[1], [0], [0], [1], [0, 0, 1, 1], [], []>} : vector<8x128xf32>, vector<128x512xf32>, vector<8x512xf32> -> vector<8x512xf32>
    %36 = arith.addf %33, %35 : vector<8x512xf32>
    %37 = vector.extract_strided_slice %36 {offsets = [0, 0], sizes = [8, 384], strides = [1, 1]} : vector<8x512xf32> to vector<8x384xf32>
    %38 = arith.negf %37 : vector<8x384xf32>
    %39 = math.exp %38 : vector<8x384xf32>
    %cst_17 = arith.constant 1.000000e+00 : f32
    %40 = vector.broadcast %cst_17 : f32 to vector<8x384xf32>
    %41 = arith.addf %40, %39 : vector<8x384xf32>
    %42 = arith.divf %40, %41 : vector<8x384xf32>
    %43 = vector.extract_strided_slice %36 {offsets = [0, 384], sizes = [8, 128], strides = [1, 1]} : vector<8x512xf32> to vector<8x128xf32>
    %44 = math.tanh %43 : vector<8x128xf32>
    %45 = vector.extract_strided_slice %42 {offsets = [0, 0], sizes = [8, 128], strides = [1, 1]} : vector<8x384xf32> to vector<8x128xf32>
    %46 = vector.extract_strided_slice %42 {offsets = [0, 128], sizes = [8, 128], strides = [1, 1]} : vector<8x384xf32> to vector<8x128xf32>
    %47 = vector.extract_strided_slice %42 {offsets = [0, 256], sizes = [8, 128], strides = [1, 1]} : vector<8x384xf32> to vector<8x128xf32>
    %48 = arith.mulf %46, %24 : vector<8x128xf32>
    %49 = arith.mulf %45, %44 : vector<8x128xf32>
    %50 = arith.addf %48, %49 : vector<8x128xf32>
    %51 = math.tanh %50 : vector<8x128xf32>
    %52 = arith.mulf %47, %51 : vector<8x128xf32>
    %53 = arith.index_cast %c1_i32 : i32 to index
    %c0_18 = arith.constant 0 : index
    %c0_19 = arith.constant 0 : index
    %54 = vector.load %arg3[%53, %c0_18, %c0_19] : memref<8x8x128xf32, #tpu.memory_space<vmem>>, vector<1x8x128xf32>
    %55 = vector.shape_cast %54 : vector<1x8x128xf32> to vector<8x128xf32>
    %56 = vector.shape_cast %52 : vector<8x128xf32> to vector<1x8x128xf32>
    tpu.vector_store %arg3[%53, %c0_18, %c0_19], %56 {strides = array<i32>} : memref<8x8x128xf32, #tpu.memory_space<vmem>>, vector<1x8x128xf32>,
    %c2_i32 = arith.constant 2 : i32
    %57 = arith.index_cast %c2_i32 : i32 to index
    %c0_20 = arith.constant 0 : index
    %c0_21 = arith.constant 0 : index
    %58 = vector.load %arg1[%57, %c0_20, %c0_21] : memref<8x8x512xf32, #tpu.memory_space<vmem>>, vector<1x8x512xf32>
    %59 = vector.shape_cast %58 : vector<1x8x512xf32> to vector<8x512xf32>
    %c0_22 = arith.constant 0 : index
    %c0_23 = arith.constant 0 : index
    %60 = vector.load %arg2[%c0_22, %c0_23] : memref<128x512xf32, #tpu.memory_space<vmem>>, vector<128x512xf32>
    %cst_24 = arith.constant dense<0.000000e+00> : vector<8x512xf32>
    %61 = tpu.matmul %52, %60, %cst_24 {dimension_numbers = #tpu.dot_dimension_numbers<[1], [0], [0], [1], [0, 0, 1, 1], [], []>} : vector<8x128xf32>, vector<128x512xf32>, vector<8x512xf32> -> vector<8x512xf32>
    %62 = arith.addf %59, %61 : vector<8x512xf32>
    %63 = vector.extract_strided_slice %62 {offsets = [0, 0], sizes = [8, 384], strides = [1, 1]} : vector<8x512xf32> to vector<8x384xf32>
    %64 = arith.negf %63 : vector<8x384xf32>
    %65 = math.exp %64 : vector<8x384xf32>
    %cst_25 = arith.constant 1.000000e+00 : f32
    %66 = vector.broadcast %cst_25 : f32 to vector<8x384xf32>
    %67 = arith.addf %66, %65 : vector<8x384xf32>
    %68 = arith.divf %66, %67 : vector<8x384xf32>
    %69 = vector.extract_strided_slice %62 {offsets = [0, 384], sizes = [8, 128], strides = [1, 1]} : vector<8x512xf32> to vector<8x128xf32>
    %70 = math.tanh %69 : vector<8x128xf32>
    %71 = vector.extract_strided_slice %68 {offsets = [0, 0], sizes = [8, 128], strides = [1, 1]} : vector<8x384xf32> to vector<8x128xf32>
    %72 = vector.extract_strided_slice %68 {offsets = [0, 128], sizes = [8, 128], strides = [1, 1]} : vector<8x384xf32> to vector<8x128xf32>
    %73 = vector.extract_strided_slice %68 {offsets = [0, 256], sizes = [8, 128], strides = [1, 1]} : vector<8x384xf32> to vector<8x128xf32>
    %74 = arith.mulf %72, %50 : vector<8x128xf32>
    %75 = arith.mulf %71, %70 : vector<8x128xf32>
    %76 = arith.addf %74, %75 : vector<8x128xf32>
    %77 = math.tanh %76 : vector<8x128xf32>
    %78 = arith.mulf %73, %77 : vector<8x128xf32>
    %79 = arith.index_cast %c2_i32 : i32 to index
    %c0_26 = arith.constant 0 : index
    %c0_27 = arith.constant 0 : index
    %80 = vector.load %arg3[%79, %c0_26, %c0_27] : memref<8x8x128xf32, #tpu.memory_space<vmem>>, vector<1x8x128xf32>
    %81 = vector.shape_cast %80 : vector<1x8x128xf32> to vector<8x128xf32>
    %82 = vector.shape_cast %78 : vector<8x128xf32> to vector<1x8x128xf32>
    tpu.vector_store %arg3[%79, %c0_26, %c0_27], %82 {strides = array<i32>} : memref<8x8x128xf32, #tpu.memory_space<vmem>>, vector<1x8x128xf32>,
    %c3_i32 = arith.constant 3 : i32
    %83 = arith.index_cast %c3_i32 : i32 to index
    %c0_28 = arith.constant 0 : index
    %c0_29 = arith.constant 0 : index
    %84 = vector.load %arg1[%83, %c0_28, %c0_29] : memref<8x8x512xf32, #tpu.memory_space<vmem>>, vector<1x8x512xf32>
    %85 = vector.shape_cast %84 : vector<1x8x512xf32> to vector<8x512xf32>
    %c0_30 = arith.constant 0 : index
    %c0_31 = arith.constant 0 : index
    %86 = vector.load %arg2[%c0_30, %c0_31] : memref<128x512xf32, #tpu.memory_space<vmem>>, vector<128x512xf32>
    %cst_32 = arith.constant dense<0.000000e+00> : vector<8x512xf32>
    %87 = tpu.matmul %78, %86, %cst_32 {dimension_numbers = #tpu.dot_dimension_numbers<[1], [0], [0], [1], [0, 0, 1, 1], [], []>} : vector<8x128xf32>, vector<128x512xf32>, vector<8x512xf32> -> vector<8x512xf32>
    %88 = arith.addf %85, %87 : vector<8x512xf32>
    %89 = vector.extract_strided_slice %88 {offsets = [0, 0], sizes = [8, 384], strides = [1, 1]} : vector<8x512xf32> to vector<8x384xf32>
    %90 = arith.negf %89 : vector<8x384xf32>
    %91 = math.exp %90 : vector<8x384xf32>
    %cst_33 = arith.constant 1.000000e+00 : f32
    %92 = vector.broadcast %cst_33 : f32 to vector<8x384xf32>
    %93 = arith.addf %92, %91 : vector<8x384xf32>
    %94 = arith.divf %92, %93 : vector<8x384xf32>
    %95 = vector.extract_strided_slice %88 {offsets = [0, 384], sizes = [8, 128], strides = [1, 1]} : vector<8x512xf32> to vector<8x128xf32>
    %96 = math.tanh %95 : vector<8x128xf32>
    %97 = vector.extract_strided_slice %94 {offsets = [0, 0], sizes = [8, 128], strides = [1, 1]} : vector<8x384xf32> to vector<8x128xf32>
    %98 = vector.extract_strided_slice %94 {offsets = [0, 128], sizes = [8, 128], strides = [1, 1]} : vector<8x384xf32> to vector<8x128xf32>
    %99 = vector.extract_strided_slice %94 {offsets = [0, 256], sizes = [8, 128], strides = [1, 1]} : vector<8x384xf32> to vector<8x128xf32>
    %100 = arith.mulf %98, %76 : vector<8x128xf32>
    %101 = arith.mulf %97, %96 : vector<8x128xf32>
    %102 = arith.addf %100, %101 : vector<8x128xf32>
    %103 = math.tanh %102 : vector<8x128xf32>
    %104 = arith.mulf %99, %103 : vector<8x128xf32>
    %105 = arith.index_cast %c3_i32 : i32 to index
    %c0_34 = arith.constant 0 : index
    %c0_35 = arith.constant 0 : index
    %106 = vector.load %arg3[%105, %c0_34, %c0_35] : memref<8x8x128xf32, #tpu.memory_space<vmem>>, vector<1x8x128xf32>
    %107 = vector.shape_cast %106 : vector<1x8x128xf32> to vector<8x128xf32>
    %108 = vector.shape_cast %104 : vector<8x128xf32> to vector<1x8x128xf32>
    tpu.vector_store %arg3[%105, %c0_34, %c0_35], %108 {strides = array<i32>} : memref<8x8x128xf32, #tpu.memory_space<vmem>>, vector<1x8x128xf32>,
    %c4_i32 = arith.constant 4 : i32
    %109 = arith.index_cast %c4_i32 : i32 to index
    %c0_36 = arith.constant 0 : index
    %c0_37 = arith.constant 0 : index
    %110 = vector.load %arg1[%109, %c0_36, %c0_37] : memref<8x8x512xf32, #tpu.memory_space<vmem>>, vector<1x8x512xf32>
    %111 = vector.shape_cast %110 : vector<1x8x512xf32> to vector<8x512xf32>
    %c0_38 = arith.constant 0 : index
    %c0_39 = arith.constant 0 : index
    %112 = vector.load %arg2[%c0_38, %c0_39] : memref<128x512xf32, #tpu.memory_space<vmem>>, vector<128x512xf32>
    %cst_40 = arith.constant dense<0.000000e+00> : vector<8x512xf32>
    %113 = tpu.matmul %104, %112, %cst_40 {dimension_numbers = #tpu.dot_dimension_numbers<[1], [0], [0], [1], [0, 0, 1, 1], [], []>} : vector<8x128xf32>, vector<128x512xf32>, vector<8x512xf32> -> vector<8x512xf32>
    %114 = arith.addf %111, %113 : vector<8x512xf32>
    %115 = vector.extract_strided_slice %114 {offsets = [0, 0], sizes = [8, 384], strides = [1, 1]} : vector<8x512xf32> to vector<8x384xf32>
    %116 = arith.negf %115 : vector<8x384xf32>
    %117 = math.exp %116 : vector<8x384xf32>
    %cst_41 = arith.constant 1.000000e+00 : f32
    %118 = vector.broadcast %cst_41 : f32 to vector<8x384xf32>
    %119 = arith.addf %118, %117 : vector<8x384xf32>
    %120 = arith.divf %118, %119 : vector<8x384xf32>
    %121 = vector.extract_strided_slice %114 {offsets = [0, 384], sizes = [8, 128], strides = [1, 1]} : vector<8x512xf32> to vector<8x128xf32>
    %122 = math.tanh %121 : vector<8x128xf32>
    %123 = vector.extract_strided_slice %120 {offsets = [0, 0], sizes = [8, 128], strides = [1, 1]} : vector<8x384xf32> to vector<8x128xf32>
    %124 = vector.extract_strided_slice %120 {offsets = [0, 128], sizes = [8, 128], strides = [1, 1]} : vector<8x384xf32> to vector<8x128xf32>
    %125 = vector.extract_strided_slice %120 {offsets = [0, 256], sizes = [8, 128], strides = [1, 1]} : vector<8x384xf32> to vector<8x128xf32>
    %126 = arith.mulf %124, %102 : vector<8x128xf32>
    %127 = arith.mulf %123, %122 : vector<8x128xf32>
    %128 = arith.addf %126, %127 : vector<8x128xf32>
    %129 = math.tanh %128 : vector<8x128xf32>
    %130 = arith.mulf %125, %129 : vector<8x128xf32>
    %131 = arith.index_cast %c4_i32 : i32 to index
    %c0_42 = arith.constant 0 : index
    %c0_43 = arith.constant 0 : index
    %132 = vector.load %arg3[%131, %c0_42, %c0_43] : memref<8x8x128xf32, #tpu.memory_space<vmem>>, vector<1x8x128xf32>
    %133 = vector.shape_cast %132 : vector<1x8x128xf32> to vector<8x128xf32>
    %134 = vector.shape_cast %130 : vector<8x128xf32> to vector<1x8x128xf32>
    tpu.vector_store %arg3[%131, %c0_42, %c0_43], %134 {strides = array<i32>} : memref<8x8x128xf32, #tpu.memory_space<vmem>>, vector<1x8x128xf32>,
    %c5_i32 = arith.constant 5 : i32
    %135 = arith.index_cast %c5_i32 : i32 to index
    %c0_44 = arith.constant 0 : index
    %c0_45 = arith.constant 0 : index
    %136 = vector.load %arg1[%135, %c0_44, %c0_45] : memref<8x8x512xf32, #tpu.memory_space<vmem>>, vector<1x8x512xf32>
    %137 = vector.shape_cast %136 : vector<1x8x512xf32> to vector<8x512xf32>
    %c0_46 = arith.constant 0 : index
    %c0_47 = arith.constant 0 : index
    %138 = vector.load %arg2[%c0_46, %c0_47] : memref<128x512xf32, #tpu.memory_space<vmem>>, vector<128x512xf32>
    %cst_48 = arith.constant dense<0.000000e+00> : vector<8x512xf32>
    %139 = tpu.matmul %130, %138, %cst_48 {dimension_numbers = #tpu.dot_dimension_numbers<[1], [0], [0], [1], [0, 0, 1, 1], [], []>} : vector<8x128xf32>, vector<128x512xf32>, vector<8x512xf32> -> vector<8x512xf32>
    %140 = arith.addf %137, %139 : vector<8x512xf32>
    %141 = vector.extract_strided_slice %140 {offsets = [0, 0], sizes = [8, 384], strides = [1, 1]} : vector<8x512xf32> to vector<8x384xf32>
    %142 = arith.negf %141 : vector<8x384xf32>
    %143 = math.exp %142 : vector<8x384xf32>
    %cst_49 = arith.constant 1.000000e+00 : f32
    %144 = vector.broadcast %cst_49 : f32 to vector<8x384xf32>
    %145 = arith.addf %144, %143 : vector<8x384xf32>
    %146 = arith.divf %144, %145 : vector<8x384xf32>
    %147 = vector.extract_strided_slice %140 {offsets = [0, 384], sizes = [8, 128], strides = [1, 1]} : vector<8x512xf32> to vector<8x128xf32>
    %148 = math.tanh %147 : vector<8x128xf32>
    %149 = vector.extract_strided_slice %146 {offsets = [0, 0], sizes = [8, 128], strides = [1, 1]} : vector<8x384xf32> to vector<8x128xf32>
    %150 = vector.extract_strided_slice %146 {offsets = [0, 128], sizes = [8, 128], strides = [1, 1]} : vector<8x384xf32> to vector<8x128xf32>
    %151 = vector.extract_strided_slice %146 {offsets = [0, 256], sizes = [8, 128], strides = [1, 1]} : vector<8x384xf32> to vector<8x128xf32>
    %152 = arith.mulf %150, %128 : vector<8x128xf32>
    %153 = arith.mulf %149, %148 : vector<8x128xf32>
    %154 = arith.addf %152, %153 : vector<8x128xf32>
    %155 = math.tanh %154 : vector<8x128xf32>
    %156 = arith.mulf %151, %155 : vector<8x128xf32>
    %157 = arith.index_cast %c5_i32 : i32 to index
    %c0_50 = arith.constant 0 : index
    %c0_51 = arith.constant 0 : index
    %158 = vector.load %arg3[%157, %c0_50, %c0_51] : memref<8x8x128xf32, #tpu.memory_space<vmem>>, vector<1x8x128xf32>
    %159 = vector.shape_cast %158 : vector<1x8x128xf32> to vector<8x128xf32>
    %160 = vector.shape_cast %156 : vector<8x128xf32> to vector<1x8x128xf32>
    tpu.vector_store %arg3[%157, %c0_50, %c0_51], %160 {strides = array<i32>} : memref<8x8x128xf32, #tpu.memory_space<vmem>>, vector<1x8x128xf32>,
    %c6_i32 = arith.constant 6 : i32
    %161 = arith.index_cast %c6_i32 : i32 to index
    %c0_52 = arith.constant 0 : index
    %c0_53 = arith.constant 0 : index
    %162 = vector.load %arg1[%161, %c0_52, %c0_53] : memref<8x8x512xf32, #tpu.memory_space<vmem>>, vector<1x8x512xf32>
    %163 = vector.shape_cast %162 : vector<1x8x512xf32> to vector<8x512xf32>
    %c0_54 = arith.constant 0 : index
    %c0_55 = arith.constant 0 : index
    %164 = vector.load %arg2[%c0_54, %c0_55] : memref<128x512xf32, #tpu.memory_space<vmem>>, vector<128x512xf32>
    %cst_56 = arith.constant dense<0.000000e+00> : vector<8x512xf32>
    %165 = tpu.matmul %156, %164, %cst_56 {dimension_numbers = #tpu.dot_dimension_numbers<[1], [0], [0], [1], [0, 0, 1, 1], [], []>} : vector<8x128xf32>, vector<128x512xf32>, vector<8x512xf32> -> vector<8x512xf32>
    %166 = arith.addf %163, %165 : vector<8x512xf32>
    %167 = vector.extract_strided_slice %166 {offsets = [0, 0], sizes = [8, 384], strides = [1, 1]} : vector<8x512xf32> to vector<8x384xf32>
    %168 = arith.negf %167 : vector<8x384xf32>
    %169 = math.exp %168 : vector<8x384xf32>
    %cst_57 = arith.constant 1.000000e+00 : f32
    %170 = vector.broadcast %cst_57 : f32 to vector<8x384xf32>
    %171 = arith.addf %170, %169 : vector<8x384xf32>
    %172 = arith.divf %170, %171 : vector<8x384xf32>
    %173 = vector.extract_strided_slice %166 {offsets = [0, 384], sizes = [8, 128], strides = [1, 1]} : vector<8x512xf32> to vector<8x128xf32>
    %174 = math.tanh %173 : vector<8x128xf32>
    %175 = vector.extract_strided_slice %172 {offsets = [0, 0], sizes = [8, 128], strides = [1, 1]} : vector<8x384xf32> to vector<8x128xf32>
    %176 = vector.extract_strided_slice %172 {offsets = [0, 128], sizes = [8, 128], strides = [1, 1]} : vector<8x384xf32> to vector<8x128xf32>
    %177 = vector.extract_strided_slice %172 {offsets = [0, 256], sizes = [8, 128], strides = [1, 1]} : vector<8x384xf32> to vector<8x128xf32>
    %178 = arith.mulf %176, %154 : vector<8x128xf32>
    %179 = arith.mulf %175, %174 : vector<8x128xf32>
    %180 = arith.addf %178, %179 : vector<8x128xf32>
    %181 = math.tanh %180 : vector<8x128xf32>
    %182 = arith.mulf %177, %181 : vector<8x128xf32>
    %183 = arith.index_cast %c6_i32 : i32 to index
    %c0_58 = arith.constant 0 : index
    %c0_59 = arith.constant 0 : index
    %184 = vector.load %arg3[%183, %c0_58, %c0_59] : memref<8x8x128xf32, #tpu.memory_space<vmem>>, vector<1x8x128xf32>
    %185 = vector.shape_cast %184 : vector<1x8x128xf32> to vector<8x128xf32>
    %186 = vector.shape_cast %182 : vector<8x128xf32> to vector<1x8x128xf32>
    tpu.vector_store %arg3[%183, %c0_58, %c0_59], %186 {strides = array<i32>} : memref<8x8x128xf32, #tpu.memory_space<vmem>>, vector<1x8x128xf32>,
    %c7_i32 = arith.constant 7 : i32
    %187 = arith.index_cast %c7_i32 : i32 to index
    %c0_60 = arith.constant 0 : index
    %c0_61 = arith.constant 0 : index
    %188 = vector.load %arg1[%187, %c0_60, %c0_61] : memref<8x8x512xf32, #tpu.memory_space<vmem>>, vector<1x8x512xf32>
    %189 = vector.shape_cast %188 : vector<1x8x512xf32> to vector<8x512xf32>
    %c0_62 = arith.constant 0 : index
    %c0_63 = arith.constant 0 : index
    %190 = vector.load %arg2[%c0_62, %c0_63] : memref<128x512xf32, #tpu.memory_space<vmem>>, vector<128x512xf32>
    %cst_64 = arith.constant dense<0.000000e+00> : vector<8x512xf32>
    %191 = tpu.matmul %182, %190, %cst_64 {dimension_numbers = #tpu.dot_dimension_numbers<[1], [0], [0], [1], [0, 0, 1, 1], [], []>} : vector<8x128xf32>, vector<128x512xf32>, vector<8x512xf32> -> vector<8x512xf32>
    %192 = arith.addf %189, %191 : vector<8x512xf32>
    %193 = vector.extract_strided_slice %192 {offsets = [0, 0], sizes = [8, 384], strides = [1, 1]} : vector<8x512xf32> to vector<8x384xf32>
    %194 = arith.negf %193 : vector<8x384xf32>
    %195 = math.exp %194 : vector<8x384xf32>
    %cst_65 = arith.constant 1.000000e+00 : f32
    %196 = vector.broadcast %cst_65 : f32 to vector<8x384xf32>
    %197 = arith.addf %196, %195 : vector<8x384xf32>
    %198 = arith.divf %196, %197 : vector<8x384xf32>
    %199 = vector.extract_strided_slice %192 {offsets = [0, 384], sizes = [8, 128], strides = [1, 1]} : vector<8x512xf32> to vector<8x128xf32>
    %200 = math.tanh %199 : vector<8x128xf32>
    %201 = vector.extract_strided_slice %198 {offsets = [0, 0], sizes = [8, 128], strides = [1, 1]} : vector<8x384xf32> to vector<8x128xf32>
    %202 = vector.extract_strided_slice %198 {offsets = [0, 128], sizes = [8, 128], strides = [1, 1]} : vector<8x384xf32> to vector<8x128xf32>
    %203 = vector.extract_strided_slice %198 {offsets = [0, 256], sizes = [8, 128], strides = [1, 1]} : vector<8x384xf32> to vector<8x128xf32>
    %204 = arith.mulf %202, %180 : vector<8x128xf32>
    %205 = arith.mulf %201, %200 : vector<8x128xf32>
    %206 = arith.addf %204, %205 : vector<8x128xf32>
    %207 = math.tanh %206 : vector<8x128xf32>
    %208 = arith.mulf %203, %207 : vector<8x128xf32>
    %209 = arith.index_cast %c7_i32 : i32 to index
    %c0_66 = arith.constant 0 : index
    %c0_67 = arith.constant 0 : index
    %210 = vector.load %arg3[%209, %c0_66, %c0_67] : memref<8x8x128xf32, #tpu.memory_space<vmem>>, vector<1x8x128xf32>
    %211 = vector.shape_cast %210 : vector<1x8x128xf32> to vector<8x128xf32>
    %212 = vector.shape_cast %208 : vector<8x128xf32> to vector<1x8x128xf32>
    tpu.vector_store %arg3[%209, %c0_66, %c0_67], %212 {strides = array<i32>} : memref<8x8x128xf32, #tpu.memory_space<vmem>>, vector<1x8x128xf32>,
    %c8_i32 = arith.constant 8 : i32
    %c0_68 = arith.constant 0 : index
    %c0_69 = arith.constant 0 : index
    %213 = vector.load %arg4[%c0_68, %c0_69] : memref<8x128xf32, #tpu.memory_space<vmem>>, vector<8x128xf32>
    tpu.vector_store %arg4[%c0_68, %c0_69], %208 {strides = array<i32>} : memref<8x128xf32, #tpu.memory_space<vmem>>, vector<8x128xf32>,
    %c0_70 = arith.constant 0 : index
    %c0_71 = arith.constant 0 : index
    %214 = vector.load %arg5[%c0_70, %c0_71] : memref<8x128xf32, #tpu.memory_space<vmem>>, vector<8x128xf32>
    tpu.vector_store %arg5[%c0_70, %c0_71], %206 {strides = array<i32>} : memref<8x128xf32, #tpu.memory_space<vmem>>, vector<8x128xf32>,
    return
  }
  func.func @transform_0(%arg0: i32) -> (i32, i32, i32) {
    %c0_i32 = arith.constant 0 : i32
    %c0_i32_0 = arith.constant 0 : i32
    %c0_i32_1 = arith.constant 0 : i32
    return %arg0, %c0_i32, %c0_i32_0 : i32, i32, i32
  }
  func.func @transform_1(%arg0: i32) -> (i32, i32) {
    %c0_i32 = arith.constant 0 : i32
    %c0_i32_0 = arith.constant 0 : i32
    %c0_i32_1 = arith.constant 0 : i32
    return %c0_i32, %c0_i32_0 : i32, i32
  }
  func.func @transform_2(%arg0: i32) -> (i32, i32, i32) {
    %c0_i32 = arith.constant 0 : i32
    %c0_i32_0 = arith.constant 0 : i32
    %c0_i32_1 = arith.constant 0 : i32
    return %arg0, %c0_i32, %c0_i32_0 : i32, i32, i32
  }
}

module attributes {stable_mosaic.version = 11 : i64} {
  func.func @_lstm_recurrence_kernel(%arg0: i32, %arg1: memref<8x8x512xf32, #tpu.memory_space<vmem>>, %arg2: memref<128x512xf32, #tpu.memory_space<vmem>>, %arg3: memref<8x8x128xf32, #tpu.memory_space<vmem>>, %arg4: memref<8x128xf32, #tpu.memory_space<vmem>>, %arg5: memref<8x128xf32, #tpu.memory_space<vmem>>) attributes {dimension_semantics = [#tpu.dimension_semantics<arbitrary>], iteration_bounds = array<i64: 1>, scalar_prefetch = 0 : i64, scratch_operands = 2 : i64, tpu.core_type = #tpu.core_type<tc>, window_params = [{transform_indices = @transform_0, window_bounds = array<i64: 8, 8, 512>}, {pipeline_mode = #tpu.pipeline_mode<synchronous>, transform_indices = @transform_1, window_bounds = array<i64: 128, 512>}, {transform_indices = @transform_2, window_bounds = array<i64: 8, 8, 128>}]} {
    %c0_i32 = arith.constant 0 : i32
    %0 = arith.cmpi eq, %arg0, %c0_i32 : i32
    %1 = arith.extui %0 : i1 to i32
    %c0_i32_0 = arith.constant 0 : i32
    %2 = arith.cmpi ne, %1, %c0_i32_0 : i32
    scf.if %2 {
      %cst_72 = arith.constant 0.000000e+00 : f32
      %215 = vector.broadcast %cst_72 : f32 to vector<8x128xf32>
      %c0_73 = arith.constant 0 : index
      %c0_74 = arith.constant 0 : index
      %216 = vector.load %arg4[%c0_73, %c0_74] : memref<8x128xf32, #tpu.memory_space<vmem>>, vector<8x128xf32>
      tpu.vector_store %arg4[%c0_73, %c0_74], %215 {strides = array<i32>} : memref<8x128xf32, #tpu.memory_space<vmem>>, vector<8x128xf32>,
      %cst_75 = arith.constant 0.000000e+00 : f32
      %217 = vector.broadcast %cst_75 : f32 to vector<8x128xf32>
      %c0_76 = arith.constant 0 : index
      %c0_77 = arith.constant 0 : index
      %218 = vector.load %arg5[%c0_76, %c0_77] : memref<8x128xf32, #tpu.memory_space<vmem>>, vector<8x128xf32>
      tpu.vector_store %arg5[%c0_76, %c0_77], %217 {strides = array<i32>} : memref<8x128xf32, #tpu.memory_space<vmem>>, vector<8x128xf32>,
    } else {
    }
    %c0 = arith.constant 0 : index
    %c0_1 = arith.constant 0 : index
    %3 = vector.load %arg4[%c0, %c0_1] : memref<8x128xf32, #tpu.memory_space<vmem>>, vector<8x128xf32>
    %c0_2 = arith.constant 0 : index
    %c0_3 = arith.constant 0 : index
    %4 = vector.load %arg5[%c0_2, %c0_3] : memref<8x128xf32, #tpu.memory_space<vmem>>, vector<8x128xf32>
    %c0_i32_4 = arith.constant 0 : i32
    %5 = arith.index_cast %c0_i32_4 : i32 to index
    %c0_5 = arith.constant 0 : index
    %c0_6 = arith.constant 0 : index
    %6 = vector.load %arg1[%5, %c0_5, %c0_6] : memref<8x8x512xf32, #tpu.memory_space<vmem>>, vector<1x8x512xf32>
    %7 = vector.shape_cast %6 : vector<1x8x512xf32> to vector<8x512xf32>
    %c0_7 = arith.constant 0 : index
    %c0_8 = arith.constant 0 : index
    %8 = vector.load %arg2[%c0_7, %c0_8] : memref<128x512xf32, #tpu.memory_space<vmem>>, vector<128x512xf32>
    %cst = arith.constant dense<0.000000e+00> : vector<8x512xf32>
    %9 = tpu.matmul %3, %8, %cst {dimension_numbers = #tpu.dot_dimension_numbers<[1], [0], [0], [1], [0, 0, 1, 1], [], []>} : vector<8x128xf32>, vector<128x512xf32>, vector<8x512xf32> -> vector<8x512xf32>
    %10 = arith.addf %7, %9 : vector<8x512xf32>
    %11 = vector.extract_strided_slice %10 {offsets = [0, 0], sizes = [8, 384], strides = [1, 1]} : vector<8x512xf32> to vector<8x384xf32>
    %12 = arith.negf %11 : vector<8x384xf32>
    %13 = math.exp %12 : vector<8x384xf32>
    %cst_9 = arith.constant 1.000000e+00 : f32
    %14 = vector.broadcast %cst_9 : f32 to vector<8x384xf32>
    %15 = arith.addf %14, %13 : vector<8x384xf32>
    %16 = arith.divf %14, %15 : vector<8x384xf32>
    %17 = vector.extract_strided_slice %10 {offsets = [0, 384], sizes = [8, 128], strides = [1, 1]} : vector<8x512xf32> to vector<8x128xf32>
    %18 = math.tanh %17 : vector<8x128xf32>
    %19 = vector.extract_strided_slice %16 {offsets = [0, 0], sizes = [8, 128], strides = [1, 1]} : vector<8x384xf32> to vector<8x128xf32>
    %20 = vector.extract_strided_slice %16 {offsets = [0, 128], sizes = [8, 128], strides = [1, 1]} : vector<8x384xf32> to vector<8x128xf32>
    %21 = vector.extract_strided_slice %16 {offsets = [0, 256], sizes = [8, 128], strides = [1, 1]} : vector<8x384xf32> to vector<8x128xf32>
    %22 = arith.mulf %20, %4 : vector<8x128xf32>
    %23 = arith.mulf %19, %18 : vector<8x128xf32>
    %24 = arith.addf %22, %23 : vector<8x128xf32>
    %25 = math.tanh %24 : vector<8x128xf32>
    %26 = arith.mulf %21, %25 : vector<8x128xf32>
    %27 = arith.index_cast %c0_i32_4 : i32 to index
    %c0_10 = arith.constant 0 : index
    %c0_11 = arith.constant 0 : index
    %28 = vector.load %arg3[%27, %c0_10, %c0_11] : memref<8x8x128xf32, #tpu.memory_space<vmem>>, vector<1x8x128xf32>
    %29 = vector.shape_cast %28 : vector<1x8x128xf32> to vector<8x128xf32>
    %30 = vector.shape_cast %26 : vector<8x128xf32> to vector<1x8x128xf32>
    tpu.vector_store %arg3[%27, %c0_10, %c0_11], %30 {strides = array<i32>} : memref<8x8x128xf32, #tpu.memory_space<vmem>>, vector<1x8x128xf32>,
    %c1_i32 = arith.constant 1 : i32
    %31 = arith.index_cast %c1_i32 : i32 to index
    %c0_12 = arith.constant 0 : index
    %c0_13 = arith.constant 0 : index
    %32 = vector.load %arg1[%31, %c0_12, %c0_13] : memref<8x8x512xf32, #tpu.memory_space<vmem>>, vector<1x8x512xf32>
    %33 = vector.shape_cast %32 : vector<1x8x512xf32> to vector<8x512xf32>
    %c0_14 = arith.constant 0 : index
    %c0_15 = arith.constant 0 : index
    %34 = vector.load %arg2[%c0_14, %c0_15] : memref<128x512xf32, #tpu.memory_space<vmem>>, vector<128x512xf32>
    %cst_16 = arith.constant dense<0.000000e+00> : vector<8x512xf32>
    %35 = tpu.matmul %26, %34, %cst_16 {dimension_numbers = #tpu.dot_dimension_numbers<[1], [0], [0], [1], [0, 0, 1, 1], [], []>} : vector<8x128xf32>, vector<128x512xf32>, vector<8x512xf32> -> vector<8x512xf32>
    %36 = arith.addf %33, %35 : vector<8x512xf32>
    %37 = vector.extract_strided_slice %36 {offsets = [0, 0], sizes = [8, 384], strides = [1, 1]} : vector<8x512xf32> to vector<8x384xf32>
    %38 = arith.negf %37 : vector<8x384xf32>
    %39 = math.exp %38 : vector<8x384xf32>
    %cst_17 = arith.constant 1.000000e+00 : f32
    %40 = vector.broadcast %cst_17 : f32 to vector<8x384xf32>
    %41 = arith.addf %40, %39 : vector<8x384xf32>
    %42 = arith.divf %40, %41 : vector<8x384xf32>
    %43 = vector.extract_strided_slice %36 {offsets = [0, 384], sizes = [8, 128], strides = [1, 1]} : vector<8x512xf32> to vector<8x128xf32>
    %44 = math.tanh %43 : vector<8x128xf32>
    %45 = vector.extract_strided_slice %42 {offsets = [0, 0], sizes = [8, 128], strides = [1, 1]} : vector<8x384xf32> to vector<8x128xf32>
    %46 = vector.extract_strided_slice %42 {offsets = [0, 128], sizes = [8, 128], strides = [1, 1]} : vector<8x384xf32> to vector<8x128xf32>
    %47 = vector.extract_strided_slice %42 {offsets = [0, 256], sizes = [8, 128], strides = [1, 1]} : vector<8x384xf32> to vector<8x128xf32>
    %48 = arith.mulf %46, %24 : vector<8x128xf32>
    %49 = arith.mulf %45, %44 : vector<8x128xf32>
    %50 = arith.addf %48, %49 : vector<8x128xf32>
    %51 = math.tanh %50 : vector<8x128xf32>
    %52 = arith.mulf %47, %51 : vector<8x128xf32>
    %53 = arith.index_cast %c1_i32 : i32 to index
    %c0_18 = arith.constant 0 : index
    %c0_19 = arith.constant 0 : index
    %54 = vector.load %arg3[%53, %c0_18, %c0_19] : memref<8x8x128xf32, #tpu.memory_space<vmem>>, vector<1x8x128xf32>
    %55 = vector.shape_cast %54 : vector<1x8x128xf32> to vector<8x128xf32>
    %56 = vector.shape_cast %52 : vector<8x128xf32> to vector<1x8x128xf32>
    tpu.vector_store %arg3[%53, %c0_18, %c0_19], %56 {strides = array<i32>} : memref<8x8x128xf32, #tpu.memory_space<vmem>>, vector<1x8x128xf32>,
    %c2_i32 = arith.constant 2 : i32
    %57 = arith.index_cast %c2_i32 : i32 to index
    %c0_20 = arith.constant 0 : index
    %c0_21 = arith.constant 0 : index
    %58 = vector.load %arg1[%57, %c0_20, %c0_21] : memref<8x8x512xf32, #tpu.memory_space<vmem>>, vector<1x8x512xf32>
    %59 = vector.shape_cast %58 : vector<1x8x512xf32> to vector<8x512xf32>
    %c0_22 = arith.constant 0 : index
    %c0_23 = arith.constant 0 : index
    %60 = vector.load %arg2[%c0_22, %c0_23] : memref<128x512xf32, #tpu.memory_space<vmem>>, vector<128x512xf32>
    %cst_24 = arith.constant dense<0.000000e+00> : vector<8x512xf32>
    %61 = tpu.matmul %52, %60, %cst_24 {dimension_numbers = #tpu.dot_dimension_numbers<[1], [0], [0], [1], [0, 0, 1, 1], [], []>} : vector<8x128xf32>, vector<128x512xf32>, vector<8x512xf32> -> vector<8x512xf32>
    %62 = arith.addf %59, %61 : vector<8x512xf32>
    %63 = vector.extract_strided_slice %62 {offsets = [0, 0], sizes = [8, 384], strides = [1, 1]} : vector<8x512xf32> to vector<8x384xf32>
    %64 = arith.negf %63 : vector<8x384xf32>
    %65 = math.exp %64 : vector<8x384xf32>
    %cst_25 = arith.constant 1.000000e+00 : f32
    %66 = vector.broadcast %cst_25 : f32 to vector<8x384xf32>
    %67 = arith.addf %66, %65 : vector<8x384xf32>
    %68 = arith.divf %66, %67 : vector<8x384xf32>
    %69 = vector.extract_strided_slice %62 {offsets = [0, 384], sizes = [8, 128], strides = [1, 1]} : vector<8x512xf32> to vector<8x128xf32>
    %70 = math.tanh %69 : vector<8x128xf32>
    %71 = vector.extract_strided_slice %68 {offsets = [0, 0], sizes = [8, 128], strides = [1, 1]} : vector<8x384xf32> to vector<8x128xf32>
    %72 = vector.extract_strided_slice %68 {offsets = [0, 128], sizes = [8, 128], strides = [1, 1]} : vector<8x384xf32> to vector<8x128xf32>
    %73 = vector.extract_strided_slice %68 {offsets = [0, 256], sizes = [8, 128], strides = [1, 1]} : vector<8x384xf32> to vector<8x128xf32>
    %74 = arith.mulf %72, %50 : vector<8x128xf32>
    %75 = arith.mulf %71, %70 : vector<8x128xf32>
    %76 = arith.addf %74, %75 : vector<8x128xf32>
    %77 = math.tanh %76 : vector<8x128xf32>
    %78 = arith.mulf %73, %77 : vector<8x128xf32>
    %79 = arith.index_cast %c2_i32 : i32 to index
    %c0_26 = arith.constant 0 : index
    %c0_27 = arith.constant 0 : index
    %80 = vector.load %arg3[%79, %c0_26, %c0_27] : memref<8x8x128xf32, #tpu.memory_space<vmem>>, vector<1x8x128xf32>
    %81 = vector.shape_cast %80 : vector<1x8x128xf32> to vector<8x128xf32>
    %82 = vector.shape_cast %78 : vector<8x128xf32> to vector<1x8x128xf32>
    tpu.vector_store %arg3[%79, %c0_26, %c0_27], %82 {strides = array<i32>} : memref<8x8x128xf32, #tpu.memory_space<vmem>>, vector<1x8x128xf32>,
    %c3_i32 = arith.constant 3 : i32
    %83 = arith.index_cast %c3_i32 : i32 to index
    %c0_28 = arith.constant 0 : index
    %c0_29 = arith.constant 0 : index
    %84 = vector.load %arg1[%83, %c0_28, %c0_29] : memref<8x8x512xf32, #tpu.memory_space<vmem>>, vector<1x8x512xf32>
    %85 = vector.shape_cast %84 : vector<1x8x512xf32> to vector<8x512xf32>
    %c0_30 = arith.constant 0 : index
    %c0_31 = arith.constant 0 : index
    %86 = vector.load %arg2[%c0_30, %c0_31] : memref<128x512xf32, #tpu.memory_space<vmem>>, vector<128x512xf32>
    %cst_32 = arith.constant dense<0.000000e+00> : vector<8x512xf32>
    %87 = tpu.matmul %78, %86, %cst_32 {dimension_numbers = #tpu.dot_dimension_numbers<[1], [0], [0], [1], [0, 0, 1, 1], [], []>} : vector<8x128xf32>, vector<128x512xf32>, vector<8x512xf32> -> vector<8x512xf32>
    %88 = arith.addf %85, %87 : vector<8x512xf32>
    %89 = vector.extract_strided_slice %88 {offsets = [0, 0], sizes = [8, 384], strides = [1, 1]} : vector<8x512xf32> to vector<8x384xf32>
    %90 = arith.negf %89 : vector<8x384xf32>
    %91 = math.exp %90 : vector<8x384xf32>
    %cst_33 = arith.constant 1.000000e+00 : f32
    %92 = vector.broadcast %cst_33 : f32 to vector<8x384xf32>
    %93 = arith.addf %92, %91 : vector<8x384xf32>
    %94 = arith.divf %92, %93 : vector<8x384xf32>
    %95 = vector.extract_strided_slice %88 {offsets = [0, 384], sizes = [8, 128], strides = [1, 1]} : vector<8x512xf32> to vector<8x128xf32>
    %96 = math.tanh %95 : vector<8x128xf32>
    %97 = vector.extract_strided_slice %94 {offsets = [0, 0], sizes = [8, 128], strides = [1, 1]} : vector<8x384xf32> to vector<8x128xf32>
    %98 = vector.extract_strided_slice %94 {offsets = [0, 128], sizes = [8, 128], strides = [1, 1]} : vector<8x384xf32> to vector<8x128xf32>
    %99 = vector.extract_strided_slice %94 {offsets = [0, 256], sizes = [8, 128], strides = [1, 1]} : vector<8x384xf32> to vector<8x128xf32>
    %100 = arith.mulf %98, %76 : vector<8x128xf32>
    %101 = arith.mulf %97, %96 : vector<8x128xf32>
    %102 = arith.addf %100, %101 : vector<8x128xf32>
    %103 = math.tanh %102 : vector<8x128xf32>
    %104 = arith.mulf %99, %103 : vector<8x128xf32>
    %105 = arith.index_cast %c3_i32 : i32 to index
    %c0_34 = arith.constant 0 : index
    %c0_35 = arith.constant 0 : index
    %106 = vector.load %arg3[%105, %c0_34, %c0_35] : memref<8x8x128xf32, #tpu.memory_space<vmem>>, vector<1x8x128xf32>
    %107 = vector.shape_cast %106 : vector<1x8x128xf32> to vector<8x128xf32>
    %108 = vector.shape_cast %104 : vector<8x128xf32> to vector<1x8x128xf32>
    tpu.vector_store %arg3[%105, %c0_34, %c0_35], %108 {strides = array<i32>} : memref<8x8x128xf32, #tpu.memory_space<vmem>>, vector<1x8x128xf32>,
    %c4_i32 = arith.constant 4 : i32
    %109 = arith.index_cast %c4_i32 : i32 to index
    %c0_36 = arith.constant 0 : index
    %c0_37 = arith.constant 0 : index
    %110 = vector.load %arg1[%109, %c0_36, %c0_37] : memref<8x8x512xf32, #tpu.memory_space<vmem>>, vector<1x8x512xf32>
    %111 = vector.shape_cast %110 : vector<1x8x512xf32> to vector<8x512xf32>
    %c0_38 = arith.constant 0 : index
    %c0_39 = arith.constant 0 : index
    %112 = vector.load %arg2[%c0_38, %c0_39] : memref<128x512xf32, #tpu.memory_space<vmem>>, vector<128x512xf32>
    %cst_40 = arith.constant dense<0.000000e+00> : vector<8x512xf32>
    %113 = tpu.matmul %104, %112, %cst_40 {dimension_numbers = #tpu.dot_dimension_numbers<[1], [0], [0], [1], [0, 0, 1, 1], [], []>} : vector<8x128xf32>, vector<128x512xf32>, vector<8x512xf32> -> vector<8x512xf32>
    %114 = arith.addf %111, %113 : vector<8x512xf32>
    %115 = vector.extract_strided_slice %114 {offsets = [0, 0], sizes = [8, 384], strides = [1, 1]} : vector<8x512xf32> to vector<8x384xf32>
    %116 = arith.negf %115 : vector<8x384xf32>
    %117 = math.exp %116 : vector<8x384xf32>
    %cst_41 = arith.constant 1.000000e+00 : f32
    %118 = vector.broadcast %cst_41 : f32 to vector<8x384xf32>
    %119 = arith.addf %118, %117 : vector<8x384xf32>
    %120 = arith.divf %118, %119 : vector<8x384xf32>
    %121 = vector.extract_strided_slice %114 {offsets = [0, 384], sizes = [8, 128], strides = [1, 1]} : vector<8x512xf32> to vector<8x128xf32>
    %122 = math.tanh %121 : vector<8x128xf32>
    %123 = vector.extract_strided_slice %120 {offsets = [0, 0], sizes = [8, 128], strides = [1, 1]} : vector<8x384xf32> to vector<8x128xf32>
    %124 = vector.extract_strided_slice %120 {offsets = [0, 128], sizes = [8, 128], strides = [1, 1]} : vector<8x384xf32> to vector<8x128xf32>
    %125 = vector.extract_strided_slice %120 {offsets = [0, 256], sizes = [8, 128], strides = [1, 1]} : vector<8x384xf32> to vector<8x128xf32>
    %126 = arith.mulf %124, %102 : vector<8x128xf32>
    %127 = arith.mulf %123, %122 : vector<8x128xf32>
    %128 = arith.addf %126, %127 : vector<8x128xf32>
    %129 = math.tanh %128 : vector<8x128xf32>
    %130 = arith.mulf %125, %129 : vector<8x128xf32>
    %131 = arith.index_cast %c4_i32 : i32 to index
    %c0_42 = arith.constant 0 : index
    %c0_43 = arith.constant 0 : index
    %132 = vector.load %arg3[%131, %c0_42, %c0_43] : memref<8x8x128xf32, #tpu.memory_space<vmem>>, vector<1x8x128xf32>
    %133 = vector.shape_cast %132 : vector<1x8x128xf32> to vector<8x128xf32>
    %134 = vector.shape_cast %130 : vector<8x128xf32> to vector<1x8x128xf32>
    tpu.vector_store %arg3[%131, %c0_42, %c0_43], %134 {strides = array<i32>} : memref<8x8x128xf32, #tpu.memory_space<vmem>>, vector<1x8x128xf32>,
    %c5_i32 = arith.constant 5 : i32
    %135 = arith.index_cast %c5_i32 : i32 to index
    %c0_44 = arith.constant 0 : index
    %c0_45 = arith.constant 0 : index
    %136 = vector.load %arg1[%135, %c0_44, %c0_45] : memref<8x8x512xf32, #tpu.memory_space<vmem>>, vector<1x8x512xf32>
    %137 = vector.shape_cast %136 : vector<1x8x512xf32> to vector<8x512xf32>
    %c0_46 = arith.constant 0 : index
    %c0_47 = arith.constant 0 : index
    %138 = vector.load %arg2[%c0_46, %c0_47] : memref<128x512xf32, #tpu.memory_space<vmem>>, vector<128x512xf32>
    %cst_48 = arith.constant dense<0.000000e+00> : vector<8x512xf32>
    %139 = tpu.matmul %130, %138, %cst_48 {dimension_numbers = #tpu.dot_dimension_numbers<[1], [0], [0], [1], [0, 0, 1, 1], [], []>} : vector<8x128xf32>, vector<128x512xf32>, vector<8x512xf32> -> vector<8x512xf32>
    %140 = arith.addf %137, %139 : vector<8x512xf32>
    %141 = vector.extract_strided_slice %140 {offsets = [0, 0], sizes = [8, 384], strides = [1, 1]} : vector<8x512xf32> to vector<8x384xf32>
    %142 = arith.negf %141 : vector<8x384xf32>
    %143 = math.exp %142 : vector<8x384xf32>
    %cst_49 = arith.constant 1.000000e+00 : f32
    %144 = vector.broadcast %cst_49 : f32 to vector<8x384xf32>
    %145 = arith.addf %144, %143 : vector<8x384xf32>
    %146 = arith.divf %144, %145 : vector<8x384xf32>
    %147 = vector.extract_strided_slice %140 {offsets = [0, 384], sizes = [8, 128], strides = [1, 1]} : vector<8x512xf32> to vector<8x128xf32>
    %148 = math.tanh %147 : vector<8x128xf32>
    %149 = vector.extract_strided_slice %146 {offsets = [0, 0], sizes = [8, 128], strides = [1, 1]} : vector<8x384xf32> to vector<8x128xf32>
    %150 = vector.extract_strided_slice %146 {offsets = [0, 128], sizes = [8, 128], strides = [1, 1]} : vector<8x384xf32> to vector<8x128xf32>
    %151 = vector.extract_strided_slice %146 {offsets = [0, 256], sizes = [8, 128], strides = [1, 1]} : vector<8x384xf32> to vector<8x128xf32>
    %152 = arith.mulf %150, %128 : vector<8x128xf32>
    %153 = arith.mulf %149, %148 : vector<8x128xf32>
    %154 = arith.addf %152, %153 : vector<8x128xf32>
    %155 = math.tanh %154 : vector<8x128xf32>
    %156 = arith.mulf %151, %155 : vector<8x128xf32>
    %157 = arith.index_cast %c5_i32 : i32 to index
    %c0_50 = arith.constant 0 : index
    %c0_51 = arith.constant 0 : index
    %158 = vector.load %arg3[%157, %c0_50, %c0_51] : memref<8x8x128xf32, #tpu.memory_space<vmem>>, vector<1x8x128xf32>
    %159 = vector.shape_cast %158 : vector<1x8x128xf32> to vector<8x128xf32>
    %160 = vector.shape_cast %156 : vector<8x128xf32> to vector<1x8x128xf32>
    tpu.vector_store %arg3[%157, %c0_50, %c0_51], %160 {strides = array<i32>} : memref<8x8x128xf32, #tpu.memory_space<vmem>>, vector<1x8x128xf32>,
    %c6_i32 = arith.constant 6 : i32
    %161 = arith.index_cast %c6_i32 : i32 to index
    %c0_52 = arith.constant 0 : index
    %c0_53 = arith.constant 0 : index
    %162 = vector.load %arg1[%161, %c0_52, %c0_53] : memref<8x8x512xf32, #tpu.memory_space<vmem>>, vector<1x8x512xf32>
    %163 = vector.shape_cast %162 : vector<1x8x512xf32> to vector<8x512xf32>
    %c0_54 = arith.constant 0 : index
    %c0_55 = arith.constant 0 : index
    %164 = vector.load %arg2[%c0_54, %c0_55] : memref<128x512xf32, #tpu.memory_space<vmem>>, vector<128x512xf32>
    %cst_56 = arith.constant dense<0.000000e+00> : vector<8x512xf32>
    %165 = tpu.matmul %156, %164, %cst_56 {dimension_numbers = #tpu.dot_dimension_numbers<[1], [0], [0], [1], [0, 0, 1, 1], [], []>} : vector<8x128xf32>, vector<128x512xf32>, vector<8x512xf32> -> vector<8x512xf32>
    %166 = arith.addf %163, %165 : vector<8x512xf32>
    %167 = vector.extract_strided_slice %166 {offsets = [0, 0], sizes = [8, 384], strides = [1, 1]} : vector<8x512xf32> to vector<8x384xf32>
    %168 = arith.negf %167 : vector<8x384xf32>
    %169 = math.exp %168 : vector<8x384xf32>
    %cst_57 = arith.constant 1.000000e+00 : f32
    %170 = vector.broadcast %cst_57 : f32 to vector<8x384xf32>
    %171 = arith.addf %170, %169 : vector<8x384xf32>
    %172 = arith.divf %170, %171 : vector<8x384xf32>
    %173 = vector.extract_strided_slice %166 {offsets = [0, 384], sizes = [8, 128], strides = [1, 1]} : vector<8x512xf32> to vector<8x128xf32>
    %174 = math.tanh %173 : vector<8x128xf32>
    %175 = vector.extract_strided_slice %172 {offsets = [0, 0], sizes = [8, 128], strides = [1, 1]} : vector<8x384xf32> to vector<8x128xf32>
    %176 = vector.extract_strided_slice %172 {offsets = [0, 128], sizes = [8, 128], strides = [1, 1]} : vector<8x384xf32> to vector<8x128xf32>
    %177 = vector.extract_strided_slice %172 {offsets = [0, 256], sizes = [8, 128], strides = [1, 1]} : vector<8x384xf32> to vector<8x128xf32>
    %178 = arith.mulf %176, %154 : vector<8x128xf32>
    %179 = arith.mulf %175, %174 : vector<8x128xf32>
    %180 = arith.addf %178, %179 : vector<8x128xf32>
    %181 = math.tanh %180 : vector<8x128xf32>
    %182 = arith.mulf %177, %181 : vector<8x128xf32>
    %183 = arith.index_cast %c6_i32 : i32 to index
    %c0_58 = arith.constant 0 : index
    %c0_59 = arith.constant 0 : index
    %184 = vector.load %arg3[%183, %c0_58, %c0_59] : memref<8x8x128xf32, #tpu.memory_space<vmem>>, vector<1x8x128xf32>
    %185 = vector.shape_cast %184 : vector<1x8x128xf32> to vector<8x128xf32>
    %186 = vector.shape_cast %182 : vector<8x128xf32> to vector<1x8x128xf32>
    tpu.vector_store %arg3[%183, %c0_58, %c0_59], %186 {strides = array<i32>} : memref<8x8x128xf32, #tpu.memory_space<vmem>>, vector<1x8x128xf32>,
    %c7_i32 = arith.constant 7 : i32
    %187 = arith.index_cast %c7_i32 : i32 to index
    %c0_60 = arith.constant 0 : index
    %c0_61 = arith.constant 0 : index
    %188 = vector.load %arg1[%187, %c0_60, %c0_61] : memref<8x8x512xf32, #tpu.memory_space<vmem>>, vector<1x8x512xf32>
    %189 = vector.shape_cast %188 : vector<1x8x512xf32> to vector<8x512xf32>
    %c0_62 = arith.constant 0 : index
    %c0_63 = arith.constant 0 : index
    %190 = vector.load %arg2[%c0_62, %c0_63] : memref<128x512xf32, #tpu.memory_space<vmem>>, vector<128x512xf32>
    %cst_64 = arith.constant dense<0.000000e+00> : vector<8x512xf32>
    %191 = tpu.matmul %182, %190, %cst_64 {dimension_numbers = #tpu.dot_dimension_numbers<[1], [0], [0], [1], [0, 0, 1, 1], [], []>} : vector<8x128xf32>, vector<128x512xf32>, vector<8x512xf32> -> vector<8x512xf32>
    %192 = arith.addf %189, %191 : vector<8x512xf32>
    %193 = vector.extract_strided_slice %192 {offsets = [0, 0], sizes = [8, 384], strides = [1, 1]} : vector<8x512xf32> to vector<8x384xf32>
    %194 = arith.negf %193 : vector<8x384xf32>
    %195 = math.exp %194 : vector<8x384xf32>
    %cst_65 = arith.constant 1.000000e+00 : f32
    %196 = vector.broadcast %cst_65 : f32 to vector<8x384xf32>
    %197 = arith.addf %196, %195 : vector<8x384xf32>
    %198 = arith.divf %196, %197 : vector<8x384xf32>
    %199 = vector.extract_strided_slice %192 {offsets = [0, 384], sizes = [8, 128], strides = [1, 1]} : vector<8x512xf32> to vector<8x128xf32>
    %200 = math.tanh %199 : vector<8x128xf32>
    %201 = vector.extract_strided_slice %198 {offsets = [0, 0], sizes = [8, 128], strides = [1, 1]} : vector<8x384xf32> to vector<8x128xf32>
    %202 = vector.extract_strided_slice %198 {offsets = [0, 128], sizes = [8, 128], strides = [1, 1]} : vector<8x384xf32> to vector<8x128xf32>
    %203 = vector.extract_strided_slice %198 {offsets = [0, 256], sizes = [8, 128], strides = [1, 1]} : vector<8x384xf32> to vector<8x128xf32>
    %204 = arith.mulf %202, %180 : vector<8x128xf32>
    %205 = arith.mulf %201, %200 : vector<8x128xf32>
    %206 = arith.addf %204, %205 : vector<8x128xf32>
    %207 = math.tanh %206 : vector<8x128xf32>
    %208 = arith.mulf %203, %207 : vector<8x128xf32>
    %209 = arith.index_cast %c7_i32 : i32 to index
    %c0_66 = arith.constant 0 : index
    %c0_67 = arith.constant 0 : index
    %210 = vector.load %arg3[%209, %c0_66, %c0_67] : memref<8x8x128xf32, #tpu.memory_space<vmem>>, vector<1x8x128xf32>
    %211 = vector.shape_cast %210 : vector<1x8x128xf32> to vector<8x128xf32>
    %212 = vector.shape_cast %208 : vector<8x128xf32> to vector<1x8x128xf32>
    tpu.vector_store %arg3[%209, %c0_66, %c0_67], %212 {strides = array<i32>} : memref<8x8x128xf32, #tpu.memory_space<vmem>>, vector<1x8x128xf32>,
    %c8_i32 = arith.constant 8 : i32
    %c0_68 = arith.constant 0 : index
    %c0_69 = arith.constant 0 : index
    %213 = vector.load %arg4[%c0_68, %c0_69] : memref<8x128xf32, #tpu.memory_space<vmem>>, vector<8x128xf32>
    tpu.vector_store %arg4[%c0_68, %c0_69], %208 {strides = array<i32>} : memref<8x128xf32, #tpu.memory_space<vmem>>, vector<8x128xf32>,
    %c0_70 = arith.constant 0 : index
    %c0_71 = arith.constant 0 : index
    %214 = vector.load %arg5[%c0_70, %c0_71] : memref<8x128xf32, #tpu.memory_space<vmem>>, vector<8x128xf32>
    tpu.vector_store %arg5[%c0_70, %c0_71], %206 {strides = array<i32>} : memref<8x128xf32, #tpu.memory_space<vmem>>, vector<8x128xf32>,
    return
  }
  func.func @transform_0(%arg0: i32) -> (i32, i32, i32) {
    %c0_i32 = arith.constant 0 : i32
    %c0_i32_0 = arith.constant 0 : i32
    %c0_i32_1 = arith.constant 0 : i32
    return %arg0, %c0_i32, %c0_i32_0 : i32, i32, i32
  }
  func.func @transform_1(%arg0: i32) -> (i32, i32) {
    %c0_i32 = arith.constant 0 : i32
    %c0_i32_0 = arith.constant 0 : i32
    %c0_i32_1 = arith.constant 0 : i32
    return %c0_i32, %c0_i32_0 : i32, i32
  }
  func.func @transform_2(%arg0: i32) -> (i32, i32, i32) {
    %c0_i32 = arith.constant 0 : i32
    %c0_i32_0 = arith.constant 0 : i32
    %c0_i32_1 = arith.constant 0 : i32
    return %arg0, %c0_i32, %c0_i32_0 : i32, i32, i32
  }
}

</mosaic_0001>

<llo_original>
// kernel: tpu_custom_call.1
$region0: #{tpu_custom_call.1}
  #allocation0 [shape = 'u32[]', space=smem, size = 0x4, offset = 0x4, fixed_abs, tag = 'smem constant byte address 0x4 - core index']
  #allocation1 [shape = 'u32[144,128]{1,0:T(1,128)}', space=vmem, size = 0x12000, scoped, tag = 'internal scratch']
  #allocation2 [shape = 'f32[8,128]{1,0:T(8,128)}', space=vmem, size = 0x1000, scoped, tag = 'scratch operand']
  #allocation3 [shape = 'f32[8,128]{1,0:T(8,128)}', space=vmem, size = 0x1000, scoped, tag = 'scratch operand']
  %s0 = inlined_call_operand.hbm [shape: f32[8,8,512], index: 0, kind: input, shape index: {}]
  %s1 = inlined_call_operand.hbm [shape: f32[128,512], index: 1, kind: input, shape index: {}]
  %s2 = inlined_call_operand.hbm [shape: f32[8,8,128], index: 2, kind: output, shape index: {}]
  %s3 = sld [smem:[#allocation0]]
  $region30: #{tpu_custom_call.1} parent=0
    _
  %s5 = ssub.s32 1, %s3
  %s6 = scalar_select 0, %s5, %s3
  $region1: #{tpu_custom_call.1} parent=0
    #allocation4 [shape = 'u8[131072]{0}', space=vmem, size = 0x20000, scoped, tag = 'input window, operand 0, single buffered']
    #allocation5 [shape = 's32[1]{0}', space=sflag, size = 0x4, scoped, tag = 'scoped memory for tpu_custom_call.1']
    #allocation6 [shape = 's32[1]{0}', space=sflag, size = 0x4, scoped, tag = 'scoped memory for tpu_custom_call.1']
    #allocation7 [shape = 'u8[262144]{0}', space=vmem, size = 0x40000, scoped, tag = 'input window, operand 1, single buffered']
    #allocation8 [shape = 's32[1]{0}', space=sflag, size = 0x4, scoped, tag = 'scoped memory for tpu_custom_call.1']
    #allocation9 [shape = 'u8[32768]{0}', space=vmem, size = 0x8000, scoped, tag = 'output window, operand 0, single buffered']
    %7 = vsyncpa [#allocation5], 0
    %8 = vsyncpa [#allocation8], 0
    %9 = vsyncpa [#allocation6], 0
    // Predicated region
    $region2: #{tpu_custom_call.1} parent=1 // pred_check
      _
    $region3: #{tpu_custom_call.1} parent=1 // pred_check_branch
      %11 = sbr.rel (0) target = $region5
    $region4: #{tpu_custom_call.1} parent=1 // pred_region
      %s13 = ssub.s32 4096, 4096
      %14 = vsyncadd [#allocation5], %s13
      %s15 = sshll.u32 [#allocation4], 4
      %s16 = int_to_ptr.vmem [resolvable:$true] %s15
      %21 = dma.hbm_to_vmem [thread:$0]  %s0, 4096, %s16, [#allocation5], 512, 512, 32
    $region5: #{tpu_custom_call.1} parent=1 // pred_fallthru
      _
    // Predicated region
    $region6: #{tpu_custom_call.1} parent=1 // pred_check
      _
    $region7: #{tpu_custom_call.1} parent=1 // pred_check_branch
      %23 = sbr.rel (0) target = $region9
    $region8: #{tpu_custom_call.1} parent=1 // pred_region
      %s25 = ssub.s32 8192, 8192
      %26 = vsyncadd [#allocation8], %s25
      %s27 = sshll.u32 [#allocation7], 4
      %s28 = int_to_ptr.vmem [resolvable:$true] %s27
      %33 = dma.hbm_to_vmem [thread:$0]  %s1, 8192, %s28, [#allocation8], 512, 512, 32
    $region9: #{tpu_custom_call.1} parent=1 // pred_fallthru
      _
    // Predicated region
    $region10: #{tpu_custom_call.1} parent=1 // pred_check
      _
    $region11: #{tpu_custom_call.1} parent=1 // pred_check_branch
      %35 = sbr.rel (0) target = $region13
    $region12: #{tpu_custom_call.1} parent=1 // pred_region
      %36 = dma.done [#allocation5], 4096
    $region13: #{tpu_custom_call.1} parent=1 // pred_fallthru
      _
    // Predicated region
    $region14: #{tpu_custom_call.1} parent=1 // pred_check
      _
    $region15: #{tpu_custom_call.1} parent=1 // pred_check_branch
      %38 = sbr.rel (0) target = $region17
    $region16: #{tpu_custom_call.1} parent=1 // pred_region
      %39 = dma.done [#allocation8], 8192
    $region17: #{tpu_custom_call.1} parent=1 // pred_fallthru
      _
    %p40 = scmp.eq.s32.totalorder 0, 0
    // Predicated region
    $region18: #{tpu_custom_call.1} parent=1 // pred_check
      %p41 = pneg %p40
    $region19: #{tpu_custom_call.1} parent=1 // pred_check_branch
      %43 = sbr.rel (%p41) target = $region21
    $region20: #{tpu_custom_call.1} parent=1 // pred_region
      %44 = vst [vmem:[#allocation2] sm:$0xff] 0.0
      %45 = vst [vmem:[#allocation3] sm:$0xff] 0.0
    $region21: #{tpu_custom_call.1} parent=1 // pred_fallthru
      _
    %v46 = vld [vmem:[#allocation2] sm:$0xff]
    %v47 = vld [vmem:[#allocation3] sm:$0xff]
    %v48 = vld [vmem:[#allocation4] sm:$0xff]
    %v49 = vld [vmem:[#allocation4 + $0x8] sm:$0xff]
    %v50 = vld [vmem:[#allocation4 + $0x10] sm:$0xff]
    %v51 = vld [vmem:[#allocation4 + $0x18] sm:$0xff]
    %v52 = vld [vmem:[#allocation7] sm:$0xff]
    %v53 = vld [vmem:[#allocation7 + $0x8] sm:$0xff]
    %v54 = vld [vmem:[#allocation7 + $0x10] sm:$0xff]
    %v55 = vld [vmem:[#allocation7 + $0x18] sm:$0xff]
    %v56 = vld [vmem:[#allocation7 + $0x20] sm:$0xff]
    %v57 = vld [vmem:[#allocation7 + $0x28] sm:$0xff]
    %v58 = vld [vmem:[#allocation7 + $0x30] sm:$0xff]
    %v59 = vld [vmem:[#allocation7 + $0x38] sm:$0xff]
    %v60 = vld [vmem:[#allocation7 + $0x40] sm:$0xff]
    %v61 = vld [vmem:[#allocation7 + $0x48] sm:$0xff]
    %v62 = vld [vmem:[#allocation7 + $0x50] sm:$0xff]
    %v63 = vld [vmem:[#allocation7 + $0x58] sm:$0xff]
    %v64 = vld [vmem:[#allocation7 + $0x60] sm:$0xff]
    %v65 = vld [vmem:[#allocation7 + $0x68] sm:$0xff]
    %v66 = vld [vmem:[#allocation7 + $0x70] sm:$0xff]
    %v67 = vld [vmem:[#allocation7 + $0x78] sm:$0xff]
    %v68 = vld [vmem:[#allocation7 + $0x80] sm:$0xff]
    %v69 = vld [vmem:[#allocation7 + $0x88] sm:$0xff]
    %v70 = vld [vmem:[#allocation7 + $0x90] sm:$0xff]
    %v71 = vld [vmem:[#allocation7 + $0x98] sm:$0xff]
    %v72 = vld [vmem:[#allocation7 + $0xa0] sm:$0xff]
    %v73 = vld [vmem:[#allocation7 + $0xa8] sm:$0xff]
    %v74 = vld [vmem:[#allocation7 + $0xb0] sm:$0xff]
    %v75 = vld [vmem:[#allocation7 + $0xb8] sm:$0xff]
    %v76 = vld [vmem:[#allocation7 + $0xc0] sm:$0xff]
    %v77 = vld [vmem:[#allocation7 + $0xc8] sm:$0xff]
    %v78 = vld [vmem:[#allocation7 + $0xd0] sm:$0xff]
    %v79 = vld [vmem:[#allocation7 + $0xd8] sm:$0xff]
    %v80 = vld [vmem:[#allocation7 + $0xe0] sm:$0xff]
    %v81 = vld [vmem:[#allocation7 + $0xe8] sm:$0xff]
    %v82 = vld [vmem:[#allocation7 + $0xf0] sm:$0xff]
    %v83 = vld [vmem:[#allocation7 + $0xf8] sm:$0xff]
    %v84 = vld [vmem:[#allocation7 + $0x100] sm:$0xff]
    %v85 = vld [vmem:[#allocation7 + $0x108] sm:$0xff]
    %v86 = vld [vmem:[#allocation7 + $0x110] sm:$0xff]
    %v87 = vld [vmem:[#allocation7 + $0x118] sm:$0xff]
    %v88 = vld [vmem:[#allocation7 + $0x120] sm:$0xff]
    %v89 = vld [vmem:[#allocation7 + $0x128] sm:$0xff]
    %v90 = vld [vmem:[#allocation7 + $0x130] sm:$0xff]
    %v91 = vld [vmem:[#allocation7 + $0x138] sm:$0xff]
    %v92 = vld [vmem:[#allocation7 + $0x140] sm:$0xff]
    %v93 = vld [vmem:[#allocation7 + $0x148] sm:$0xff]
    %v94 = vld [vmem:[#allocation7 + $0x150] sm:$0xff]
    %v95 = vld [vmem:[#allocation7 + $0x158] sm:$0xff]
    %v96 = vld [vmem:[#allocation7 + $0x160] sm:$0xff]
    %v97 = vld [vmem:[#allocation7 + $0x168] sm:$0xff]
    %v98 = vld [vmem:[#allocation7 + $0x170] sm:$0xff]
    %v99 = vld [vmem:[#allocation7 + $0x178] sm:$0xff]
    %v100 = vld [vmem:[#allocation7 + $0x180] sm:$0xff]
    %v101 = vld [vmem:[#allocation7 + $0x188] sm:$0xff]
    %v102 = vld [vmem:[#allocation7 + $0x190] sm:$0xff]
    %v103 = vld [vmem:[#allocation7 + $0x198] sm:$0xff]
    %v104 = vld [vmem:[#allocation7 + $0x1a0] sm:$0xff]
    %v105 = vld [vmem:[#allocation7 + $0x1a8] sm:$0xff]
    %v106 = vld [vmem:[#allocation7 + $0x1b0] sm:$0xff]
    %v107 = vld [vmem:[#allocation7 + $0x1b8] sm:$0xff]
    %v108 = vld [vmem:[#allocation7 + $0x1c0] sm:$0xff]
    %v109 = vld [vmem:[#allocation7 + $0x1c8] sm:$0xff]
    %v110 = vld [vmem:[#allocation7 + $0x1d0] sm:$0xff]
    %v111 = vld [vmem:[#allocation7 + $0x1d8] sm:$0xff]
    %v112 = vld [vmem:[#allocation7 + $0x1e0] sm:$0xff]
    %v113 = vld [vmem:[#allocation7 + $0x1e8] sm:$0xff]
    %v114 = vld [vmem:[#allocation7 + $0x1f0] sm:$0xff]
    %v115 = vld [vmem:[#allocation7 + $0x1f8] sm:$0xff]
    %116 = vmatprep.subr.mxu0 %v53
    %117 = vmatpush1.msra.mxu0 %v52
    %118 = vmatprep.subr.mxu0 %v57
    %119 = vmatpush1.msra.mxu0 %v56
    %120 = vmatprep.subr.mxu0 %v61
    %121 = vmatpush1.msra.mxu0 %v60
    %122 = vmatprep.subr.mxu0 %v65
    %123 = vmatpush1.msra.mxu0 %v64
    %124 = vmatprep.subr.mxu0 %v69
    %125 = vmatpush1.msra.mxu0 %v68
    %126 = vmatprep.subr.mxu0 %v73
    %127 = vmatpush1.msra.mxu0 %v72
    %128 = vmatprep.subr.mxu0 %v77
    %129 = vmatpush1.msra.mxu0 %v76
    %130 = vmatprep.subr.mxu0 %v81
    %131 = vmatpush1.msra.mxu0 %v80
    %132 = vmatprep.subr.mxu0 %v85
    %133 = vmatpush1.msra.mxu0 %v84
    %134 = vmatprep.subr.mxu0 %v89
    %135 = vmatpush1.msra.mxu0 %v88
    %136 = vmatprep.subr.mxu0 %v93
    %137 = vmatpush1.msra.mxu0 %v92
    %138 = vmatprep.subr.mxu0 %v97
    %139 = vmatpush1.msra.mxu0 %v96
    %140 = vmatprep.subr.mxu0 %v101
    %141 = vmatpush1.msra.mxu0 %v100
    %142 = vmatprep.subr.mxu0 %v105
    %143 = vmatpush1.msra.mxu0 %v104
    %144 = vmatprep.subr.mxu0 %v109
    %145 = vmatpush1.msra.mxu0 %v108
    %146 = vmatprep.subr.mxu0 %v113
    %147 = vmatpush1.msra.mxu0 %v112
    %148 = vmatprep.subr.mxu0 0.0
    %149 = vmatpush1.msra.mxu0 0.0
    %150 = vmatprep.subr.mxu0 0.0
    %151 = vmatpush1.msra.mxu0 0.0
    %152 = vmatprep.subr.mxu0 0.0
    %153 = vmatpush1.msra.mxu0 0.0
    %154 = vmatprep.subr.mxu0 0.0
    %155 = vmatpush1.msra.mxu0 0.0
    %156 = vmatprep.subr.mxu0 0.0
    %157 = vmatpush1.msra.mxu0 0.0
    %158 = vmatprep.subr.mxu0 0.0
    %159 = vmatpush1.msra.mxu0 0.0
    %160 = vmatprep.subr.mxu0 0.0
    %161 = vmatpush1.msra.mxu0 0.0
    %162 = vmatprep.subr.mxu0 0.0
    %163 = vmatpush1.msra.mxu0 0.0
    %164 = vmatprep.subr.mxu0 0.0
    %165 = vmatpush1.msra.mxu0 0.0
    %166 = vmatprep.subr.mxu0 0.0
    %167 = vmatpush1.msra.mxu0 0.0
    %168 = vmatprep.subr.mxu0 0.0
    %169 = vmatpush1.msra.mxu0 0.0
    %170 = vmatprep.subr.mxu0 0.0
    %171 = vmatpush1.msra.mxu0 0.0
    %172 = vmatprep.subr.mxu0 0.0
    %173 = vmatpush1.msra.mxu0 0.0
    %174 = vmatprep.subr.mxu0 0.0
    %175 = vmatpush1.msra.mxu0 0.0
    %176 = vmatprep.subr.mxu0 0.0
    %177 = vmatpush1.msra.mxu0 0.0
    %178 = vmatprep.subr.mxu0 0.0
    %179 = vmatpush1.msra.mxu0 0.0
    %180 = vmatprep.mubr.f32.mxu0 0.0
    %181 = vmatmul.mubr.f32.gmra.mrb[0].mxu0 %v46
    %v182 = vpop.f32.mrb[0].mxu0
    %v183 = vadd.f32 0.0, %v182
    %v184 = vpop.f32.mrb[0].mxu0
    %v185 = vadd.f32 0.0, %v184
    %186 = vdwg.mxu0
    %187 = vmatprep.subr.mxu0 %v55
    %188 = vmatpush1.msra.mxu0 %v54
    %189 = vmatprep.subr.mxu0 %v59
    %190 = vmatpush1.msra.mxu0 %v58
    %191 = vmatprep.subr.mxu0 %v63
    %192 = vmatpush1.msra.mxu0 %v62
    %193 = vmatprep.subr.mxu0 %v67
    %194 = vmatpush1.msra.mxu0 %v66
    %195 = vmatprep.subr.mxu0 %v71
    %196 = vmatpush1.msra.mxu0 %v70
    %197 = vmatprep.subr.mxu0 %v75
    %198 = vmatpush1.msra.mxu0 %v74
    %199 = vmatprep.subr.mxu0 %v79
    %200 = vmatpush1.msra.mxu0 %v78
    %201 = vmatprep.subr.mxu0 %v83
    %202 = vmatpush1.msra.mxu0 %v82
    %203 = vmatprep.subr.mxu0 %v87
    %204 = vmatpush1.msra.mxu0 %v86
    %205 = vmatprep.subr.mxu0 %v91
    %206 = vmatpush1.msra.mxu0 %v90
    %207 = vmatprep.subr.mxu0 %v95
    %208 = vmatpush1.msra.mxu0 %v94
    %209 = vmatprep.subr.mxu0 %v99
    %210 = vmatpush1.msra.mxu0 %v98
    %211 = vmatprep.subr.mxu0 %v103
    %212 = vmatpush1.msra.mxu0 %v102
    %213 = vmatprep.subr.mxu0 %v107
    %214 = vmatpush1.msra.mxu0 %v106
    %215 = vmatprep.subr.mxu0 %v111
    %216 = vmatpush1.msra.mxu0 %v110
    %217 = vmatprep.subr.mxu0 %v115
    %218 = vmatpush1.msra.mxu0 %v114
    %219 = vmatprep.subr.mxu0 0.0
    %220 = vmatpush1.msra.mxu0 0.0
    %221 = vmatprep.subr.mxu0 0.0
    %222 = vmatpush1.msra.mxu0 0.0
    %223 = vmatprep.subr.mxu0 0.0
    %224 = vmatpush1.msra.mxu0 0.0
    %225 = vmatprep.subr.mxu0 0.0
    %226 = vmatpush1.msra.mxu0 0.0
    %227 = vmatprep.subr.mxu0 0.0
    %228 = vmatpush1.msra.mxu0 0.0
    %229 = vmatprep.subr.mxu0 0.0
    %230 = vmatpush1.msra.mxu0 0.0
    %231 = vmatprep.subr.mxu0 0.0
    %232 = vmatpush1.msra.mxu0 0.0
    %233 = vmatprep.subr.mxu0 0.0
    %234 = vmatpush1.msra.mxu0 0.0
    %235 = vmatprep.subr.mxu0 0.0
    %236 = vmatpush1.msra.mxu0 0.0
    %237 = vmatprep.subr.mxu0 0.0
    %238 = vmatpush1.msra.mxu0 0.0
    %239 = vmatprep.subr.mxu0 0.0
    %240 = vmatpush1.msra.mxu0 0.0
    %241 = vmatprep.subr.mxu0 0.0
    %242 = vmatpush1.msra.mxu0 0.0
    %243 = vmatprep.subr.mxu0 0.0
    %244 = vmatpush1.msra.mxu0 0.0
    %245 = vmatprep.subr.mxu0 0.0
    %246 = vmatpush1.msra.mxu0 0.0
    %247 = vmatprep.subr.mxu0 0.0
    %248 = vmatpush1.msra.mxu0 0.0
    %249 = vmatprep.subr.mxu0 0.0
    %250 = vmatpush1.msra.mxu0 0.0
    %251 = vmatprep.mubr.f32.mxu0 0.0
    %252 = vmatmul.mubr.f32.gmra.mrb[0].mxu0 %v46
    %v253 = vpop.f32.mrb[0].mxu0
    %v254 = vadd.f32 0.0, %v253
    %v255 = vpop.f32.mrb[0].mxu0
    %v256 = vadd.f32 0.0, %v255
    %257 = vdwg.mxu0
    %v258 = vadd.f32 %v48, %v183
    %v259 = vadd.f32 %v49, %v185
    %v260 = vadd.f32 %v50, %v254
    %v261 = vadd.f32 %v51, %v256
    %v262 = vxor.u32 %v258, 2147483648
    %v263 = vxor.u32 %v259, 2147483648
    %v264 = vxor.u32 %v260, 2147483648
    %v265 = vmul.f32 %v262, 1.442695
    %v266 = vpow.pop %v265
    %v267 = vmul.f32 %v263, 1.442695
    %v268 = vpow.pop %v267
    %v269 = vmul.f32 %v264, 1.442695
    %v270 = vpow.pop %v269
    %v271 = vadd.f32 %v266, 1.0
    %v272 = vadd.f32 %v268, 1.0
    %v273 = vadd.f32 %v270, 1.0
    %v274 = vrcp.pop %v271
    %v275 = vmul.f32 1.0, %v274
    %v276 = vrcp.pop %v272
    %v277 = vmul.f32 1.0, %v276
    %v278 = vrcp.pop %v273
    %v279 = vmul.f32 1.0, %v278
    %v280 = vtanh.pop %v261
    %v281 = vmul.f32 %v277, %v47
    %v282 = vmul.f32 %v275, %v280
    %v283 = vadd.f32 %v281, %v282
    %v284 = vtanh.pop %v283
    %v285 = vmul.f32 %v279, %v284
    %286 = vst [vmem:[#allocation9] sm:$0xff] %v285
    %s287 = scalar_lea.vmem [#allocation4], 32
    %v288 = vld [vmem:[%s287] sm:$0xff]
    %v289 = vld [vmem:[%s287 + $0x8] sm:$0xff]
    %v290 = vld [vmem:[%s287 + $0x10] sm:$0xff]
    %v291 = vld [vmem:[%s287 + $0x18] sm:$0xff]
    %v292 = vld [vmem:[#allocation7] sm:$0xff]
    %v293 = vld [vmem:[#allocation7 + $0x8] sm:$0xff]
    %v294 = vld [vmem:[#allocation7 + $0x10] sm:$0xff]
    %v295 = vld [vmem:[#allocation7 + $0x18] sm:$0xff]
    %v296 = vld [vmem:[#allocation7 + $0x20] sm:$0xff]
    %v297 = vld [vmem:[#allocation7 + $0x28] sm:$0xff]
    %v298 = vld [vmem:[#allocation7 + $0x30] sm:$0xff]
    %v299 = vld [vmem:[#allocation7 + $0x38] sm:$0xff]
    %v300 = vld [vmem:[#allocation7 + $0x40] sm:$0xff]
    %v301 = vld [vmem:[#allocation7 + $0x48] sm:$0xff]
    %v302 = vld [vmem:[#allocation7 + $0x50] sm:$0xff]
    %v303 = vld [vmem:[#allocation7 + $0x58] sm:$0xff]
    %v304 = vld [vmem:[#allocation7 + $0x60] sm:$0xff]
    %v305 = vld [vmem:[#allocation7 + $0x68] sm:$0xff]
    %v306 = vld [vmem:[#allocation7 + $0x70] sm:$0xff]
    %v307 = vld [vmem:[#allocation7 + $0x78] sm:$0xff]
    %v308 = vld [vmem:[#allocation7 + $0x80] sm:$0xff]
    %v309 = vld [vmem:[#allocation7 + $0x88] sm:$0xff]
    %v310 = vld [vmem:[#allocation7 + $0x90] sm:$0xff]
    %v311 = vld [vmem:[#allocation7 + $0x98] sm:$0xff]
    %v312 = vld [vmem:[#allocation7 + $0xa0] sm:$0xff]
    %v313 = vld [vmem:[#allocation7 + $0xa8] sm:$0xff]
    %v314 = vld [vmem:[#allocation7 + $0xb0] sm:$0xff]
    %v315 = vld [vmem:[#allocation7 + $0xb8] sm:$0xff]
    %v316 = vld [vmem:[#allocation7 + $0xc0] sm:$0xff]
    %v317 = vld [vmem:[#allocation7 + $0xc8] sm:$0xff]
    %v318 = vld [vmem:[#allocation7 + $0xd0] sm:$0xff]
    %v319 = vld [vmem:[#allocation7 + $0xd8] sm:$0xff]
    %v320 = vld [vmem:[#allocation7 + $0xe0] sm:$0xff]
    %v321 = vld [vmem:[#allocation7 + $0xe8] sm:$0xff]
    %v322 = vld [vmem:[#allocation7 + $0xf0] sm:$0xff]
    %v323 = vld [vmem:[#allocation7 + $0xf8] sm:$0xff]
    %v324 = vld [vmem:[#allocation7 + $0x100] sm:$0xff]
    %v325 = vld [vmem:[#allocation7 + $0x108] sm:$0xff]
    %v326 = vld [vmem:[#allocation7 + $0x110] sm:$0xff]
    %v327 = vld [vmem:[#allocation7 + $0x118] sm:$0xff]
    %v328 = vld [vmem:[#allocation7 + $0x120] sm:$0xff]
    %v329 = vld [vmem:[#allocation7 + $0x128] sm:$0xff]
    %v330 = vld [vmem:[#allocation7 + $0x130] sm:$0xff]
    %v331 = vld [vmem:[#allocation7 + $0x138] sm:$0xff]
    %v332 = vld [vmem:[#allocation7 + $0x140] sm:$0xff]
    %v333 = vld [vmem:[#allocation7 + $0x148] sm:$0xff]
    %v334 = vld [vmem:[#allocation7 + $0x150] sm:$0xff]
    %v335 = vld [vmem:[#allocation7 + $0x158] sm:$0xff]
    %v336 = vld [vmem:[#allocation7 + $0x160] sm:$0xff]
    %v337 = vld [vmem:[#allocation7 + $0x168] sm:$0xff]
    %v338 = vld [vmem:[#allocation7 + $0x170] sm:$0xff]
    %v339 = vld [vmem:[#allocation7 + $0x178] sm:$0xff]
    %v340 = vld [vmem:[#allocation7 + $0x180] sm:$0xff]
    %v341 = vld [vmem:[#allocation7 + $0x188] sm:$0xff]
    %v342 = vld [vmem:[#allocation7 + $0x190] sm:$0xff]
    %v343 = vld [vmem:[#allocation7 + $0x198] sm:$0xff]
    %v344 = vld [vmem:[#allocation7 + $0x1a0] sm:$0xff]
    %v345 = vld [vmem:[#allocation7 + $0x1a8] sm:$0xff]
    %v346 = vld [vmem:[#allocation7 + $0x1b0] sm:$0xff]
    %v347 = vld [vmem:[#allocation7 + $0x1b8] sm:$0xff]
    %v348 = vld [vmem:[#allocation7 + $0x1c0] sm:$0xff]
    %v349 = vld [vmem:[#allocation7 + $0x1c8] sm:$0xff]
    %v350 = vld [vmem:[#allocation7 + $0x1d0] sm:$0xff]
    %v351 = vld [vmem:[#allocation7 + $0x1d8] sm:$0xff]
    %v352 = vld [vmem:[#allocation7 + $0x1e0] sm:$0xff]
    %v353 = vld [vmem:[#allocation7 + $0x1e8] sm:$0xff]
    %v354 = vld [vmem:[#allocation7 + $0x1f0] sm:$0xff]
    %v355 = vld [vmem:[#allocation7 + $0x1f8] sm:$0xff]
    %356 = vmatprep.subr.mxu0 %v293
    %357 = vmatpush1.msra.mxu0 %v292
    %358 = vmatprep.subr.mxu0 %v297
    %359 = vmatpush1.msra.mxu0 %v296
    %360 = vmatprep.subr.mxu0 %v301
    %361 = vmatpush1.msra.mxu0 %v300
    %362 = vmatprep.subr.mxu0 %v305
    %363 = vmatpush1.msra.mxu0 %v304
    %364 = vmatprep.subr.mxu0 %v309
    %365 = vmatpush1.msra.mxu0 %v308
    %366 = vmatprep.subr.mxu0 %v313
    %367 = vmatpush1.msra.mxu0 %v312
    %368 = vmatprep.subr.mxu0 %v317
    %369 = vmatpush1.msra.mxu0 %v316
    %370 = vmatprep.subr.mxu0 %v321
    %371 = vmatpush1.msra.mxu0 %v320
    %372 = vmatprep.subr.mxu0 %v325
    %373 = vmatpush1.msra.mxu0 %v324
    %374 = vmatprep.subr.mxu0 %v329
    %375 = vmatpush1.msra.mxu0 %v328
    %376 = vmatprep.subr.mxu0 %v333
    %377 = vmatpush1.msra.mxu0 %v332
    %378 = vmatprep.subr.mxu0 %v337
    %379 = vmatpush1.msra.mxu0 %v336
    %380 = vmatprep.subr.mxu0 %v341
    %381 = vmatpush1.msra.mxu0 %v340
    %382 = vmatprep.subr.mxu0 %v345
    %383 = vmatpush1.msra.mxu0 %v344
    %384 = vmatprep.subr.mxu0 %v349
    %385 = vmatpush1.msra.mxu0 %v348
    %386 = vmatprep.subr.mxu0 %v353
    %387 = vmatpush1.msra.mxu0 %v352
    %388 = vmatprep.subr.mxu0 0.0
    %389 = vmatpush1.msra.mxu0 0.0
    %390 = vmatprep.subr.mxu0 0.0
    %391 = vmatpush1.msra.mxu0 0.0
    %392 = vmatprep.subr.mxu0 0.0
    %393 = vmatpush1.msra.mxu0 0.0
    %394 = vmatprep.subr.mxu0 0.0
    %395 = vmatpush1.msra.mxu0 0.0
    %396 = vmatprep.subr.mxu0 0.0
    %397 = vmatpush1.msra.mxu0 0.0
    %398 = vmatprep.subr.mxu0 0.0
    %399 = vmatpush1.msra.mxu0 0.0
    %400 = vmatprep.subr.mxu0 0.0
    %401 = vmatpush1.msra.mxu0 0.0
    %402 = vmatprep.subr.mxu0 0.0
    %403 = vmatpush1.msra.mxu0 0.0
    %404 = vmatprep.subr.mxu0 0.0
    %405 = vmatpush1.msra.mxu0 0.0
    %406 = vmatprep.subr.mxu0 0.0
    %407 = vmatpush1.msra.mxu0 0.0
    %408 = vmatprep.subr.mxu0 0.0
    %409 = vmatpush1.msra.mxu0 0.0
    %410 = vmatprep.subr.mxu0 0.0
    %411 = vmatpush1.msra.mxu0 0.0
    %412 = vmatprep.subr.mxu0 0.0
    %413 = vmatpush1.msra.mxu0 0.0
    %414 = vmatprep.subr.mxu0 0.0
    %415 = vmatpush1.msra.mxu0 0.0
    %416 = vmatprep.subr.mxu0 0.0
    %417 = vmatpush1.msra.mxu0 0.0
    %418 = vmatprep.subr.mxu0 0.0
    %419 = vmatpush1.msra.mxu0 0.0
    %420 = vmatprep.mubr.f32.mxu0 0.0
    %421 = vmatmul.mubr.f32.gmra.mrb[0].mxu0 %v285
    %v422 = vpop.f32.mrb[0].mxu0
    %v423 = vadd.f32 0.0, %v422
    %v424 = vpop.f32.mrb[0].mxu0
    %v425 = vadd.f32 0.0, %v424
    %426 = vdwg.mxu0
    %427 = vmatprep.subr.mxu0 %v295
    %428 = vmatpush1.msra.mxu0 %v294
    %429 = vmatprep.subr.mxu0 %v299
    %430 = vmatpush1.msra.mxu0 %v298
    %431 = vmatprep.subr.mxu0 %v303
    %432 = vmatpush1.msra.mxu0 %v302
    %433 = vmatprep.subr.mxu0 %v307
    %434 = vmatpush1.msra.mxu0 %v306
    %435 = vmatprep.subr.mxu0 %v311
    %436 = vmatpush1.msra.mxu0 %v310
    %437 = vmatprep.subr.mxu0 %v315
    %438 = vmatpush1.msra.mxu0 %v314
    %439 = vmatprep.subr.mxu0 %v319
    %440 = vmatpush1.msra.mxu0 %v318
    %441 = vmatprep.subr.mxu0 %v323
    %442 = vmatpush1.msra.mxu0 %v322
    %443 = vmatprep.subr.mxu0 %v327
    %444 = vmatpush1.msra.mxu0 %v326
    %445 = vmatprep.subr.mxu0 %v331
    %446 = vmatpush1.msra.mxu0 %v330
    %447 = vmatprep.subr.mxu0 %v335
    %448 = vmatpush1.msra.mxu0 %v334
    %449 = vmatprep.subr.mxu0 %v339
    %450 = vmatpush1.msra.mxu0 %v338
    %451 = vmatprep.subr.mxu0 %v343
    %452 = vmatpush1.msra.mxu0 %v342
    %453 = vmatprep.subr.mxu0 %v347
    %454 = vmatpush1.msra.mxu0 %v346
    %455 = vmatprep.subr.mxu0 %v351
    %456 = vmatpush1.msra.mxu0 %v350
    %457 = vmatprep.subr.mxu0 %v355
    %458 = vmatpush1.msra.mxu0 %v354
    %459 = vmatprep.subr.mxu0 0.0
    %460 = vmatpush1.msra.mxu0 0.0
    %461 = vmatprep.subr.mxu0 0.0
    %462 = vmatpush1.msra.mxu0 0.0
    %463 = vmatprep.subr.mxu0 0.0
    %464 = vmatpush1.msra.mxu0 0.0
    %465 = vmatprep.subr.mxu0 0.0
    %466 = vmatpush1.msra.mxu0 0.0
    %467 = vmatprep.subr.mxu0 0.0
    %468 = vmatpush1.msra.mxu0 0.0
    %469 = vmatprep.subr.mxu0 0.0
    %470 = vmatpush1.msra.mxu0 0.0
    %471 = vmatprep.subr.mxu0 0.0
    %472 = vmatpush1.msra.mxu0 0.0
    %473 = vmatprep.subr.mxu0 0.0
    %474 = vmatpush1.msra.mxu0 0.0
    %475 = vmatprep.subr.mxu0 0.0
    %476 = vmatpush1.msra.mxu0 0.0
    %477 = vmatprep.subr.mxu0 0.0
    %478 = vmatpush1.msra.mxu0 0.0
    %479 = vmatprep.subr.mxu0 0.0
    %480 = vmatpush1.msra.mxu0 0.0
    %481 = vmatprep.subr.mxu0 0.0
    %482 = vmatpush1.msra.mxu0 0.0
    %483 = vmatprep.subr.mxu0 0.0
    %484 = vmatpush1.msra.mxu0 0.0
    %485 = vmatprep.subr.mxu0 0.0
    %486 = vmatpush1.msra.mxu0 0.0
    %487 = vmatprep.subr.mxu0 0.0
    %488 = vmatpush1.msra.mxu0 0.0
    %489 = vmatprep.subr.mxu0 0.0
    %490 = vmatpush1.msra.mxu0 0.0
    %491 = vmatprep.mubr.f32.mxu0 0.0
    %492 = vmatmul.mubr.f32.gmra.mrb[0].mxu0 %v285
    %v493 = vpop.f32.mrb[0].mxu0
    %v494 = vadd.f32 0.0, %v493
    %v495 = vpop.f32.mrb[0].mxu0
    %v496 = vadd.f32 0.0, %v495
    %497 = vdwg.mxu0
    %v498 = vadd.f32 %v288, %v423
    %v499 = vadd.f32 %v289, %v425
    %v500 = vadd.f32 %v290, %v494
    %v501 = vadd.f32 %v291, %v496
    %v502 = vxor.u32 %v498, 2147483648
    %v503 = vxor.u32 %v499, 2147483648
    %v504 = vxor.u32 %v500, 2147483648
    %v505 = vmul.f32 %v502, 1.442695
    %v506 = vpow.pop %v505
    %v507 = vmul.f32 %v503, 1.442695
    %v508 = vpow.pop %v507
    %v509 = vmul.f32 %v504, 1.442695
    %v510 = vpow.pop %v509
    %v511 = vadd.f32 %v506, 1.0
    %v512 = vadd.f32 %v508, 1.0
    %v513 = vadd.f32 %v510, 1.0
    %v514 = vrcp.pop %v511
    %v515 = vmul.f32 1.0, %v514
    %v516 = vrcp.pop %v512
    %v517 = vmul.f32 1.0, %v516
    %v518 = vrcp.pop %v513
    %v519 = vmul.f32 1.0, %v518
    %v520 = vtanh.pop %v501
    %v521 = vmul.f32 %v517, %v283
    %v522 = vmul.f32 %v515, %v520
    %v523 = vadd.f32 %v521, %v522
    %v524 = vtanh.pop %v523
    %v525 = vmul.f32 %v519, %v524
    %s526 = scalar_lea.vmem [#allocation9], 8
    %527 = vst [vmem:[%s526] sm:$0xff] %v525
    %s528 = scalar_lea.vmem [#allocation4], 64
    %v529 = vld [vmem:[%s528] sm:$0xff]
    %v530 = vld [vmem:[%s528 + $0x8] sm:$0xff]
    %v531 = vld [vmem:[%s528 + $0x10] sm:$0xff]
    %v532 = vld [vmem:[%s528 + $0x18] sm:$0xff]
    %v533 = vld [vmem:[#allocation7] sm:$0xff]
    %v534 = vld [vmem:[#allocation7 + $0x8] sm:$0xff]
    %v535 = vld [vmem:[#allocation7 + $0x10] sm:$0xff]
    %v536 = vld [vmem:[#allocation7 + $0x18] sm:$0xff]
    %v537 = vld [vmem:[#allocation7 + $0x20] sm:$0xff]
    %v538 = vld [vmem:[#allocation7 + $0x28] sm:$0xff]
    %v539 = vld [vmem:[#allocation7 + $0x30] sm:$0xff]
    %v540 = vld [vmem:[#allocation7 + $0x38] sm:$0xff]
    %v541 = vld [vmem:[#allocation7 + $0x40] sm:$0xff]
    %v542 = vld [vmem:[#allocation7 + $0x48] sm:$0xff]
    %v543 = vld [vmem:[#allocation7 + $0x50] sm:$0xff]
    %v544 = vld [vmem:[#allocation7 + $0x58] sm:$0xff]
    %v545 = vld [vmem:[#allocation7 + $0x60] sm:$0xff]
    %v546 = vld [vmem:[#allocation7 + $0x68] sm:$0xff]
    %v547 = vld [vmem:[#allocation7 + $0x70] sm:$0xff]
    %v548 = vld [vmem:[#allocation7 + $0x78] sm:$0xff]
    %v549 = vld [vmem:[#allocation7 + $0x80] sm:$0xff]
    %v550 = vld [vmem:[#allocation7 + $0x88] sm:$0xff]
    %v551 = vld [vmem:[#allocation7 + $0x90] sm:$0xff]
    %v552 = vld [vmem:[#allocation7 + $0x98] sm:$0xff]
    %v553 = vld [vmem:[#allocation7 + $0xa0] sm:$0xff]
    %v554 = vld [vmem:[#allocation7 + $0xa8] sm:$0xff]
    %v555 = vld [vmem:[#allocation7 + $0xb0] sm:$0xff]
    %v556 = vld [vmem:[#allocation7 + $0xb8] sm:$0xff]
    %v557 = vld [vmem:[#allocation7 + $0xc0] sm:$0xff]
    %v558 = vld [vmem:[#allocation7 + $0xc8] sm:$0xff]
    %v559 = vld [vmem:[#allocation7 + $0xd0] sm:$0xff]
    %v560 = vld [vmem:[#allocation7 + $0xd8] sm:$0xff]
    %v561 = vld [vmem:[#allocation7 + $0xe0] sm:$0xff]
    %v562 = vld [vmem:[#allocation7 + $0xe8] sm:$0xff]
    %v563 = vld [vmem:[#allocation7 + $0xf0] sm:$0xff]
    %v564 = vld [vmem:[#allocation7 + $0xf8] sm:$0xff]
    %v565 = vld [vmem:[#allocation7 + $0x100] sm:$0xff]
    %v566 = vld [vmem:[#allocation7 + $0x108] sm:$0xff]
    %v567 = vld [vmem:[#allocation7 + $0x110] sm:$0xff]
    %v568 = vld [vmem:[#allocation7 + $0x118] sm:$0xff]
    %v569 = vld [vmem:[#allocation7 + $0x120] sm:$0xff]
    %v570 = vld [vmem:[#allocation7 + $0x128] sm:$0xff]
    %v571 = vld [vmem:[#allocation7 + $0x130] sm:$0xff]
    %v572 = vld [vmem:[#allocation7 + $0x138] sm:$0xff]
    %v573 = vld [vmem:[#allocation7 + $0x140] sm:$0xff]
    %v574 = vld [vmem:[#allocation7 + $0x148] sm:$0xff]
    %v575 = vld [vmem:[#allocation7 + $0x150] sm:$0xff]
    %v576 = vld [vmem:[#allocation7 + $0x158] sm:$0xff]
    %v577 = vld [vmem:[#allocation7 + $0x160] sm:$0xff]
    %v578 = vld [vmem:[#allocation7 + $0x168] sm:$0xff]
    %v579 = vld [vmem:[#allocation7 + $0x170] sm:$0xff]
    %v580 = vld [vmem:[#allocation7 + $0x178] sm:$0xff]
    %v581 = vld [vmem:[#allocation7 + $0x180] sm:$0xff]
    %v582 = vld [vmem:[#allocation7 + $0x188] sm:$0xff]
    %v583 = vld [vmem:[#allocation7 + $0x190] sm:$0xff]
    %v584 = vld [vmem:[#allocation7 + $0x198] sm:$0xff]
    %v585 = vld [vmem:[#allocation7 + $0x1a0] sm:$0xff]
    %v586 = vld [vmem:[#allocation7 + $0x1a8] sm:$0xff]
    %v587 = vld [vmem:[#allocation7 + $0x1b0] sm:$0xff]
    %v588 = vld [vmem:[#allocation7 + $0x1b8] sm:$0xff]
    %v589 = vld [vmem:[#allocation7 + $0x1c0] sm:$0xff]
    %v590 = vld [vmem:[#allocation7 + $0x1c8] sm:$0xff]
    %v591 = vld [vmem:[#allocation7 + $0x1d0] sm:$0xff]
    %v592 = vld [vmem:[#allocation7 + $0x1d8] sm:$0xff]
    %v593 = vld [vmem:[#allocation7 + $0x1e0] sm:$0xff]
    %v594 = vld [vmem:[#allocation7 + $0x1e8] sm:$0xff]
    %v595 = vld [vmem:[#allocation7 + $0x1f0] sm:$0xff]
    %v596 = vld [vmem:[#allocation7 + $0x1f8] sm:$0xff]
    %597 = vmatprep.subr.mxu0 %v534
    %598 = vmatpush1.msra.mxu0 %v533
    %599 = vmatprep.subr.mxu0 %v538
    %600 = vmatpush1.msra.mxu0 %v537
    %601 = vmatprep.subr.mxu0 %v542
    %602 = vmatpush1.msra.mxu0 %v541
    %603 = vmatprep.subr.mxu0 %v546
    %604 = vmatpush1.msra.mxu0 %v545
    %605 = vmatprep.subr.mxu0 %v550
    %606 = vmatpush1.msra.mxu0 %v549
    %607 = vmatprep.subr.mxu0 %v554
    %608 = vmatpush1.msra.mxu0 %v553
    %609 = vmatprep.subr.mxu0 %v558
    %610 = vmatpush1.msra.mxu0 %v557
    %611 = vmatprep.subr.mxu0 %v562
    %612 = vmatpush1.msra.mxu0 %v561
    %613 = vmatprep.subr.mxu0 %v566
    %614 = vmatpush1.msra.mxu0 %v565
    %615 = vmatprep.subr.mxu0 %v570
    %616 = vmatpush1.msra.mxu0 %v569
    %617 = vmatprep.subr.mxu0 %v574
    %618 = vmatpush1.msra.mxu0 %v573
    %619 = vmatprep.subr.mxu0 %v578
    %620 = vmatpush1.msra.mxu0 %v577
    %621 = vmatprep.subr.mxu0 %v582
    %622 = vmatpush1.msra.mxu0 %v581
    %623 = vmatprep.subr.mxu0 %v586
    %624 = vmatpush1.msra.mxu0 %v585
    %625 = vmatprep.subr.mxu0 %v590
    %626 = vmatpush1.msra.mxu0 %v589
    %627 = vmatprep.subr.mxu0 %v594
    %628 = vmatpush1.msra.mxu0 %v593
    %629 = vmatprep.subr.mxu0 0.0
    %630 = vmatpush1.msra.mxu0 0.0
    %631 = vmatprep.subr.mxu0 0.0
    %632 = vmatpush1.msra.mxu0 0.0
    %633 = vmatprep.subr.mxu0 0.0
    %634 = vmatpush1.msra.mxu0 0.0
    %635 = vmatprep.subr.mxu0 0.0
    %636 = vmatpush1.msra.mxu0 0.0
    %637 = vmatprep.subr.mxu0 0.0
    %638 = vmatpush1.msra.mxu0 0.0
    %639 = vmatprep.subr.mxu0 0.0
    %640 = vmatpush1.msra.mxu0 0.0
    %641 = vmatprep.subr.mxu0 0.0
    %642 = vmatpush1.msra.mxu0 0.0
    %643 = vmatprep.subr.mxu0 0.0
    %644 = vmatpush1.msra.mxu0 0.0
    %645 = vmatprep.subr.mxu0 0.0
    %646 = vmatpush1.msra.mxu0 0.0
    %647 = vmatprep.subr.mxu0 0.0
    %648 = vmatpush1.msra.mxu0 0.0
    %649 = vmatprep.subr.mxu0 0.0
    %650 = vmatpush1.msra.mxu0 0.0
    %651 = vmatprep.subr.mxu0 0.0
    %652 = vmatpush1.msra.mxu0 0.0
    %653 = vmatprep.subr.mxu0 0.0
    %654 = vmatpush1.msra.mxu0 0.0
    %655 = vmatprep.subr.mxu0 0.0
    %656 = vmatpush1.msra.mxu0 0.0
    %657 = vmatprep.subr.mxu0 0.0
    %658 = vmatpush1.msra.mxu0 0.0
    %659 = vmatprep.subr.mxu0 0.0
    %660 = vmatpush1.msra.mxu0 0.0
    %661 = vmatprep.mubr.f32.mxu0 0.0
    %662 = vmatmul.mubr.f32.gmra.mrb[0].mxu0 %v525
    %v663 = vpop.f32.mrb[0].mxu0
    %v664 = vadd.f32 0.0, %v663
    %v665 = vpop.f32.mrb[0].mxu0
    %v666 = vadd.f32 0.0, %v665
    %667 = vdwg.mxu0
    %668 = vmatprep.subr.mxu0 %v536
    %669 = vmatpush1.msra.mxu0 %v535
    %670 = vmatprep.subr.mxu0 %v540
    %671 = vmatpush1.msra.mxu0 %v539
    %672 = vmatprep.subr.mxu0 %v544
    %673 = vmatpush1.msra.mxu0 %v543
    %674 = vmatprep.subr.mxu0 %v548
    %675 = vmatpush1.msra.mxu0 %v547
    %676 = vmatprep.subr.mxu0 %v552
    %677 = vmatpush1.msra.mxu0 %v551
    %678 = vmatprep.subr.mxu0 %v556
    %679 = vmatpush1.msra.mxu0 %v555
    %680 = vmatprep.subr.mxu0 %v560
    %681 = vmatpush1.msra.mxu0 %v559
    %682 = vmatprep.subr.mxu0 %v564
    %683 = vmatpush1.msra.mxu0 %v563
    %684 = vmatprep.subr.mxu0 %v568
    %685 = vmatpush1.msra.mxu0 %v567
    %686 = vmatprep.subr.mxu0 %v572
    %687 = vmatpush1.msra.mxu0 %v571
    %688 = vmatprep.subr.mxu0 %v576
    %689 = vmatpush1.msra.mxu0 %v575
    %690 = vmatprep.subr.mxu0 %v580
    %691 = vmatpush1.msra.mxu0 %v579
    %692 = vmatprep.subr.mxu0 %v584
    %693 = vmatpush1.msra.mxu0 %v583
    %694 = vmatprep.subr.mxu0 %v588
    %695 = vmatpush1.msra.mxu0 %v587
    %696 = vmatprep.subr.mxu0 %v592
    %697 = vmatpush1.msra.mxu0 %v591
    %698 = vmatprep.subr.mxu0 %v596
    %699 = vmatpush1.msra.mxu0 %v595
    %700 = vmatprep.subr.mxu0 0.0
    %701 = vmatpush1.msra.mxu0 0.0
    %702 = vmatprep.subr.mxu0 0.0
    %703 = vmatpush1.msra.mxu0 0.0
    %704 = vmatprep.subr.mxu0 0.0
    %705 = vmatpush1.msra.mxu0 0.0
    %706 = vmatprep.subr.mxu0 0.0
    %707 = vmatpush1.msra.mxu0 0.0
    %708 = vmatprep.subr.mxu0 0.0
    %709 = vmatpush1.msra.mxu0 0.0
    %710 = vmatprep.subr.mxu0 0.0
    %711 = vmatpush1.msra.mxu0 0.0
    %712 = vmatprep.subr.mxu0 0.0
    %713 = vmatpush1.msra.mxu0 0.0
    %714 = vmatprep.subr.mxu0 0.0
    %715 = vmatpush1.msra.mxu0 0.0
    %716 = vmatprep.subr.mxu0 0.0
    %717 = vmatpush1.msra.mxu0 0.0
    %718 = vmatprep.subr.mxu0 0.0
    %719 = vmatpush1.msra.mxu0 0.0
    %720 = vmatprep.subr.mxu0 0.0
    %721 = vmatpush1.msra.mxu0 0.0
    %722 = vmatprep.subr.mxu0 0.0
    %723 = vmatpush1.msra.mxu0 0.0
    %724 = vmatprep.subr.mxu0 0.0
    %725 = vmatpush1.msra.mxu0 0.0
    %726 = vmatprep.subr.mxu0 0.0
    %727 = vmatpush1.msra.mxu0 0.0
    %728 = vmatprep.subr.mxu0 0.0
    %729 = vmatpush1.msra.mxu0 0.0
    %730 = vmatprep.subr.mxu0 0.0
    %731 = vmatpush1.msra.mxu0 0.0
    %732 = vmatprep.mubr.f32.mxu0 0.0
    %733 = vmatmul.mubr.f32.gmra.mrb[0].mxu0 %v525
    %v734 = vpop.f32.mrb[0].mxu0
    %v735 = vadd.f32 0.0, %v734
    %v736 = vpop.f32.mrb[0].mxu0
    %v737 = vadd.f32 0.0, %v736
    %738 = vdwg.mxu0
    %v739 = vadd.f32 %v529, %v664
    %v740 = vadd.f32 %v530, %v666
    %v741 = vadd.f32 %v531, %v735
    %v742 = vadd.f32 %v532, %v737
    %v743 = vxor.u32 %v739, 2147483648
    %v744 = vxor.u32 %v740, 2147483648
    %v745 = vxor.u32 %v741, 2147483648
    %v746 = vmul.f32 %v743, 1.442695
    %v747 = vpow.pop %v746
    %v748 = vmul.f32 %v744, 1.442695
    %v749 = vpow.pop %v748
    %v750 = vmul.f32 %v745, 1.442695
    %v751 = vpow.pop %v750
    %v752 = vadd.f32 %v747, 1.0
    %v753 = vadd.f32 %v749, 1.0
    %v754 = vadd.f32 %v751, 1.0
    %v755 = vrcp.pop %v752
    %v756 = vmul.f32 1.0, %v755
    %v757 = vrcp.pop %v753
    %v758 = vmul.f32 1.0, %v757
    %v759 = vrcp.pop %v754
    %v760 = vmul.f32 1.0, %v759
    %v761 = vtanh.pop %v742
    %v762 = vmul.f32 %v758, %v523
    %v763 = vmul.f32 %v756, %v761
    %v764 = vadd.f32 %v762, %v763
    %v765 = vtanh.pop %v764
    %v766 = vmul.f32 %v760, %v765
    %s767 = scalar_lea.vmem [#allocation9], 16
    %768 = vst [vmem:[%s767] sm:$0xff] %v766
    %s769 = scalar_lea.vmem [#allocation4], 96
    %v770 = vld [vmem:[%s769] sm:$0xff]
    %v771 = vld [vmem:[%s769 + $0x8] sm:$0xff]
    %v772 = vld [vmem:[%s769 + $0x10] sm:$0xff]
    %v773 = vld [vmem:[%s769 + $0x18] sm:$0xff]
    %v774 = vld [vmem:[#allocation7] sm:$0xff]
    %v775 = vld [vmem:[#allocation7 + $0x8] sm:$0xff]
    %v776 = vld [vmem:[#allocation7 + $0x10] sm:$0xff]
    %v777 = vld [vmem:[#allocation7 + $0x18] sm:$0xff]
    %v778 = vld [vmem:[#allocation7 + $0x20] sm:$0xff]
    %v779 = vld [vmem:[#allocation7 + $0x28] sm:$0xff]
    %v780 = vld [vmem:[#allocation7 + $0x30] sm:$0xff]
    %v781 = vld [vmem:[#allocation7 + $0x38] sm:$0xff]
    %v782 = vld [vmem:[#allocation7 + $0x40] sm:$0xff]
    %v783 = vld [vmem:[#allocation7 + $0x48] sm:$0xff]
    %v784 = vld [vmem:[#allocation7 + $0x50] sm:$0xff]
    %v785 = vld [vmem:[#allocation7 + $0x58] sm:$0xff]
    %v786 = vld [vmem:[#allocation7 + $0x60] sm:$0xff]
    %v787 = vld [vmem:[#allocation7 + $0x68] sm:$0xff]
    %v788 = vld [vmem:[#allocation7 + $0x70] sm:$0xff]
    %v789 = vld [vmem:[#allocation7 + $0x78] sm:$0xff]
    %v790 = vld [vmem:[#allocation7 + $0x80] sm:$0xff]
    %v791 = vld [vmem:[#allocation7 + $0x88] sm:$0xff]
    %v792 = vld [vmem:[#allocation7 + $0x90] sm:$0xff]
    %v793 = vld [vmem:[#allocation7 + $0x98] sm:$0xff]
    %v794 = vld [vmem:[#allocation7 + $0xa0] sm:$0xff]
    %v795 = vld [vmem:[#allocation7 + $0xa8] sm:$0xff]
    %v796 = vld [vmem:[#allocation7 + $0xb0] sm:$0xff]
    %v797 = vld [vmem:[#allocation7 + $0xb8] sm:$0xff]
    %v798 = vld [vmem:[#allocation7 + $0xc0] sm:$0xff]
    %v799 = vld [vmem:[#allocation7 + $0xc8] sm:$0xff]
    %v800 = vld [vmem:[#allocation7 + $0xd0] sm:$0xff]
    %v801 = vld [vmem:[#allocation7 + $0xd8] sm:$0xff]
    %v802 = vld [vmem:[#allocation7 + $0xe0] sm:$0xff]
    %v803 = vld [vmem:[#allocation7 + $0xe8] sm:$0xff]
    %v804 = vld [vmem:[#allocation7 + $0xf0] sm:$0xff]
    %v805 = vld [vmem:[#allocation7 + $0xf8] sm:$0xff]
    %v806 = vld [vmem:[#allocation7 + $0x100] sm:$0xff]
    %v807 = vld [vmem:[#allocation7 + $0x108] sm:$0xff]
    %v808 = vld [vmem:[#allocation7 + $0x110] sm:$0xff]
    %v809 = vld [vmem:[#allocation7 + $0x118] sm:$0xff]
    %v810 = vld [vmem:[#allocation7 + $0x120] sm:$0xff]
    %v811 = vld [vmem:[#allocation7 + $0x128] sm:$0xff]
    %v812 = vld [vmem:[#allocation7 + $0x130] sm:$0xff]
    %v813 = vld [vmem:[#allocation7 + $0x138] sm:$0xff]
    %v814 = vld [vmem:[#allocation7 + $0x140] sm:$0xff]
    %v815 = vld [vmem:[#allocation7 + $0x148] sm:$0xff]
    %v816 = vld [vmem:[#allocation7 + $0x150] sm:$0xff]
    %v817 = vld [vmem:[#allocation7 + $0x158] sm:$0xff]
    %v818 = vld [vmem:[#allocation7 + $0x160] sm:$0xff]
    %v819 = vld [vmem:[#allocation7 + $0x168] sm:$0xff]
    %v820 = vld [vmem:[#allocation7 + $0x170] sm:$0xff]
    %v821 = vld [vmem:[#allocation7 + $0x178] sm:$0xff]
    %v822 = vld [vmem:[#allocation7 + $0x180] sm:$0xff]
    %v823 = vld [vmem:[#allocation7 + $0x188] sm:$0xff]
    %v824 = vld [vmem:[#allocation7 + $0x190] sm:$0xff]
    %v825 = vld [vmem:[#allocation7 + $0x198] sm:$0xff]
    %v826 = vld [vmem:[#allocation7 + $0x1a0] sm:$0xff]
    %v827 = vld [vmem:[#allocation7 + $0x1a8] sm:$0xff]
    %v828 = vld [vmem:[#allocation7 + $0x1b0] sm:$0xff]
    %v829 = vld [vmem:[#allocation7 + $0x1b8] sm:$0xff]
    %v830 = vld [vmem:[#allocation7 + $0x1c0] sm:$0xff]
    %v831 = vld [vmem:[#allocation7 + $0x1c8] sm:$0xff]
    %v832 = vld [vmem:[#allocation7 + $0x1d0] sm:$0xff]
    %v833 = vld [vmem:[#allocation7 + $0x1d8] sm:$0xff]
    %v834 = vld [vmem:[#allocation7 + $0x1e0] sm:$0xff]
    %v835 = vld [vmem:[#allocation7 + $0x1e8] sm:$0xff]
    %v836 = vld [vmem:[#allocation7 + $0x1f0] sm:$0xff]
    %v837 = vld [vmem:[#allocation7 + $0x1f8] sm:$0xff]
    %838 = vmatprep.subr.mxu0 %v775
    %839 = vmatpush1.msra.mxu0 %v774
    %840 = vmatprep.subr.mxu0 %v779
    %841 = vmatpush1.msra.mxu0 %v778
    %842 = vmatprep.subr.mxu0 %v783
    %843 = vmatpush1.msra.mxu0 %v782
    %844 = vmatprep.subr.mxu0 %v787
    %845 = vmatpush1.msra.mxu0 %v786
    %846 = vmatprep.subr.mxu0 %v791
    %847 = vmatpush1.msra.mxu0 %v790
    %848 = vmatprep.subr.mxu0 %v795
    %849 = vmatpush1.msra.mxu0 %v794
    %850 = vmatprep.subr.mxu0 %v799
    %851 = vmatpush1.msra.mxu0 %v798
    %852 = vmatprep.subr.mxu0 %v803
    %853 = vmatpush1.msra.mxu0 %v802
    %854 = vmatprep.subr.mxu0 %v807
    %855 = vmatpush1.msra.mxu0 %v806
    %856 = vmatprep.subr.mxu0 %v811
    %857 = vmatpush1.msra.mxu0 %v810
    %858 = vmatprep.subr.mxu0 %v815
    %859 = vmatpush1.msra.mxu0 %v814
    %860 = vmatprep.subr.mxu0 %v819
    %861 = vmatpush1.msra.mxu0 %v818
    %862 = vmatprep.subr.mxu0 %v823
    %863 = vmatpush1.msra.mxu0 %v822
    %864 = vmatprep.subr.mxu0 %v827
    %865 = vmatpush1.msra.mxu0 %v826
    %866 = vmatprep.subr.mxu0 %v831
    %867 = vmatpush1.msra.mxu0 %v830
    %868 = vmatprep.subr.mxu0 %v835
    %869 = vmatpush1.msra.mxu0 %v834
    %870 = vmatprep.subr.mxu0 0.0
    %871 = vmatpush1.msra.mxu0 0.0
    %872 = vmatprep.subr.mxu0 0.0
    %873 = vmatpush1.msra.mxu0 0.0
    %874 = vmatprep.subr.mxu0 0.0
    %875 = vmatpush1.msra.mxu0 0.0
    %876 = vmatprep.subr.mxu0 0.0
    %877 = vmatpush1.msra.mxu0 0.0
    %878 = vmatprep.subr.mxu0 0.0
    %879 = vmatpush1.msra.mxu0 0.0
    %880 = vmatprep.subr.mxu0 0.0
    %881 = vmatpush1.msra.mxu0 0.0
    %882 = vmatprep.subr.mxu0 0.0
    %883 = vmatpush1.msra.mxu0 0.0
    %884 = vmatprep.subr.mxu0 0.0
    %885 = vmatpush1.msra.mxu0 0.0
    %886 = vmatprep.subr.mxu0 0.0
    %887 = vmatpush1.msra.mxu0 0.0
    %888 = vmatprep.subr.mxu0 0.0
    %889 = vmatpush1.msra.mxu0 0.0
    %890 = vmatprep.subr.mxu0 0.0
    %891 = vmatpush1.msra.mxu0 0.0
    %892 = vmatprep.subr.mxu0 0.0
    %893 = vmatpush1.msra.mxu0 0.0
    %894 = vmatprep.subr.mxu0 0.0
    %895 = vmatpush1.msra.mxu0 0.0
    %896 = vmatprep.subr.mxu0 0.0
    %897 = vmatpush1.msra.mxu0 0.0
    %898 = vmatprep.subr.mxu0 0.0
    %899 = vmatpush1.msra.mxu0 0.0
    %900 = vmatprep.subr.mxu0 0.0
    %901 = vmatpush1.msra.mxu0 0.0
    %902 = vmatprep.mubr.f32.mxu0 0.0
    %903 = vmatmul.mubr.f32.gmra.mrb[0].mxu0 %v766
    %v904 = vpop.f32.mrb[0].mxu0
    %v905 = vadd.f32 0.0, %v904
    %v906 = vpop.f32.mrb[0].mxu0
    %v907 = vadd.f32 0.0, %v906
    %908 = vdwg.mxu0
    %909 = vmatprep.subr.mxu0 %v777
    %910 = vmatpush1.msra.mxu0 %v776
    %911 = vmatprep.subr.mxu0 %v781
    %912 = vmatpush1.msra.mxu0 %v780
    %913 = vmatprep.subr.mxu0 %v785
    %914 = vmatpush1.msra.mxu0 %v784
    %915 = vmatprep.subr.mxu0 %v789
    %916 = vmatpush1.msra.mxu0 %v788
    %917 = vmatprep.subr.mxu0 %v793
    %918 = vmatpush1.msra.mxu0 %v792
    %919 = vmatprep.subr.mxu0 %v797
    %920 = vmatpush1.msra.mxu0 %v796
    %921 = vmatprep.subr.mxu0 %v801
    %922 = vmatpush1.msra.mxu0 %v800
    %923 = vmatprep.subr.mxu0 %v805
    %924 = vmatpush1.msra.mxu0 %v804
    %925 = vmatprep.subr.mxu0 %v809
    %926 = vmatpush1.msra.mxu0 %v808
    %927 = vmatprep.subr.mxu0 %v813
    %928 = vmatpush1.msra.mxu0 %v812
    %929 = vmatprep.subr.mxu0 %v817
    %930 = vmatpush1.msra.mxu0 %v816
    %931 = vmatprep.subr.mxu0 %v821
    %932 = vmatpush1.msra.mxu0 %v820
    %933 = vmatprep.subr.mxu0 %v825
    %934 = vmatpush1.msra.mxu0 %v824
    %935 = vmatprep.subr.mxu0 %v829
    %936 = vmatpush1.msra.mxu0 %v828
    %937 = vmatprep.subr.mxu0 %v833
    %938 = vmatpush1.msra.mxu0 %v832
    %939 = vmatprep.subr.mxu0 %v837
    %940 = vmatpush1.msra.mxu0 %v836
    %941 = vmatprep.subr.mxu0 0.0
    %942 = vmatpush1.msra.mxu0 0.0
    %943 = vmatprep.subr.mxu0 0.0
    %944 = vmatpush1.msra.mxu0 0.0
    %945 = vmatprep.subr.mxu0 0.0
    %946 = vmatpush1.msra.mxu0 0.0
    %947 = vmatprep.subr.mxu0 0.0
    %948 = vmatpush1.msra.mxu0 0.0
    %949 = vmatprep.subr.mxu0 0.0
    %950 = vmatpush1.msra.mxu0 0.0
    %951 = vmatprep.subr.mxu0 0.0
    %952 = vmatpush1.msra.mxu0 0.0
    %953 = vmatprep.subr.mxu0 0.0
    %954 = vmatpush1.msra.mxu0 0.0
    %955 = vmatprep.subr.mxu0 0.0
    %956 = vmatpush1.msra.mxu0 0.0
    %957 = vmatprep.subr.mxu0 0.0
    %958 = vmatpush1.msra.mxu0 0.0
    %959 = vmatprep.subr.mxu0 0.0
    %960 = vmatpush1.msra.mxu0 0.0
    %961 = vmatprep.subr.mxu0 0.0
    %962 = vmatpush1.msra.mxu0 0.0
    %963 = vmatprep.subr.mxu0 0.0
    %964 = vmatpush1.msra.mxu0 0.0
    %965 = vmatprep.subr.mxu0 0.0
    %966 = vmatpush1.msra.mxu0 0.0
    %967 = vmatprep.subr.mxu0 0.0
    %968 = vmatpush1.msra.mxu0 0.0
    %969 = vmatprep.subr.mxu0 0.0
    %970 = vmatpush1.msra.mxu0 0.0
    %971 = vmatprep.subr.mxu0 0.0
    %972 = vmatpush1.msra.mxu0 0.0
    %973 = vmatprep.mubr.f32.mxu0 0.0
    %974 = vmatmul.mubr.f32.gmra.mrb[0].mxu0 %v766
    %v975 = vpop.f32.mrb[0].mxu0
    %v976 = vadd.f32 0.0, %v975
    %v977 = vpop.f32.mrb[0].mxu0
    %v978 = vadd.f32 0.0, %v977
    %979 = vdwg.mxu0
    %v980 = vadd.f32 %v770, %v905
    %v981 = vadd.f32 %v771, %v907
    %v982 = vadd.f32 %v772, %v976
    %v983 = vadd.f32 %v773, %v978
    %v984 = vxor.u32 %v980, 2147483648
    %v985 = vxor.u32 %v981, 2147483648
    %v986 = vxor.u32 %v982, 2147483648
    %v987 = vmul.f32 %v984, 1.442695
    %v988 = vpow.pop %v987
    %v989 = vmul.f32 %v985, 1.442695
    %v990 = vpow.pop %v989
    %v991 = vmul.f32 %v986, 1.442695
    %v992 = vpow.pop %v991
    %v993 = vadd.f32 %v988, 1.0
    %v994 = vadd.f32 %v990, 1.0
    %v995 = vadd.f32 %v992, 1.0
    %v996 = vrcp.pop %v993
    %v997 = vmul.f32 1.0, %v996
    %v998 = vrcp.pop %v994
    %v999 = vmul.f32 1.0, %v998
    %v1000 = vrcp.pop %v995
    %v1001 = vmul.f32 1.0, %v1000
    %v1002 = vtanh.pop %v983
    %v1003 = vmul.f32 %v999, %v764
    %v1004 = vmul.f32 %v997, %v1002
    %v1005 = vadd.f32 %v1003, %v1004
    %v1006 = vtanh.pop %v1005
    %v1007 = vmul.f32 %v1001, %v1006
    %s1008 = scalar_lea.vmem [#allocation9], 24
    %1009 = vst [vmem:[%s1008] sm:$0xff] %v1007
    %s1010 = scalar_lea.vmem [#allocation4], 128
    %v1011 = vld [vmem:[%s1010] sm:$0xff]
    %v1012 = vld [vmem:[%s1010 + $0x8] sm:$0xff]
    %v1013 = vld [vmem:[%s1010 + $0x10] sm:$0xff]
    %v1014 = vld [vmem:[%s1010 + $0x18] sm:$0xff]
    %v1015 = vld [vmem:[#allocation7] sm:$0xff]
    %v1016 = vld [vmem:[#allocation7 + $0x8] sm:$0xff]
    %v1017 = vld [vmem:[#allocation7 + $0x10] sm:$0xff]
    %v1018 = vld [vmem:[#allocation7 + $0x18] sm:$0xff]
    %v1019 = vld [vmem:[#allocation7 + $0x20] sm:$0xff]
    %v1020 = vld [vmem:[#allocation7 + $0x28] sm:$0xff]
    %v1021 = vld [vmem:[#allocation7 + $0x30] sm:$0xff]
    %v1022 = vld [vmem:[#allocation7 + $0x38] sm:$0xff]
    %v1023 = vld [vmem:[#allocation7 + $0x40] sm:$0xff]
    %v1024 = vld [vmem:[#allocation7 + $0x48] sm:$0xff]
    %v1025 = vld [vmem:[#allocation7 + $0x50] sm:$0xff]
    %v1026 = vld [vmem:[#allocation7 + $0x58] sm:$0xff]
    %v1027 = vld [vmem:[#allocation7 + $0x60] sm:$0xff]
    %v1028 = vld [vmem:[#allocation7 + $0x68] sm:$0xff]
    %v1029 = vld [vmem:[#allocation7 + $0x70] sm:$0xff]
    %v1030 = vld [vmem:[#allocation7 + $0x78] sm:$0xff]
    %v1031 = vld [vmem:[#allocation7 + $0x80] sm:$0xff]
    %v1032 = vld [vmem:[#allocation7 + $0x88] sm:$0xff]
    %v1033 = vld [vmem:[#allocation7 + $0x90] sm:$0xff]
    %v1034 = vld [vmem:[#allocation7 + $0x98] sm:$0xff]
    %v1035 = vld [vmem:[#allocation7 + $0xa0] sm:$0xff]
    %v1036 = vld [vmem:[#allocation7 + $0xa8] sm:$0xff]
    %v1037 = vld [vmem:[#allocation7 + $0xb0] sm:$0xff]
    %v1038 = vld [vmem:[#allocation7 + $0xb8] sm:$0xff]
    %v1039 = vld [vmem:[#allocation7 + $0xc0] sm:$0xff]
    %v1040 = vld [vmem:[#allocation7 + $0xc8] sm:$0xff]
    %v1041 = vld [vmem:[#allocation7 + $0xd0] sm:$0xff]
    %v1042 = vld [vmem:[#allocation7 + $0xd8] sm:$0xff]
    %v1043 = vld [vmem:[#allocation7 + $0xe0] sm:$0xff]
    %v1044 = vld [vmem:[#allocation7 + $0xe8] sm:$0xff]
    %v1045 = vld [vmem:[#allocation7 + $0xf0] sm:$0xff]
    %v1046 = vld [vmem:[#allocation7 + $0xf8] sm:$0xff]
    %v1047 = vld [vmem:[#allocation7 + $0x100] sm:$0xff]
    %v1048 = vld [vmem:[#allocation7 + $0x108] sm:$0xff]
    %v1049 = vld [vmem:[#allocation7 + $0x110] sm:$0xff]
    %v1050 = vld [vmem:[#allocation7 + $0x118] sm:$0xff]
    %v1051 = vld [vmem:[#allocation7 + $0x120] sm:$0xff]
    %v1052 = vld [vmem:[#allocation7 + $0x128] sm:$0xff]
    %v1053 = vld [vmem:[#allocation7 + $0x130] sm:$0xff]
    %v1054 = vld [vmem:[#allocation7 + $0x138] sm:$0xff]
    %v1055 = vld [vmem:[#allocation7 + $0x140] sm:$0xff]
    %v1056 = vld [vmem:[#allocation7 + $0x148] sm:$0xff]
    %v1057 = vld [vmem:[#allocation7 + $0x150] sm:$0xff]
    %v1058 = vld [vmem:[#allocation7 + $0x158] sm:$0xff]
    %v1059 = vld [vmem:[#allocation7 + $0x160] sm:$0xff]
    %v1060 = vld [vmem:[#allocation7 + $0x168] sm:$0xff]
    %v1061 = vld [vmem:[#allocation7 + $0x170] sm:$0xff]
    %v1062 = vld [vmem:[#allocation7 + $0x178] sm:$0xff]
    %v1063 = vld [vmem:[#allocation7 + $0x180] sm:$0xff]
    %v1064 = vld [vmem:[#allocation7 + $0x188] sm:$0xff]
    %v1065 = vld [vmem:[#allocation7 + $0x190] sm:$0xff]
    %v1066 = vld [vmem:[#allocation7 + $0x198] sm:$0xff]
    %v1067 = vld [vmem:[#allocation7 + $0x1a0] sm:$0xff]
    %v1068 = vld [vmem:[#allocation7 + $0x1a8] sm:$0xff]
    %v1069 = vld [vmem:[#allocation7 + $0x1b0] sm:$0xff]
    %v1070 = vld [vmem:[#allocation7 + $0x1b8] sm:$0xff]
    %v1071 = vld [vmem:[#allocation7 + $0x1c0] sm:$0xff]
    %v1072 = vld [vmem:[#allocation7 + $0x1c8] sm:$0xff]
    %v1073 = vld [vmem:[#allocation7 + $0x1d0] sm:$0xff]
    %v1074 = vld [vmem:[#allocation7 + $0x1d8] sm:$0xff]
    %v1075 = vld [vmem:[#allocation7 + $0x1e0] sm:$0xff]
    %v1076 = vld [vmem:[#allocation7 + $0x1e8] sm:$0xff]
    %v1077 = vld [vmem:[#allocation7 + $0x1f0] sm:$0xff]
    %v1078 = vld [vmem:[#allocation7 + $0x1f8] sm:$0xff]
    %1079 = vmatprep.subr.mxu0 %v1016
    %1080 = vmatpush1.msra.mxu0 %v1015
    %1081 = vmatprep.subr.mxu0 %v1020
    %1082 = vmatpush1.msra.mxu0 %v1019
    %1083 = vmatprep.subr.mxu0 %v1024
    %1084 = vmatpush1.msra.mxu0 %v1023
    %1085 = vmatprep.subr.mxu0 %v1028
    %1086 = vmatpush1.msra.mxu0 %v1027
    %1087 = vmatprep.subr.mxu0 %v1032
    %1088 = vmatpush1.msra.mxu0 %v1031
    %1089 = vmatprep.subr.mxu0 %v1036
    %1090 = vmatpush1.msra.mxu0 %v1035
    %1091 = vmatprep.subr.mxu0 %v1040
    %1092 = vmatpush1.msra.mxu0 %v1039
    %1093 = vmatprep.subr.mxu0 %v1044
    %1094 = vmatpush1.msra.mxu0 %v1043
    %1095 = vmatprep.subr.mxu0 %v1048
    %1096 = vmatpush1.msra.mxu0 %v1047
    %1097 = vmatprep.subr.mxu0 %v1052
    %1098 = vmatpush1.msra.mxu0 %v1051
    %1099 = vmatprep.subr.mxu0 %v1056
    %1100 = vmatpush1.msra.mxu0 %v1055
    %1101 = vmatprep.subr.mxu0 %v1060
    %1102 = vmatpush1.msra.mxu0 %v1059
    %1103 = vmatprep.subr.mxu0 %v1064
    %1104 = vmatpush1.msra.mxu0 %v1063
    %1105 = vmatprep.subr.mxu0 %v1068
    %1106 = vmatpush1.msra.mxu0 %v1067
    %1107 = vmatprep.subr.mxu0 %v1072
    %1108 = vmatpush1.msra.mxu0 %v1071
    %1109 = vmatprep.subr.mxu0 %v1076
    %1110 = vmatpush1.msra.mxu0 %v1075
    %1111 = vmatprep.subr.mxu0 0.0
    %1112 = vmatpush1.msra.mxu0 0.0
    %1113 = vmatprep.subr.mxu0 0.0
    %1114 = vmatpush1.msra.mxu0 0.0
    %1115 = vmatprep.subr.mxu0 0.0
    %1116 = vmatpush1.msra.mxu0 0.0
    %1117 = vmatprep.subr.mxu0 0.0
    %1118 = vmatpush1.msra.mxu0 0.0
    %1119 = vmatprep.subr.mxu0 0.0
    %1120 = vmatpush1.msra.mxu0 0.0
    %1121 = vmatprep.subr.mxu0 0.0
    %1122 = vmatpush1.msra.mxu0 0.0
    %1123 = vmatprep.subr.mxu0 0.0
    %1124 = vmatpush1.msra.mxu0 0.0
    %1125 = vmatprep.subr.mxu0 0.0
    %1126 = vmatpush1.msra.mxu0 0.0
    %1127 = vmatprep.subr.mxu0 0.0
    %1128 = vmatpush1.msra.mxu0 0.0
    %1129 = vmatprep.subr.mxu0 0.0
    %1130 = vmatpush1.msra.mxu0 0.0
    %1131 = vmatprep.subr.mxu0 0.0
    %1132 = vmatpush1.msra.mxu0 0.0
    %1133 = vmatprep.subr.mxu0 0.0
    %1134 = vmatpush1.msra.mxu0 0.0
    %1135 = vmatprep.subr.mxu0 0.0
    %1136 = vmatpush1.msra.mxu0 0.0
    %1137 = vmatprep.subr.mxu0 0.0
    %1138 = vmatpush1.msra.mxu0 0.0
    %1139 = vmatprep.subr.mxu0 0.0
    %1140 = vmatpush1.msra.mxu0 0.0
    %1141 = vmatprep.subr.mxu0 0.0
    %1142 = vmatpush1.msra.mxu0 0.0
    %1143 = vmatprep.mubr.f32.mxu0 0.0
    %1144 = vmatmul.mubr.f32.gmra.mrb[0].mxu0 %v1007
    %v1145 = vpop.f32.mrb[0].mxu0
    %v1146 = vadd.f32 0.0, %v1145
    %v1147 = vpop.f32.mrb[0].mxu0
    %v1148 = vadd.f32 0.0, %v1147
    %1149 = vdwg.mxu0
    %1150 = vmatprep.subr.mxu0 %v1018
    %1151 = vmatpush1.msra.mxu0 %v1017
    %1152 = vmatprep.subr.mxu0 %v1022
    %1153 = vmatpush1.msra.mxu0 %v1021
    %1154 = vmatprep.subr.mxu0 %v1026
    %1155 = vmatpush1.msra.mxu0 %v1025
    %1156 = vmatprep.subr.mxu0 %v1030
    %1157 = vmatpush1.msra.mxu0 %v1029
    %1158 = vmatprep.subr.mxu0 %v1034
    %1159 = vmatpush1.msra.mxu0 %v1033
    %1160 = vmatprep.subr.mxu0 %v1038
    %1161 = vmatpush1.msra.mxu0 %v1037
    %1162 = vmatprep.subr.mxu0 %v1042
    %1163 = vmatpush1.msra.mxu0 %v1041
    %1164 = vmatprep.subr.mxu0 %v1046
    %1165 = vmatpush1.msra.mxu0 %v1045
    %1166 = vmatprep.subr.mxu0 %v1050
    %1167 = vmatpush1.msra.mxu0 %v1049
    %1168 = vmatprep.subr.mxu0 %v1054
    %1169 = vmatpush1.msra.mxu0 %v1053
    %1170 = vmatprep.subr.mxu0 %v1058
    %1171 = vmatpush1.msra.mxu0 %v1057
    %1172 = vmatprep.subr.mxu0 %v1062
    %1173 = vmatpush1.msra.mxu0 %v1061
    %1174 = vmatprep.subr.mxu0 %v1066
    %1175 = vmatpush1.msra.mxu0 %v1065
    %1176 = vmatprep.subr.mxu0 %v1070
    %1177 = vmatpush1.msra.mxu0 %v1069
    %1178 = vmatprep.subr.mxu0 %v1074
    %1179 = vmatpush1.msra.mxu0 %v1073
    %1180 = vmatprep.subr.mxu0 %v1078
    %1181 = vmatpush1.msra.mxu0 %v1077
    %1182 = vmatprep.subr.mxu0 0.0
    %1183 = vmatpush1.msra.mxu0 0.0
    %1184 = vmatprep.subr.mxu0 0.0
    %1185 = vmatpush1.msra.mxu0 0.0
    %1186 = vmatprep.subr.mxu0 0.0
    %1187 = vmatpush1.msra.mxu0 0.0
    %1188 = vmatprep.subr.mxu0 0.0
    %1189 = vmatpush1.msra.mxu0 0.0
    %1190 = vmatprep.subr.mxu0 0.0
    %1191 = vmatpush1.msra.mxu0 0.0
    %1192 = vmatprep.subr.mxu0 0.0
    %1193 = vmatpush1.msra.mxu0 0.0
    %1194 = vmatprep.subr.mxu0 0.0
    %1195 = vmatpush1.msra.mxu0 0.0
    %1196 = vmatprep.subr.mxu0 0.0
    %1197 = vmatpush1.msra.mxu0 0.0
    %1198 = vmatprep.subr.mxu0 0.0
    %1199 = vmatpush1.msra.mxu0 0.0
    %1200 = vmatprep.subr.mxu0 0.0
    %1201 = vmatpush1.msra.mxu0 0.0
    %1202 = vmatprep.subr.mxu0 0.0
    %1203 = vmatpush1.msra.mxu0 0.0
    %1204 = vmatprep.subr.mxu0 0.0
    %1205 = vmatpush1.msra.mxu0 0.0
    %1206 = vmatprep.subr.mxu0 0.0
    %1207 = vmatpush1.msra.mxu0 0.0
    %1208 = vmatprep.subr.mxu0 0.0
    %1209 = vmatpush1.msra.mxu0 0.0
    %1210 = vmatprep.subr.mxu0 0.0
    %1211 = vmatpush1.msra.mxu0 0.0
    %1212 = vmatprep.subr.mxu0 0.0
    %1213 = vmatpush1.msra.mxu0 0.0
    %1214 = vmatprep.mubr.f32.mxu0 0.0
    %1215 = vmatmul.mubr.f32.gmra.mrb[0].mxu0 %v1007
    %v1216 = vpop.f32.mrb[0].mxu0
    %v1217 = vadd.f32 0.0, %v1216
    %v1218 = vpop.f32.mrb[0].mxu0
    %v1219 = vadd.f32 0.0, %v1218
    %1220 = vdwg.mxu0
    %v1221 = vadd.f32 %v1011, %v1146
    %v1222 = vadd.f32 %v1012, %v1148
    %v1223 = vadd.f32 %v1013, %v1217
    %v1224 = vadd.f32 %v1014, %v1219
    %v1225 = vxor.u32 %v1221, 2147483648
    %v1226 = vxor.u32 %v1222, 2147483648
    %v1227 = vxor.u32 %v1223, 2147483648
    %v1228 = vmul.f32 %v1225, 1.442695
    %v1229 = vpow.pop %v1228
    %v1230 = vmul.f32 %v1226, 1.442695
    %v1231 = vpow.pop %v1230
    %v1232 = vmul.f32 %v1227, 1.442695
    %v1233 = vpow.pop %v1232
    %v1234 = vadd.f32 %v1229, 1.0
    %v1235 = vadd.f32 %v1231, 1.0
    %v1236 = vadd.f32 %v1233, 1.0
    %v1237 = vrcp.pop %v1234
    %v1238 = vmul.f32 1.0, %v1237
    %v1239 = vrcp.pop %v1235
    %v1240 = vmul.f32 1.0, %v1239
    %v1241 = vrcp.pop %v1236
    %v1242 = vmul.f32 1.0, %v1241
    %v1243 = vtanh.pop %v1224
    %v1244 = vmul.f32 %v1240, %v1005
    %v1245 = vmul.f32 %v1238, %v1243
    %v1246 = vadd.f32 %v1244, %v1245
    %v1247 = vtanh.pop %v1246
    %v1248 = vmul.f32 %v1242, %v1247
    %s1249 = scalar_lea.vmem [#allocation9], 32
    %1250 = vst [vmem:[%s1249] sm:$0xff] %v1248
    %s1251 = scalar_lea.vmem [#allocation4], 160
    %v1252 = vld [vmem:[%s1251] sm:$0xff]
    %v1253 = vld [vmem:[%s1251 + $0x8] sm:$0xff]
    %v1254 = vld [vmem:[%s1251 + $0x10] sm:$0xff]
    %v1255 = vld [vmem:[%s1251 + $0x18] sm:$0xff]
    %v1256 = vld [vmem:[#allocation7] sm:$0xff]
    %v1257 = vld [vmem:[#allocation7 + $0x8] sm:$0xff]
    %v1258 = vld [vmem:[#allocation7 + $0x10] sm:$0xff]
    %v1259 = vld [vmem:[#allocation7 + $0x18] sm:$0xff]
    %v1260 = vld [vmem:[#allocation7 + $0x20] sm:$0xff]
    %v1261 = vld [vmem:[#allocation7 + $0x28] sm:$0xff]
    %v1262 = vld [vmem:[#allocation7 + $0x30] sm:$0xff]
    %v1263 = vld [vmem:[#allocation7 + $0x38] sm:$0xff]
    %v1264 = vld [vmem:[#allocation7 + $0x40] sm:$0xff]
    %v1265 = vld [vmem:[#allocation7 + $0x48] sm:$0xff]
    %v1266 = vld [vmem:[#allocation7 + $0x50] sm:$0xff]
    %v1267 = vld [vmem:[#allocation7 + $0x58] sm:$0xff]
    %v1268 = vld [vmem:[#allocation7 + $0x60] sm:$0xff]
    %v1269 = vld [vmem:[#allocation7 + $0x68] sm:$0xff]
    %v1270 = vld [vmem:[#allocation7 + $0x70] sm:$0xff]
    %v1271 = vld [vmem:[#allocation7 + $0x78] sm:$0xff]
    %v1272 = vld [vmem:[#allocation7 + $0x80] sm:$0xff]
    %v1273 = vld [vmem:[#allocation7 + $0x88] sm:$0xff]
    %v1274 = vld [vmem:[#allocation7 + $0x90] sm:$0xff]
    %v1275 = vld [vmem:[#allocation7 + $0x98] sm:$0xff]
    %v1276 = vld [vmem:[#allocation7 + $0xa0] sm:$0xff]
    %v1277 = vld [vmem:[#allocation7 + $0xa8] sm:$0xff]
    %v1278 = vld [vmem:[#allocation7 + $0xb0] sm:$0xff]
    %v1279 = vld [vmem:[#allocation7 + $0xb8] sm:$0xff]
    %v1280 = vld [vmem:[#allocation7 + $0xc0] sm:$0xff]
    %v1281 = vld [vmem:[#allocation7 + $0xc8] sm:$0xff]
    %v1282 = vld [vmem:[#allocation7 + $0xd0] sm:$0xff]
    %v1283 = vld [vmem:[#allocation7 + $0xd8] sm:$0xff]
    %v1284 = vld [vmem:[#allocation7 + $0xe0] sm:$0xff]
    %v1285 = vld [vmem:[#allocation7 + $0xe8] sm:$0xff]
    %v1286 = vld [vmem:[#allocation7 + $0xf0] sm:$0xff]
    %v1287 = vld [vmem:[#allocation7 + $0xf8] sm:$0xff]
    %v1288 = vld [vmem:[#allocation7 + $0x100] sm:$0xff]
    %v1289 = vld [vmem:[#allocation7 + $0x108] sm:$0xff]
    %v1290 = vld [vmem:[#allocation7 + $0x110] sm:$0xff]
    %v1291 = vld [vmem:[#allocation7 + $0x118] sm:$0xff]
    %v1292 = vld [vmem:[#allocation7 + $0x120] sm:$0xff]
    %v1293 = vld [vmem:[#allocation7 + $0x128] sm:$0xff]
    %v1294 = vld [vmem:[#allocation7 + $0x130] sm:$0xff]
    %v1295 = vld [vmem:[#allocation7 + $0x138] sm:$0xff]
    %v1296 = vld [vmem:[#allocation7 + $0x140] sm:$0xff]
    %v1297 = vld [vmem:[#allocation7 + $0x148] sm:$0xff]
    %v1298 = vld [vmem:[#allocation7 + $0x150] sm:$0xff]
    %v1299 = vld [vmem:[#allocation7 + $0x158] sm:$0xff]
    %v1300 = vld [vmem:[#allocation7 + $0x160] sm:$0xff]
    %v1301 = vld [vmem:[#allocation7 + $0x168] sm:$0xff]
    %v1302 = vld [vmem:[#allocation7 + $0x170] sm:$0xff]
    %v1303 = vld [vmem:[#allocation7 + $0x178] sm:$0xff]
    %v1304 = vld [vmem:[#allocation7 + $0x180] sm:$0xff]
    %v1305 = vld [vmem:[#allocation7 + $0x188] sm:$0xff]
    %v1306 = vld [vmem:[#allocation7 + $0x190] sm:$0xff]
    %v1307 = vld [vmem:[#allocation7 + $0x198] sm:$0xff]
    %v1308 = vld [vmem:[#allocation7 + $0x1a0] sm:$0xff]
    %v1309 = vld [vmem:[#allocation7 + $0x1a8] sm:$0xff]
    %v1310 = vld [vmem:[#allocation7 + $0x1b0] sm:$0xff]
    %v1311 = vld [vmem:[#allocation7 + $0x1b8] sm:$0xff]
    %v1312 = vld [vmem:[#allocation7 + $0x1c0] sm:$0xff]
    %v1313 = vld [vmem:[#allocation7 + $0x1c8] sm:$0xff]
    %v1314 = vld [vmem:[#allocation7 + $0x1d0] sm:$0xff]
    %v1315 = vld [vmem:[#allocation7 + $0x1d8] sm:$0xff]
    %v1316 = vld [vmem:[#allocation7 + $0x1e0] sm:$0xff]
    %v1317 = vld [vmem:[#allocation7 + $0x1e8] sm:$0xff]
    %v1318 = vld [vmem:[#allocation7 + $0x1f0] sm:$0xff]
    %v1319 = vld [vmem:[#allocation7 + $0x1f8] sm:$0xff]
    %1320 = vmatprep.subr.mxu0 %v1257
    %1321 = vmatpush1.msra.mxu0 %v1256
    %1322 = vmatprep.subr.mxu0 %v1261
    %1323 = vmatpush1.msra.mxu0 %v1260
    %1324 = vmatprep.subr.mxu0 %v1265
    %1325 = vmatpush1.msra.mxu0 %v1264
    %1326 = vmatprep.subr.mxu0 %v1269
    %1327 = vmatpush1.msra.mxu0 %v1268
    %1328 = vmatprep.subr.mxu0 %v1273
    %1329 = vmatpush1.msra.mxu0 %v1272
    %1330 = vmatprep.subr.mxu0 %v1277
    %1331 = vmatpush1.msra.mxu0 %v1276
    %1332 = vmatprep.subr.mxu0 %v1281
    %1333 = vmatpush1.msra.mxu0 %v1280
    %1334 = vmatprep.subr.mxu0 %v1285
    %1335 = vmatpush1.msra.mxu0 %v1284
    %1336 = vmatprep.subr.mxu0 %v1289
    %1337 = vmatpush1.msra.mxu0 %v1288
    %1338 = vmatprep.subr.mxu0 %v1293
    %1339 = vmatpush1.msra.mxu0 %v1292
    %1340 = vmatprep.subr.mxu0 %v1297
    %1341 = vmatpush1.msra.mxu0 %v1296
    %1342 = vmatprep.subr.mxu0 %v1301
    %1343 = vmatpush1.msra.mxu0 %v1300
    %1344 = vmatprep.subr.mxu0 %v1305
    %1345 = vmatpush1.msra.mxu0 %v1304
    %1346 = vmatprep.subr.mxu0 %v1309
    %1347 = vmatpush1.msra.mxu0 %v1308
    %1348 = vmatprep.subr.mxu0 %v1313
    %1349 = vmatpush1.msra.mxu0 %v1312
    %1350 = vmatprep.subr.mxu0 %v1317
    %1351 = vmatpush1.msra.mxu0 %v1316
    %1352 = vmatprep.subr.mxu0 0.0
    %1353 = vmatpush1.msra.mxu0 0.0
    %1354 = vmatprep.subr.mxu0 0.0
    %1355 = vmatpush1.msra.mxu0 0.0
    %1356 = vmatprep.subr.mxu0 0.0
    %1357 = vmatpush1.msra.mxu0 0.0
    %1358 = vmatprep.subr.mxu0 0.0
    %1359 = vmatpush1.msra.mxu0 0.0
    %1360 = vmatprep.subr.mxu0 0.0
    %1361 = vmatpush1.msra.mxu0 0.0
    %1362 = vmatprep.subr.mxu0 0.0
    %1363 = vmatpush1.msra.mxu0 0.0
    %1364 = vmatprep.subr.mxu0 0.0
    %1365 = vmatpush1.msra.mxu0 0.0
    %1366 = vmatprep.subr.mxu0 0.0
    %1367 = vmatpush1.msra.mxu0 0.0
    %1368 = vmatprep.subr.mxu0 0.0
    %1369 = vmatpush1.msra.mxu0 0.0
    %1370 = vmatprep.subr.mxu0 0.0
    %1371 = vmatpush1.msra.mxu0 0.0
    %1372 = vmatprep.subr.mxu0 0.0
    %1373 = vmatpush1.msra.mxu0 0.0
    %1374 = vmatprep.subr.mxu0 0.0
    %1375 = vmatpush1.msra.mxu0 0.0
    %1376 = vmatprep.subr.mxu0 0.0
    %1377 = vmatpush1.msra.mxu0 0.0
    %1378 = vmatprep.subr.mxu0 0.0
    %1379 = vmatpush1.msra.mxu0 0.0
    %1380 = vmatprep.subr.mxu0 0.0
    %1381 = vmatpush1.msra.mxu0 0.0
    %1382 = vmatprep.subr.mxu0 0.0
    %1383 = vmatpush1.msra.mxu0 0.0
    %1384 = vmatprep.mubr.f32.mxu0 0.0
    %1385 = vmatmul.mubr.f32.gmra.mrb[0].mxu0 %v1248
    %v1386 = vpop.f32.mrb[0].mxu0
    %v1387 = vadd.f32 0.0, %v1386
    %v1388 = vpop.f32.mrb[0].mxu0
    %v1389 = vadd.f32 0.0, %v1388
    %1390 = vdwg.mxu0
    %1391 = vmatprep.subr.mxu0 %v1259
    %1392 = vmatpush1.msra.mxu0 %v1258
    %1393 = vmatprep.subr.mxu0 %v1263
    %1394 = vmatpush1.msra.mxu0 %v1262
    %1395 = vmatprep.subr.mxu0 %v1267
    %1396 = vmatpush1.msra.mxu0 %v1266
    %1397 = vmatprep.subr.mxu0 %v1271
    %1398 = vmatpush1.msra.mxu0 %v1270
    %1399 = vmatprep.subr.mxu0 %v1275
    %1400 = vmatpush1.msra.mxu0 %v1274
    %1401 = vmatprep.subr.mxu0 %v1279
    %1402 = vmatpush1.msra.mxu0 %v1278
    %1403 = vmatprep.subr.mxu0 %v1283
    %1404 = vmatpush1.msra.mxu0 %v1282
    %1405 = vmatprep.subr.mxu0 %v1287
    %1406 = vmatpush1.msra.mxu0 %v1286
    %1407 = vmatprep.subr.mxu0 %v1291
    %1408 = vmatpush1.msra.mxu0 %v1290
    %1409 = vmatprep.subr.mxu0 %v1295
    %1410 = vmatpush1.msra.mxu0 %v1294
    %1411 = vmatprep.subr.mxu0 %v1299
    %1412 = vmatpush1.msra.mxu0 %v1298
    %1413 = vmatprep.subr.mxu0 %v1303
    %1414 = vmatpush1.msra.mxu0 %v1302
    %1415 = vmatprep.subr.mxu0 %v1307
    %1416 = vmatpush1.msra.mxu0 %v1306
    %1417 = vmatprep.subr.mxu0 %v1311
    %1418 = vmatpush1.msra.mxu0 %v1310
    %1419 = vmatprep.subr.mxu0 %v1315
    %1420 = vmatpush1.msra.mxu0 %v1314
    %1421 = vmatprep.subr.mxu0 %v1319
    %1422 = vmatpush1.msra.mxu0 %v1318
    %1423 = vmatprep.subr.mxu0 0.0
    %1424 = vmatpush1.msra.mxu0 0.0
    %1425 = vmatprep.subr.mxu0 0.0
    %1426 = vmatpush1.msra.mxu0 0.0
    %1427 = vmatprep.subr.mxu0 0.0
    %1428 = vmatpush1.msra.mxu0 0.0
    %1429 = vmatprep.subr.mxu0 0.0
    %1430 = vmatpush1.msra.mxu0 0.0
    %1431 = vmatprep.subr.mxu0 0.0
    %1432 = vmatpush1.msra.mxu0 0.0
    %1433 = vmatprep.subr.mxu0 0.0
    %1434 = vmatpush1.msra.mxu0 0.0
    %1435 = vmatprep.subr.mxu0 0.0
    %1436 = vmatpush1.msra.mxu0 0.0
    %1437 = vmatprep.subr.mxu0 0.0
    %1438 = vmatpush1.msra.mxu0 0.0
    %1439 = vmatprep.subr.mxu0 0.0
    %1440 = vmatpush1.msra.mxu0 0.0
    %1441 = vmatprep.subr.mxu0 0.0
    %1442 = vmatpush1.msra.mxu0 0.0
    %1443 = vmatprep.subr.mxu0 0.0
    %1444 = vmatpush1.msra.mxu0 0.0
    %1445 = vmatprep.subr.mxu0 0.0
    %1446 = vmatpush1.msra.mxu0 0.0
    %1447 = vmatprep.subr.mxu0 0.0
    %1448 = vmatpush1.msra.mxu0 0.0
    %1449 = vmatprep.subr.mxu0 0.0
    %1450 = vmatpush1.msra.mxu0 0.0
    %1451 = vmatprep.subr.mxu0 0.0
    %1452 = vmatpush1.msra.mxu0 0.0
    %1453 = vmatprep.subr.mxu0 0.0
    %1454 = vmatpush1.msra.mxu0 0.0
    %1455 = vmatprep.mubr.f32.mxu0 0.0
    %1456 = vmatmul.mubr.f32.gmra.mrb[0].mxu0 %v1248
    %v1457 = vpop.f32.mrb[0].mxu0
    %v1458 = vadd.f32 0.0, %v1457
    %v1459 = vpop.f32.mrb[0].mxu0
    %v1460 = vadd.f32 0.0, %v1459
    %1461 = vdwg.mxu0
    %v1462 = vadd.f32 %v1252, %v1387
    %v1463 = vadd.f32 %v1253, %v1389
    %v1464 = vadd.f32 %v1254, %v1458
    %v1465 = vadd.f32 %v1255, %v1460
    %v1466 = vxor.u32 %v1462, 2147483648
    %v1467 = vxor.u32 %v1463, 2147483648
    %v1468 = vxor.u32 %v1464, 2147483648
    %v1469 = vmul.f32 %v1466, 1.442695
    %v1470 = vpow.pop %v1469
    %v1471 = vmul.f32 %v1467, 1.442695
    %v1472 = vpow.pop %v1471
    %v1473 = vmul.f32 %v1468, 1.442695
    %v1474 = vpow.pop %v1473
    %v1475 = vadd.f32 %v1470, 1.0
    %v1476 = vadd.f32 %v1472, 1.0
    %v1477 = vadd.f32 %v1474, 1.0
    %v1478 = vrcp.pop %v1475
    %v1479 = vmul.f32 1.0, %v1478
    %v1480 = vrcp.pop %v1476
    %v1481 = vmul.f32 1.0, %v1480
    %v1482 = vrcp.pop %v1477
    %v1483 = vmul.f32 1.0, %v1482
    %v1484 = vtanh.pop %v1465
    %v1485 = vmul.f32 %v1481, %v1246
    %v1486 = vmul.f32 %v1479, %v1484
    %v1487 = vadd.f32 %v1485, %v1486
    %v1488 = vtanh.pop %v1487
    %v1489 = vmul.f32 %v1483, %v1488
    %s1490 = scalar_lea.vmem [#allocation9], 40
    %1491 = vst [vmem:[%s1490] sm:$0xff] %v1489
    %s1492 = scalar_lea.vmem [#allocation4], 192
    %v1493 = vld [vmem:[%s1492] sm:$0xff]
    %v1494 = vld [vmem:[%s1492 + $0x8] sm:$0xff]
    %v1495 = vld [vmem:[%s1492 + $0x10] sm:$0xff]
    %v1496 = vld [vmem:[%s1492 + $0x18] sm:$0xff]
    %v1497 = vld [vmem:[#allocation7] sm:$0xff]
    %v1498 = vld [vmem:[#allocation7 + $0x8] sm:$0xff]
    %v1499 = vld [vmem:[#allocation7 + $0x10] sm:$0xff]
    %v1500 = vld [vmem:[#allocation7 + $0x18] sm:$0xff]
    %v1501 = vld [vmem:[#allocation7 + $0x20] sm:$0xff]
    %v1502 = vld [vmem:[#allocation7 + $0x28] sm:$0xff]
    %v1503 = vld [vmem:[#allocation7 + $0x30] sm:$0xff]
    %v1504 = vld [vmem:[#allocation7 + $0x38] sm:$0xff]
    %v1505 = vld [vmem:[#allocation7 + $0x40] sm:$0xff]
    %v1506 = vld [vmem:[#allocation7 + $0x48] sm:$0xff]
    %v1507 = vld [vmem:[#allocation7 + $0x50] sm:$0xff]
    %v1508 = vld [vmem:[#allocation7 + $0x58] sm:$0xff]
    %v1509 = vld [vmem:[#allocation7 + $0x60] sm:$0xff]
    %v1510 = vld [vmem:[#allocation7 + $0x68] sm:$0xff]
    %v1511 = vld [vmem:[#allocation7 + $0x70] sm:$0xff]
    %v1512 = vld [vmem:[#allocation7 + $0x78] sm:$0xff]
    %v1513 = vld [vmem:[#allocation7 + $0x80] sm:$0xff]
    %v1514 = vld [vmem:[#allocation7 + $0x88] sm:$0xff]
    %v1515 = vld [vmem:[#allocation7 + $0x90] sm:$0xff]
    %v1516 = vld [vmem:[#allocation7 + $0x98] sm:$0xff]
    %v1517 = vld [vmem:[#allocation7 + $0xa0] sm:$0xff]
    %v1518 = vld [vmem:[#allocation7 + $0xa8] sm:$0xff]
    %v1519 = vld [vmem:[#allocation7 + $0xb0] sm:$0xff]
    %v1520 = vld [vmem:[#allocation7 + $0xb8] sm:$0xff]
    %v1521 = vld [vmem:[#allocation7 + $0xc0] sm:$0xff]
    %v1522 = vld [vmem:[#allocation7 + $0xc8] sm:$0xff]
    %v1523 = vld [vmem:[#allocation7 + $0xd0] sm:$0xff]
    %v1524 = vld [vmem:[#allocation7 + $0xd8] sm:$0xff]
    %v1525 = vld [vmem:[#allocation7 + $0xe0] sm:$0xff]
    %v1526 = vld [vmem:[#allocation7 + $0xe8] sm:$0xff]
    %v1527 = vld [vmem:[#allocation7 + $0xf0] sm:$0xff]
    %v1528 = vld [vmem:[#allocation7 + $0xf8] sm:$0xff]
    %v1529 = vld [vmem:[#allocation7 + $0x100] sm:$0xff]
    %v1530 = vld [vmem:[#allocation7 + $0x108] sm:$0xff]
    %v1531 = vld [vmem:[#allocation7 + $0x110] sm:$0xff]
    %v1532 = vld [vmem:[#allocation7 + $0x118] sm:$0xff]
    %v1533 = vld [vmem:[#allocation7 + $0x120] sm:$0xff]
    %v1534 = vld [vmem:[#allocation7 + $0x128] sm:$0xff]
    %v1535 = vld [vmem:[#allocation7 + $0x130] sm:$0xff]
    %v1536 = vld [vmem:[#allocation7 + $0x138] sm:$0xff]
    %v1537 = vld [vmem:[#allocation7 + $0x140] sm:$0xff]
    %v1538 = vld [vmem:[#allocation7 + $0x148] sm:$0xff]
    %v1539 = vld [vmem:[#allocation7 + $0x150] sm:$0xff]
    %v1540 = vld [vmem:[#allocation7 + $0x158] sm:$0xff]
    %v1541 = vld [vmem:[#allocation7 + $0x160] sm:$0xff]
    %v1542 = vld [vmem:[#allocation7 + $0x168] sm:$0xff]
    %v1543 = vld [vmem:[#allocation7 + $0x170] sm:$0xff]
    %v1544 = vld [vmem:[#allocation7 + $0x178] sm:$0xff]
    %v1545 = vld [vmem:[#allocation7 + $0x180] sm:$0xff]
    %v1546 = vld [vmem:[#allocation7 + $0x188] sm:$0xff]
    %v1547 = vld [vmem:[#allocation7 + $0x190] sm:$0xff]
    %v1548 = vld [vmem:[#allocation7 + $0x198] sm:$0xff]
    %v1549 = vld [vmem:[#allocation7 + $0x1a0] sm:$0xff]
    %v1550 = vld [vmem:[#allocation7 + $0x1a8] sm:$0xff]
    %v1551 = vld [vmem:[#allocation7 + $0x1b0] sm:$0xff]
    %v1552 = vld [vmem:[#allocation7 + $0x1b8] sm:$0xff]
    %v1553 = vld [vmem:[#allocation7 + $0x1c0] sm:$0xff]
    %v1554 = vld [vmem:[#allocation7 + $0x1c8] sm:$0xff]
    %v1555 = vld [vmem:[#allocation7 + $0x1d0] sm:$0xff]
    %v1556 = vld [vmem:[#allocation7 + $0x1d8] sm:$0xff]
    %v1557 = vld [vmem:[#allocation7 + $0x1e0] sm:$0xff]
    %v1558 = vld [vmem:[#allocation7 + $0x1e8] sm:$0xff]
    %v1559 = vld [vmem:[#allocation7 + $0x1f0] sm:$0xff]
    %v1560 = vld [vmem:[#allocation7 + $0x1f8] sm:$0xff]
    %1561 = vmatprep.subr.mxu0 %v1498
    %1562 = vmatpush1.msra.mxu0 %v1497
    %1563 = vmatprep.subr.mxu0 %v1502
    %1564 = vmatpush1.msra.mxu0 %v1501
    %1565 = vmatprep.subr.mxu0 %v1506
    %1566 = vmatpush1.msra.mxu0 %v1505
    %1567 = vmatprep.subr.mxu0 %v1510
    %1568 = vmatpush1.msra.mxu0 %v1509
    %1569 = vmatprep.subr.mxu0 %v1514
    %1570 = vmatpush1.msra.mxu0 %v1513
    %1571 = vmatprep.subr.mxu0 %v1518
    %1572 = vmatpush1.msra.mxu0 %v1517
    %1573 = vmatprep.subr.mxu0 %v1522
    %1574 = vmatpush1.msra.mxu0 %v1521
    %1575 = vmatprep.subr.mxu0 %v1526
    %1576 = vmatpush1.msra.mxu0 %v1525
    %1577 = vmatprep.subr.mxu0 %v1530
    %1578 = vmatpush1.msra.mxu0 %v1529
    %1579 = vmatprep.subr.mxu0 %v1534
    %1580 = vmatpush1.msra.mxu0 %v1533
    %1581 = vmatprep.subr.mxu0 %v1538
    %1582 = vmatpush1.msra.mxu0 %v1537
    %1583 = vmatprep.subr.mxu0 %v1542
    %1584 = vmatpush1.msra.mxu0 %v1541
    %1585 = vmatprep.subr.mxu0 %v1546
    %1586 = vmatpush1.msra.mxu0 %v1545
    %1587 = vmatprep.subr.mxu0 %v1550
    %1588 = vmatpush1.msra.mxu0 %v1549
    %1589 = vmatprep.subr.mxu0 %v1554
    %1590 = vmatpush1.msra.mxu0 %v1553
    %1591 = vmatprep.subr.mxu0 %v1558
    %1592 = vmatpush1.msra.mxu0 %v1557
    %1593 = vmatprep.subr.mxu0 0.0
    %1594 = vmatpush1.msra.mxu0 0.0
    %1595 = vmatprep.subr.mxu0 0.0
    %1596 = vmatpush1.msra.mxu0 0.0
    %1597 = vmatprep.subr.mxu0 0.0
    %1598 = vmatpush1.msra.mxu0 0.0
    %1599 = vmatprep.subr.mxu0 0.0
    %1600 = vmatpush1.msra.mxu0 0.0
    %1601 = vmatprep.subr.mxu0 0.0
    %1602 = vmatpush1.msra.mxu0 0.0
    %1603 = vmatprep.subr.mxu0 0.0
    %1604 = vmatpush1.msra.mxu0 0.0
    %1605 = vmatprep.subr.mxu0 0.0
    %1606 = vmatpush1.msra.mxu0 0.0
    %1607 = vmatprep.subr.mxu0 0.0
    %1608 = vmatpush1.msra.mxu0 0.0
    %1609 = vmatprep.subr.mxu0 0.0
    %1610 = vmatpush1.msra.mxu0 0.0
    %1611 = vmatprep.subr.mxu0 0.0
    %1612 = vmatpush1.msra.mxu0 0.0
    %1613 = vmatprep.subr.mxu0 0.0
    %1614 = vmatpush1.msra.mxu0 0.0
    %1615 = vmatprep.subr.mxu0 0.0
    %1616 = vmatpush1.msra.mxu0 0.0
    %1617 = vmatprep.subr.mxu0 0.0
    %1618 = vmatpush1.msra.mxu0 0.0
    %1619 = vmatprep.subr.mxu0 0.0
    %1620 = vmatpush1.msra.mxu0 0.0
    %1621 = vmatprep.subr.mxu0 0.0
    %1622 = vmatpush1.msra.mxu0 0.0
    %1623 = vmatprep.subr.mxu0 0.0
    %1624 = vmatpush1.msra.mxu0 0.0
    %1625 = vmatprep.mubr.f32.mxu0 0.0
    %1626 = vmatmul.mubr.f32.gmra.mrb[0].mxu0 %v1489
    %v1627 = vpop.f32.mrb[0].mxu0
    %v1628 = vadd.f32 0.0, %v1627
    %v1629 = vpop.f32.mrb[0].mxu0
    %v1630 = vadd.f32 0.0, %v1629
    %1631 = vdwg.mxu0
    %1632 = vmatprep.subr.mxu0 %v1500
    %1633 = vmatpush1.msra.mxu0 %v1499
    %1634 = vmatprep.subr.mxu0 %v1504
    %1635 = vmatpush1.msra.mxu0 %v1503
    %1636 = vmatprep.subr.mxu0 %v1508
    %1637 = vmatpush1.msra.mxu0 %v1507
    %1638 = vmatprep.subr.mxu0 %v1512
    %1639 = vmatpush1.msra.mxu0 %v1511
    %1640 = vmatprep.subr.mxu0 %v1516
    %1641 = vmatpush1.msra.mxu0 %v1515
    %1642 = vmatprep.subr.mxu0 %v1520
    %1643 = vmatpush1.msra.mxu0 %v1519
    %1644 = vmatprep.subr.mxu0 %v1524
    %1645 = vmatpush1.msra.mxu0 %v1523
    %1646 = vmatprep.subr.mxu0 %v1528
    %1647 = vmatpush1.msra.mxu0 %v1527
    %1648 = vmatprep.subr.mxu0 %v1532
    %1649 = vmatpush1.msra.mxu0 %v1531
    %1650 = vmatprep.subr.mxu0 %v1536
    %1651 = vmatpush1.msra.mxu0 %v1535
    %1652 = vmatprep.subr.mxu0 %v1540
    %1653 = vmatpush1.msra.mxu0 %v1539
    %1654 = vmatprep.subr.mxu0 %v1544
    %1655 = vmatpush1.msra.mxu0 %v1543
    %1656 = vmatprep.subr.mxu0 %v1548
    %1657 = vmatpush1.msra.mxu0 %v1547
    %1658 = vmatprep.subr.mxu0 %v1552
    %1659 = vmatpush1.msra.mxu0 %v1551
    %1660 = vmatprep.subr.mxu0 %v1556
    %1661 = vmatpush1.msra.mxu0 %v1555
    %1662 = vmatprep.subr.mxu0 %v1560
    %1663 = vmatpush1.msra.mxu0 %v1559
    %1664 = vmatprep.subr.mxu0 0.0
    %1665 = vmatpush1.msra.mxu0 0.0
    %1666 = vmatprep.subr.mxu0 0.0
    %1667 = vmatpush1.msra.mxu0 0.0
    %1668 = vmatprep.subr.mxu0 0.0
    %1669 = vmatpush1.msra.mxu0 0.0
    %1670 = vmatprep.subr.mxu0 0.0
    %1671 = vmatpush1.msra.mxu0 0.0
    %1672 = vmatprep.subr.mxu0 0.0
    %1673 = vmatpush1.msra.mxu0 0.0
    %1674 = vmatprep.subr.mxu0 0.0
    %1675 = vmatpush1.msra.mxu0 0.0
    %1676 = vmatprep.subr.mxu0 0.0
    %1677 = vmatpush1.msra.mxu0 0.0
    %1678 = vmatprep.subr.mxu0 0.0
    %1679 = vmatpush1.msra.mxu0 0.0
    %1680 = vmatprep.subr.mxu0 0.0
    %1681 = vmatpush1.msra.mxu0 0.0
    %1682 = vmatprep.subr.mxu0 0.0
    %1683 = vmatpush1.msra.mxu0 0.0
    %1684 = vmatprep.subr.mxu0 0.0
    %1685 = vmatpush1.msra.mxu0 0.0
    %1686 = vmatprep.subr.mxu0 0.0
    %1687 = vmatpush1.msra.mxu0 0.0
    %1688 = vmatprep.subr.mxu0 0.0
    %1689 = vmatpush1.msra.mxu0 0.0
    %1690 = vmatprep.subr.mxu0 0.0
    %1691 = vmatpush1.msra.mxu0 0.0
    %1692 = vmatprep.subr.mxu0 0.0
    %1693 = vmatpush1.msra.mxu0 0.0
    %1694 = vmatprep.subr.mxu0 0.0
    %1695 = vmatpush1.msra.mxu0 0.0
    %1696 = vmatprep.mubr.f32.mxu0 0.0
    %1697 = vmatmul.mubr.f32.gmra.mrb[0].mxu0 %v1489
    %v1698 = vpop.f32.mrb[0].mxu0
    %v1699 = vadd.f32 0.0, %v1698
    %v1700 = vpop.f32.mrb[0].mxu0
    %v1701 = vadd.f32 0.0, %v1700
    %1702 = vdwg.mxu0
    %v1703 = vadd.f32 %v1493, %v1628
    %v1704 = vadd.f32 %v1494, %v1630
    %v1705 = vadd.f32 %v1495, %v1699
    %v1706 = vadd.f32 %v1496, %v1701
    %v1707 = vxor.u32 %v1703, 2147483648
    %v1708 = vxor.u32 %v1704, 2147483648
    %v1709 = vxor.u32 %v1705, 2147483648
    %v1710 = vmul.f32 %v1707, 1.442695
    %v1711 = vpow.pop %v1710
    %v1712 = vmul.f32 %v1708, 1.442695
    %v1713 = vpow.pop %v1712
    %v1714 = vmul.f32 %v1709, 1.442695
    %v1715 = vpow.pop %v1714
    %v1716 = vadd.f32 %v1711, 1.0
    %v1717 = vadd.f32 %v1713, 1.0
    %v1718 = vadd.f32 %v1715, 1.0
    %v1719 = vrcp.pop %v1716
    %v1720 = vmul.f32 1.0, %v1719
    %v1721 = vrcp.pop %v1717
    %v1722 = vmul.f32 1.0, %v1721
    %v1723 = vrcp.pop %v1718
    %v1724 = vmul.f32 1.0, %v1723
    %v1725 = vtanh.pop %v1706
    %v1726 = vmul.f32 %v1722, %v1487
    %v1727 = vmul.f32 %v1720, %v1725
    %v1728 = vadd.f32 %v1726, %v1727
    %v1729 = vtanh.pop %v1728
    %v1730 = vmul.f32 %v1724, %v1729
    %s1731 = scalar_lea.vmem [#allocation9], 48
    %1732 = vst [vmem:[%s1731] sm:$0xff] %v1730
    %s1733 = scalar_lea.vmem [#allocation4], 224
    %v1734 = vld [vmem:[%s1733] sm:$0xff]
    %v1735 = vld [vmem:[%s1733 + $0x8] sm:$0xff]
    %v1736 = vld [vmem:[%s1733 + $0x10] sm:$0xff]
    %v1737 = vld [vmem:[%s1733 + $0x18] sm:$0xff]
    %v1738 = vld [vmem:[#allocation7] sm:$0xff]
    %v1739 = vld [vmem:[#allocation7 + $0x8] sm:$0xff]
    %v1740 = vld [vmem:[#allocation7 + $0x10] sm:$0xff]
    %v1741 = vld [vmem:[#allocation7 + $0x18] sm:$0xff]
    %v1742 = vld [vmem:[#allocation7 + $0x20] sm:$0xff]
    %v1743 = vld [vmem:[#allocation7 + $0x28] sm:$0xff]
    %v1744 = vld [vmem:[#allocation7 + $0x30] sm:$0xff]
    %v1745 = vld [vmem:[#allocation7 + $0x38] sm:$0xff]
    %v1746 = vld [vmem:[#allocation7 + $0x40] sm:$0xff]
    %v1747 = vld [vmem:[#allocation7 + $0x48] sm:$0xff]
    %v1748 = vld [vmem:[#allocation7 + $0x50] sm:$0xff]
    %v1749 = vld [vmem:[#allocation7 + $0x58] sm:$0xff]
    %v1750 = vld [vmem:[#allocation7 + $0x60] sm:$0xff]
    %v1751 = vld [vmem:[#allocation7 + $0x68] sm:$0xff]
    %v1752 = vld [vmem:[#allocation7 + $0x70] sm:$0xff]
    %v1753 = vld [vmem:[#allocation7 + $0x78] sm:$0xff]
    %v1754 = vld [vmem:[#allocation7 + $0x80] sm:$0xff]
    %v1755 = vld [vmem:[#allocation7 + $0x88] sm:$0xff]
    %v1756 = vld [vmem:[#allocation7 + $0x90] sm:$0xff]
    %v1757 = vld [vmem:[#allocation7 + $0x98] sm:$0xff]
    %v1758 = vld [vmem:[#allocation7 + $0xa0] sm:$0xff]
    %v1759 = vld [vmem:[#allocation7 + $0xa8] sm:$0xff]
    %v1760 = vld [vmem:[#allocation7 + $0xb0] sm:$0xff]
    %v1761 = vld [vmem:[#allocation7 + $0xb8] sm:$0xff]
    %v1762 = vld [vmem:[#allocation7 + $0xc0] sm:$0xff]
    %v1763 = vld [vmem:[#allocation7 + $0xc8] sm:$0xff]
    %v1764 = vld [vmem:[#allocation7 + $0xd0] sm:$0xff]
    %v1765 = vld [vmem:[#allocation7 + $0xd8] sm:$0xff]
    %v1766 = vld [vmem:[#allocation7 + $0xe0] sm:$0xff]
    %v1767 = vld [vmem:[#allocation7 + $0xe8] sm:$0xff]
    %v1768 = vld [vmem:[#allocation7 + $0xf0] sm:$0xff]
    %v1769 = vld [vmem:[#allocation7 + $0xf8] sm:$0xff]
    %v1770 = vld [vmem:[#allocation7 + $0x100] sm:$0xff]
    %v1771 = vld [vmem:[#allocation7 + $0x108] sm:$0xff]
    %v1772 = vld [vmem:[#allocation7 + $0x110] sm:$0xff]
    %v1773 = vld [vmem:[#allocation7 + $0x118] sm:$0xff]
    %v1774 = vld [vmem:[#allocation7 + $0x120] sm:$0xff]
    %v1775 = vld [vmem:[#allocation7 + $0x128] sm:$0xff]
    %v1776 = vld [vmem:[#allocation7 + $0x130] sm:$0xff]
    %v1777 = vld [vmem:[#allocation7 + $0x138] sm:$0xff]
    %v1778 = vld [vmem:[#allocation7 + $0x140] sm:$0xff]
    %v1779 = vld [vmem:[#allocation7 + $0x148] sm:$0xff]
    %v1780 = vld [vmem:[#allocation7 + $0x150] sm:$0xff]
    %v1781 = vld [vmem:[#allocation7 + $0x158] sm:$0xff]
    %v1782 = vld [vmem:[#allocation7 + $0x160] sm:$0xff]
    %v1783 = vld [vmem:[#allocation7 + $0x168] sm:$0xff]
    %v1784 = vld [vmem:[#allocation7 + $0x170] sm:$0xff]
    %v1785 = vld [vmem:[#allocation7 + $0x178] sm:$0xff]
    %v1786 = vld [vmem:[#allocation7 + $0x180] sm:$0xff]
    %v1787 = vld [vmem:[#allocation7 + $0x188] sm:$0xff]
    %v1788 = vld [vmem:[#allocation7 + $0x190] sm:$0xff]
    %v1789 = vld [vmem:[#allocation7 + $0x198] sm:$0xff]
    %v1790 = vld [vmem:[#allocation7 + $0x1a0] sm:$0xff]
    %v1791 = vld [vmem:[#allocation7 + $0x1a8] sm:$0xff]
    %v1792 = vld [vmem:[#allocation7 + $0x1b0] sm:$0xff]
    %v1793 = vld [vmem:[#allocation7 + $0x1b8] sm:$0xff]
    %v1794 = vld [vmem:[#allocation7 + $0x1c0] sm:$0xff]
    %v1795 = vld [vmem:[#allocation7 + $0x1c8] sm:$0xff]
    %v1796 = vld [vmem:[#allocation7 + $0x1d0] sm:$0xff]
    %v1797 = vld [vmem:[#allocation7 + $0x1d8] sm:$0xff]
    %v1798 = vld [vmem:[#allocation7 + $0x1e0] sm:$0xff]
    %v1799 = vld [vmem:[#allocation7 + $0x1e8] sm:$0xff]
    %v1800 = vld [vmem:[#allocation7 + $0x1f0] sm:$0xff]
    %v1801 = vld [vmem:[#allocation7 + $0x1f8] sm:$0xff]
    %1802 = vmatprep.subr.mxu0 %v1739
    %1803 = vmatpush1.msra.mxu0 %v1738
    %1804 = vmatprep.subr.mxu0 %v1743
    %1805 = vmatpush1.msra.mxu0 %v1742
    %1806 = vmatprep.subr.mxu0 %v1747
    %1807 = vmatpush1.msra.mxu0 %v1746
    %1808 = vmatprep.subr.mxu0 %v1751
    %1809 = vmatpush1.msra.mxu0 %v1750
    %1810 = vmatprep.subr.mxu0 %v1755
    %1811 = vmatpush1.msra.mxu0 %v1754
    %1812 = vmatprep.subr.mxu0 %v1759
    %1813 = vmatpush1.msra.mxu0 %v1758
    %1814 = vmatprep.subr.mxu0 %v1763
    %1815 = vmatpush1.msra.mxu0 %v1762
    %1816 = vmatprep.subr.mxu0 %v1767
    %1817 = vmatpush1.msra.mxu0 %v1766
    %1818 = vmatprep.subr.mxu0 %v1771
    %1819 = vmatpush1.msra.mxu0 %v1770
    %1820 = vmatprep.subr.mxu0 %v1775
    %1821 = vmatpush1.msra.mxu0 %v1774
    %1822 = vmatprep.subr.mxu0 %v1779
    %1823 = vmatpush1.msra.mxu0 %v1778
    %1824 = vmatprep.subr.mxu0 %v1783
    %1825 = vmatpush1.msra.mxu0 %v1782
    %1826 = vmatprep.subr.mxu0 %v1787
    %1827 = vmatpush1.msra.mxu0 %v1786
    %1828 = vmatprep.subr.mxu0 %v1791
    %1829 = vmatpush1.msra.mxu0 %v1790
    %1830 = vmatprep.subr.mxu0 %v1795
    %1831 = vmatpush1.msra.mxu0 %v1794
    %1832 = vmatprep.subr.mxu0 %v1799
    %1833 = vmatpush1.msra.mxu0 %v1798
    %1834 = vmatprep.subr.mxu0 0.0
    %1835 = vmatpush1.msra.mxu0 0.0
    %1836 = vmatprep.subr.mxu0 0.0
    %1837 = vmatpush1.msra.mxu0 0.0
    %1838 = vmatprep.subr.mxu0 0.0
    %1839 = vmatpush1.msra.mxu0 0.0
    %1840 = vmatprep.subr.mxu0 0.0
    %1841 = vmatpush1.msra.mxu0 0.0
    %1842 = vmatprep.subr.mxu0 0.0
    %1843 = vmatpush1.msra.mxu0 0.0
    %1844 = vmatprep.subr.mxu0 0.0
    %1845 = vmatpush1.msra.mxu0 0.0
    %1846 = vmatprep.subr.mxu0 0.0
    %1847 = vmatpush1.msra.mxu0 0.0
    %1848 = vmatprep.subr.mxu0 0.0
    %1849 = vmatpush1.msra.mxu0 0.0
    %1850 = vmatprep.subr.mxu0 0.0
    %1851 = vmatpush1.msra.mxu0 0.0
    %1852 = vmatprep.subr.mxu0 0.0
    %1853 = vmatpush1.msra.mxu0 0.0
    %1854 = vmatprep.subr.mxu0 0.0
    %1855 = vmatpush1.msra.mxu0 0.0
    %1856 = vmatprep.subr.mxu0 0.0
    %1857 = vmatpush1.msra.mxu0 0.0
    %1858 = vmatprep.subr.mxu0 0.0
    %1859 = vmatpush1.msra.mxu0 0.0
    %1860 = vmatprep.subr.mxu0 0.0
    %1861 = vmatpush1.msra.mxu0 0.0
    %1862 = vmatprep.subr.mxu0 0.0
    %1863 = vmatpush1.msra.mxu0 0.0
    %1864 = vmatprep.subr.mxu0 0.0
    %1865 = vmatpush1.msra.mxu0 0.0
    %1866 = vmatprep.mubr.f32.mxu0 0.0
    %1867 = vmatmul.mubr.f32.gmra.mrb[0].mxu0 %v1730
    %v1868 = vpop.f32.mrb[0].mxu0
    %v1869 = vadd.f32 0.0, %v1868
    %v1870 = vpop.f32.mrb[0].mxu0
    %v1871 = vadd.f32 0.0, %v1870
    %1872 = vdwg.mxu0
    %1873 = vmatprep.subr.mxu0 %v1741
    %1874 = vmatpush1.msra.mxu0 %v1740
    %1875 = vmatprep.subr.mxu0 %v1745
    %1876 = vmatpush1.msra.mxu0 %v1744
    %1877 = vmatprep.subr.mxu0 %v1749
    %1878 = vmatpush1.msra.mxu0 %v1748
    %1879 = vmatprep.subr.mxu0 %v1753
    %1880 = vmatpush1.msra.mxu0 %v1752
    %1881 = vmatprep.subr.mxu0 %v1757
    %1882 = vmatpush1.msra.mxu0 %v1756
    %1883 = vmatprep.subr.mxu0 %v1761
    %1884 = vmatpush1.msra.mxu0 %v1760
    %1885 = vmatprep.subr.mxu0 %v1765
    %1886 = vmatpush1.msra.mxu0 %v1764
    %1887 = vmatprep.subr.mxu0 %v1769
    %1888 = vmatpush1.msra.mxu0 %v1768
    %1889 = vmatprep.subr.mxu0 %v1773
    %1890 = vmatpush1.msra.mxu0 %v1772
    %1891 = vmatprep.subr.mxu0 %v1777
    %1892 = vmatpush1.msra.mxu0 %v1776
    %1893 = vmatprep.subr.mxu0 %v1781
    %1894 = vmatpush1.msra.mxu0 %v1780
    %1895 = vmatprep.subr.mxu0 %v1785
    %1896 = vmatpush1.msra.mxu0 %v1784
    %1897 = vmatprep.subr.mxu0 %v1789
    %1898 = vmatpush1.msra.mxu0 %v1788
    %1899 = vmatprep.subr.mxu0 %v1793
    %1900 = vmatpush1.msra.mxu0 %v1792
    %1901 = vmatprep.subr.mxu0 %v1797
    %1902 = vmatpush1.msra.mxu0 %v1796
    %1903 = vmatprep.subr.mxu0 %v1801
    %1904 = vmatpush1.msra.mxu0 %v1800
    %1905 = vmatprep.subr.mxu0 0.0
    %1906 = vmatpush1.msra.mxu0 0.0
    %1907 = vmatprep.subr.mxu0 0.0
    %1908 = vmatpush1.msra.mxu0 0.0
    %1909 = vmatprep.subr.mxu0 0.0
    %1910 = vmatpush1.msra.mxu0 0.0
    %1911 = vmatprep.subr.mxu0 0.0
    %1912 = vmatpush1.msra.mxu0 0.0
    %1913 = vmatprep.subr.mxu0 0.0
    %1914 = vmatpush1.msra.mxu0 0.0
    %1915 = vmatprep.subr.mxu0 0.0
    %1916 = vmatpush1.msra.mxu0 0.0
    %1917 = vmatprep.subr.mxu0 0.0
    %1918 = vmatpush1.msra.mxu0 0.0
    %1919 = vmatprep.subr.mxu0 0.0
    %1920 = vmatpush1.msra.mxu0 0.0
    %1921 = vmatprep.subr.mxu0 0.0
    %1922 = vmatpush1.msra.mxu0 0.0
    %1923 = vmatprep.subr.mxu0 0.0
    %1924 = vmatpush1.msra.mxu0 0.0
    %1925 = vmatprep.subr.mxu0 0.0
    %1926 = vmatpush1.msra.mxu0 0.0
    %1927 = vmatprep.subr.mxu0 0.0
    %1928 = vmatpush1.msra.mxu0 0.0
    %1929 = vmatprep.subr.mxu0 0.0
    %1930 = vmatpush1.msra.mxu0 0.0
    %1931 = vmatprep.subr.mxu0 0.0
    %1932 = vmatpush1.msra.mxu0 0.0
    %1933 = vmatprep.subr.mxu0 0.0
    %1934 = vmatpush1.msra.mxu0 0.0
    %1935 = vmatprep.subr.mxu0 0.0
    %1936 = vmatpush1.msra.mxu0 0.0
    %1937 = vmatprep.mubr.f32.mxu0 0.0
    %1938 = vmatmul.mubr.f32.gmra.mrb[0].mxu0 %v1730
    %v1939 = vpop.f32.mrb[0].mxu0
    %v1940 = vadd.f32 0.0, %v1939
    %v1941 = vpop.f32.mrb[0].mxu0
    %v1942 = vadd.f32 0.0, %v1941
    %1943 = vdwg.mxu0
    %v1944 = vadd.f32 %v1734, %v1869
    %v1945 = vadd.f32 %v1735, %v1871
    %v1946 = vadd.f32 %v1736, %v1940
    %v1947 = vadd.f32 %v1737, %v1942
    %v1948 = vxor.u32 %v1944, 2147483648
    %v1949 = vxor.u32 %v1945, 2147483648
    %v1950 = vxor.u32 %v1946, 2147483648
    %v1951 = vmul.f32 %v1948, 1.442695
    %v1952 = vpow.pop %v1951
    %v1953 = vmul.f32 %v1949, 1.442695
    %v1954 = vpow.pop %v1953
    %v1955 = vmul.f32 %v1950, 1.442695
    %v1956 = vpow.pop %v1955
    %v1957 = vadd.f32 %v1952, 1.0
    %v1958 = vadd.f32 %v1954, 1.0
    %v1959 = vadd.f32 %v1956, 1.0
    %v1960 = vrcp.pop %v1957
    %v1961 = vmul.f32 1.0, %v1960
    %v1962 = vrcp.pop %v1958
    %v1963 = vmul.f32 1.0, %v1962
    %v1964 = vrcp.pop %v1959
    %v1965 = vmul.f32 1.0, %v1964
    %v1966 = vtanh.pop %v1947
    %v1967 = vmul.f32 %v1963, %v1728
    %v1968 = vmul.f32 %v1961, %v1966
    %v1969 = vadd.f32 %v1967, %v1968
    %v1970 = vtanh.pop %v1969
    %v1971 = vmul.f32 %v1965, %v1970
    %s1972 = scalar_lea.vmem [#allocation9], 56
    %1973 = vst [vmem:[%s1972] sm:$0xff] %v1971
    %1974 = vst [vmem:[#allocation2] sm:$0xff] %v1971
    %1975 = vst [vmem:[#allocation3] sm:$0xff] %v1969
    // Predicated region
    $region22: #{tpu_custom_call.1} parent=1 // pred_check
      _
    $region23: #{tpu_custom_call.1} parent=1 // pred_check_branch
      %1977 = sbr.rel (0) target = $region25
    $region24: #{tpu_custom_call.1} parent=1 // pred_region
      %s1979 = ssub.s32 1024, 1024
      %1980 = vsyncadd [#allocation6], %s1979
      %s1981 = sshll.u32 [#allocation9], 4
      %s1982 = int_to_ptr.vmem [resolvable:$true] %s1981
      %1987 = dma.vmem_to_hbm [thread:$0]  %s1982, 1024, %s2, [#allocation6], 128, 128, 8
    $region25: #{tpu_custom_call.1} parent=1 // pred_fallthru
      _
    // Predicated region
    $region26: #{tpu_custom_call.1} parent=1 // pred_check
      _
    $region27: #{tpu_custom_call.1} parent=1 // pred_check_branch
      %1989 = sbr.rel (0) target = $region29
    $region28: #{tpu_custom_call.1} parent=1 // pred_region
      %1990 = dma.done [#allocation6], 1024
    $region29: #{tpu_custom_call.1} parent=1 // pred_fallthru
      _
    %1991 = vsyncpa [#allocation5], 1
    %1992 = vsyncpa [#allocation8], 1
    %1993 = vsyncpa [#allocation6], 1

// kernel: tpu_custom_call.1
$region0: #{tpu_custom_call.1}
  #allocation0 [shape = 'u32[]', space=smem, size = 0x4, offset = 0x4, fixed_abs, tag = 'smem constant byte address 0x4 - core index']
  #allocation1 [shape = 'u32[144,128]{1,0:T(1,128)}', space=vmem, size = 0x12000, scoped, tag = 'internal scratch']
  #allocation2 [shape = 'f32[8,128]{1,0:T(8,128)}', space=vmem, size = 0x1000, scoped, tag = 'scratch operand']
  #allocation3 [shape = 'f32[8,128]{1,0:T(8,128)}', space=vmem, size = 0x1000, scoped, tag = 'scratch operand']
  %s0 = inlined_call_operand.hbm [shape: f32[8,8,512], index: 0, kind: input, shape index: {}]
  %s1 = inlined_call_operand.hbm [shape: f32[128,512], index: 1, kind: input, shape index: {}]
  %s2 = inlined_call_operand.hbm [shape: f32[8,8,128], index: 2, kind: output, shape index: {}]
  %s3 = sld [smem:[#allocation0]]
  $region30: #{tpu_custom_call.1} parent=0
    _
  %s5 = ssub.s32 1, %s3
  %s6 = scalar_select 0, %s5, %s3
  $region1: #{tpu_custom_call.1} parent=0
    #allocation4 [shape = 'u8[131072]{0}', space=vmem, size = 0x20000, scoped, tag = 'input window, operand 0, single buffered']
    #allocation5 [shape = 's32[1]{0}', space=sflag, size = 0x4, scoped, tag = 'scoped memory for tpu_custom_call.1']
    #allocation6 [shape = 's32[1]{0}', space=sflag, size = 0x4, scoped, tag = 'scoped memory for tpu_custom_call.1']
    #allocation7 [shape = 'u8[262144]{0}', space=vmem, size = 0x40000, scoped, tag = 'input window, operand 1, single buffered']
    #allocation8 [shape = 's32[1]{0}', space=sflag, size = 0x4, scoped, tag = 'scoped memory for tpu_custom_call.1']
    #allocation9 [shape = 'u8[32768]{0}', space=vmem, size = 0x8000, scoped, tag = 'output window, operand 0, single buffered']
    %7 = vsyncpa [#allocation5], 0
    %8 = vsyncpa [#allocation8], 0
    %9 = vsyncpa [#allocation6], 0
    // Predicated region
    $region2: #{tpu_custom_call.1} parent=1 // pred_check
      _
    $region3: #{tpu_custom_call.1} parent=1 // pred_check_branch
      %11 = sbr.rel (0) target = $region5
    $region4: #{tpu_custom_call.1} parent=1 // pred_region
      %s13 = ssub.s32 4096, 4096
      %14 = vsyncadd [#allocation5], %s13
      %s15 = sshll.u32 [#allocation4], 4
      %s16 = int_to_ptr.vmem [resolvable:$true] %s15
      %21 = dma.hbm_to_vmem [thread:$0]  %s0, 4096, %s16, [#allocation5], 512, 512, 32
    $region5: #{tpu_custom_call.1} parent=1 // pred_fallthru
      _
    // Predicated region
    $region6: #{tpu_custom_call.1} parent=1 // pred_check
      _
    $region7: #{tpu_custom_call.1} parent=1 // pred_check_branch
      %23 = sbr.rel (0) target = $region9
    $region8: #{tpu_custom_call.1} parent=1 // pred_region
      %s25 = ssub.s32 8192, 8192
      %26 = vsyncadd [#allocation8], %s25
      %s27 = sshll.u32 [#allocation7], 4
      %s28 = int_to_ptr.vmem [resolvable:$true] %s27
      %33 = dma.hbm_to_vmem [thread:$0]  %s1, 8192, %s28, [#allocation8], 512, 512, 32
    $region9: #{tpu_custom_call.1} parent=1 // pred_fallthru
      _
    // Predicated region
    $region10: #{tpu_custom_call.1} parent=1 // pred_check
      _
    $region11: #{tpu_custom_call.1} parent=1 // pred_check_branch
      %35 = sbr.rel (0) target = $region13
    $region12: #{tpu_custom_call.1} parent=1 // pred_region
      %36 = dma.done [#allocation5], 4096
    $region13: #{tpu_custom_call.1} parent=1 // pred_fallthru
      _
    // Predicated region
    $region14: #{tpu_custom_call.1} parent=1 // pred_check
      _
    $region15: #{tpu_custom_call.1} parent=1 // pred_check_branch
      %38 = sbr.rel (0) target = $region17
    $region16: #{tpu_custom_call.1} parent=1 // pred_region
      %39 = dma.done [#allocation8], 8192
    $region17: #{tpu_custom_call.1} parent=1 // pred_fallthru
      _
    %p40 = scmp.eq.s32.totalorder 0, 0
    // Predicated region
    $region18: #{tpu_custom_call.1} parent=1 // pred_check
      %p41 = pneg %p40
    $region19: #{tpu_custom_call.1} parent=1 // pred_check_branch
      %43 = sbr.rel (%p41) target = $region21
    $region20: #{tpu_custom_call.1} parent=1 // pred_region
      %44 = vst [vmem:[#allocation2] sm:$0xff] 0.0
      %45 = vst [vmem:[#allocation3] sm:$0xff] 0.0
    $region21: #{tpu_custom_call.1} parent=1 // pred_fallthru
      _
    %v46 = vld [vmem:[#allocation2] sm:$0xff]
    %v47 = vld [vmem:[#allocation3] sm:$0xff]
    %v48 = vld [vmem:[#allocation4] sm:$0xff]
    %v49 = vld [vmem:[#allocation4 + $0x8] sm:$0xff]
    %v50 = vld [vmem:[#allocation4 + $0x10] sm:$0xff]
    %v51 = vld [vmem:[#allocation4 + $0x18] sm:$0xff]
    %v52 = vld [vmem:[#allocation7] sm:$0xff]
    %v53 = vld [vmem:[#allocation7 + $0x8] sm:$0xff]
    %v54 = vld [vmem:[#allocation7 + $0x10] sm:$0xff]
    %v55 = vld [vmem:[#allocation7 + $0x18] sm:$0xff]
    %v56 = vld [vmem:[#allocation7 + $0x20] sm:$0xff]
    %v57 = vld [vmem:[#allocation7 + $0x28] sm:$0xff]
    %v58 = vld [vmem:[#allocation7 + $0x30] sm:$0xff]
    %v59 = vld [vmem:[#allocation7 + $0x38] sm:$0xff]
    %v60 = vld [vmem:[#allocation7 + $0x40] sm:$0xff]
    %v61 = vld [vmem:[#allocation7 + $0x48] sm:$0xff]
    %v62 = vld [vmem:[#allocation7 + $0x50] sm:$0xff]
    %v63 = vld [vmem:[#allocation7 + $0x58] sm:$0xff]
    %v64 = vld [vmem:[#allocation7 + $0x60] sm:$0xff]
    %v65 = vld [vmem:[#allocation7 + $0x68] sm:$0xff]
    %v66 = vld [vmem:[#allocation7 + $0x70] sm:$0xff]
    %v67 = vld [vmem:[#allocation7 + $0x78] sm:$0xff]
    %v68 = vld [vmem:[#allocation7 + $0x80] sm:$0xff]
    %v69 = vld [vmem:[#allocation7 + $0x88] sm:$0xff]
    %v70 = vld [vmem:[#allocation7 + $0x90] sm:$0xff]
    %v71 = vld [vmem:[#allocation7 + $0x98] sm:$0xff]
    %v72 = vld [vmem:[#allocation7 + $0xa0] sm:$0xff]
    %v73 = vld [vmem:[#allocation7 + $0xa8] sm:$0xff]
    %v74 = vld [vmem:[#allocation7 + $0xb0] sm:$0xff]
    %v75 = vld [vmem:[#allocation7 + $0xb8] sm:$0xff]
    %v76 = vld [vmem:[#allocation7 + $0xc0] sm:$0xff]
    %v77 = vld [vmem:[#allocation7 + $0xc8] sm:$0xff]
    %v78 = vld [vmem:[#allocation7 + $0xd0] sm:$0xff]
    %v79 = vld [vmem:[#allocation7 + $0xd8] sm:$0xff]
    %v80 = vld [vmem:[#allocation7 + $0xe0] sm:$0xff]
    %v81 = vld [vmem:[#allocation7 + $0xe8] sm:$0xff]
    %v82 = vld [vmem:[#allocation7 + $0xf0] sm:$0xff]
    %v83 = vld [vmem:[#allocation7 + $0xf8] sm:$0xff]
    %v84 = vld [vmem:[#allocation7 + $0x100] sm:$0xff]
    %v85 = vld [vmem:[#allocation7 + $0x108] sm:$0xff]
    %v86 = vld [vmem:[#allocation7 + $0x110] sm:$0xff]
    %v87 = vld [vmem:[#allocation7 + $0x118] sm:$0xff]
    %v88 = vld [vmem:[#allocation7 + $0x120] sm:$0xff]
    %v89 = vld [vmem:[#allocation7 + $0x128] sm:$0xff]
    %v90 = vld [vmem:[#allocation7 + $0x130] sm:$0xff]
    %v91 = vld [vmem:[#allocation7 + $0x138] sm:$0xff]
    %v92 = vld [vmem:[#allocation7 + $0x140] sm:$0xff]
    %v93 = vld [vmem:[#allocation7 + $0x148] sm:$0xff]
    %v94 = vld [vmem:[#allocation7 + $0x150] sm:$0xff]
    %v95 = vld [vmem:[#allocation7 + $0x158] sm:$0xff]
    %v96 = vld [vmem:[#allocation7 + $0x160] sm:$0xff]
    %v97 = vld [vmem:[#allocation7 + $0x168] sm:$0xff]
    %v98 = vld [vmem:[#allocation7 + $0x170] sm:$0xff]
    %v99 = vld [vmem:[#allocation7 + $0x178] sm:$0xff]
    %v100 = vld [vmem:[#allocation7 + $0x180] sm:$0xff]
    %v101 = vld [vmem:[#allocation7 + $0x188] sm:$0xff]
    %v102 = vld [vmem:[#allocation7 + $0x190] sm:$0xff]
    %v103 = vld [vmem:[#allocation7 + $0x198] sm:$0xff]
    %v104 = vld [vmem:[#allocation7 + $0x1a0] sm:$0xff]
    %v105 = vld [vmem:[#allocation7 + $0x1a8] sm:$0xff]
    %v106 = vld [vmem:[#allocation7 + $0x1b0] sm:$0xff]
    %v107 = vld [vmem:[#allocation7 + $0x1b8] sm:$0xff]
    %v108 = vld [vmem:[#allocation7 + $0x1c0] sm:$0xff]
    %v109 = vld [vmem:[#allocation7 + $0x1c8] sm:$0xff]
    %v110 = vld [vmem:[#allocation7 + $0x1d0] sm:$0xff]
    %v111 = vld [vmem:[#allocation7 + $0x1d8] sm:$0xff]
    %v112 = vld [vmem:[#allocation7 + $0x1e0] sm:$0xff]
    %v113 = vld [vmem:[#allocation7 + $0x1e8] sm:$0xff]
    %v114 = vld [vmem:[#allocation7 + $0x1f0] sm:$0xff]
    %v115 = vld [vmem:[#allocation7 + $0x1f8] sm:$0xff]
    %116 = vmatprep.subr.mxu0 %v53
    %117 = vmatpush1.msra.mxu0 %v52
    %118 = vmatprep.subr.mxu0 %v57
    %119 = vmatpush1.msra.mxu0 %v56
    %120 = vmatprep.subr.mxu0 %v61
    %121 = vmatpush1.msra.mxu0 %v60
    %122 = vmatprep.subr.mxu0 %v65
    %123 = vmatpush1.msra.mxu0 %v64
    %124 = vmatprep.subr.mxu0 %v69
    %125 = vmatpush1.msra.mxu0 %v68
    %126 = vmatprep.subr.mxu0 %v73
    %127 = vmatpush1.msra.mxu0 %v72
    %128 = vmatprep.subr.mxu0 %v77
    %129 = vmatpush1.msra.mxu0 %v76
    %130 = vmatprep.subr.mxu0 %v81
    %131 = vmatpush1.msra.mxu0 %v80
    %132 = vmatprep.subr.mxu0 %v85
    %133 = vmatpush1.msra.mxu0 %v84
    %134 = vmatprep.subr.mxu0 %v89
    %135 = vmatpush1.msra.mxu0 %v88
    %136 = vmatprep.subr.mxu0 %v93
    %137 = vmatpush1.msra.mxu0 %v92
    %138 = vmatprep.subr.mxu0 %v97
    %139 = vmatpush1.msra.mxu0 %v96
    %140 = vmatprep.subr.mxu0 %v101
    %141 = vmatpush1.msra.mxu0 %v100
    %142 = vmatprep.subr.mxu0 %v105
    %143 = vmatpush1.msra.mxu0 %v104
    %144 = vmatprep.subr.mxu0 %v109
    %145 = vmatpush1.msra.mxu0 %v108
    %146 = vmatprep.subr.mxu0 %v113
    %147 = vmatpush1.msra.mxu0 %v112
    %148 = vmatprep.subr.mxu0 0.0
    %149 = vmatpush1.msra.mxu0 0.0
    %150 = vmatprep.subr.mxu0 0.0
    %151 = vmatpush1.msra.mxu0 0.0
    %152 = vmatprep.subr.mxu0 0.0
    %153 = vmatpush1.msra.mxu0 0.0
    %154 = vmatprep.subr.mxu0 0.0
    %155 = vmatpush1.msra.mxu0 0.0
    %156 = vmatprep.subr.mxu0 0.0
    %157 = vmatpush1.msra.mxu0 0.0
    %158 = vmatprep.subr.mxu0 0.0
    %159 = vmatpush1.msra.mxu0 0.0
    %160 = vmatprep.subr.mxu0 0.0
    %161 = vmatpush1.msra.mxu0 0.0
    %162 = vmatprep.subr.mxu0 0.0
    %163 = vmatpush1.msra.mxu0 0.0
    %164 = vmatprep.subr.mxu0 0.0
    %165 = vmatpush1.msra.mxu0 0.0
    %166 = vmatprep.subr.mxu0 0.0
    %167 = vmatpush1.msra.mxu0 0.0
    %168 = vmatprep.subr.mxu0 0.0
    %169 = vmatpush1.msra.mxu0 0.0
    %170 = vmatprep.subr.mxu0 0.0
    %171 = vmatpush1.msra.mxu0 0.0
    %172 = vmatprep.subr.mxu0 0.0
    %173 = vmatpush1.msra.mxu0 0.0
    %174 = vmatprep.subr.mxu0 0.0
    %175 = vmatpush1.msra.mxu0 0.0
    %176 = vmatprep.subr.mxu0 0.0
    %177 = vmatpush1.msra.mxu0 0.0
    %178 = vmatprep.subr.mxu0 0.0
    %179 = vmatpush1.msra.mxu0 0.0
    %180 = vmatprep.mubr.f32.mxu0 0.0
    %181 = vmatmul.mubr.f32.gmra.mrb[0].mxu0 %v46
    %v182 = vpop.f32.mrb[0].mxu0
    %v183 = vadd.f32 0.0, %v182
    %v184 = vpop.f32.mrb[0].mxu0
    %v185 = vadd.f32 0.0, %v184
    %186 = vdwg.mxu0
    %187 = vmatprep.subr.mxu0 %v55
    %188 = vmatpush1.msra.mxu0 %v54
    %189 = vmatprep.subr.mxu0 %v59
    %190 = vmatpush1.msra.mxu0 %v58
    %191 = vmatprep.subr.mxu0 %v63
    %192 = vmatpush1.msra.mxu0 %v62
    %193 = vmatprep.subr.mxu0 %v67
    %194 = vmatpush1.msra.mxu0 %v66
    %195 = vmatprep.subr.mxu0 %v71
    %196 = vmatpush1.msra.mxu0 %v70
    %197 = vmatprep.subr.mxu0 %v75
    %198 = vmatpush1.msra.mxu0 %v74
    %199 = vmatprep.subr.mxu0 %v79
    %200 = vmatpush1.msra.mxu0 %v78
    %201 = vmatprep.subr.mxu0 %v83
    %202 = vmatpush1.msra.mxu0 %v82
    %203 = vmatprep.subr.mxu0 %v87
    %204 = vmatpush1.msra.mxu0 %v86
    %205 = vmatprep.subr.mxu0 %v91
    %206 = vmatpush1.msra.mxu0 %v90
    %207 = vmatprep.subr.mxu0 %v95
    %208 = vmatpush1.msra.mxu0 %v94
    %209 = vmatprep.subr.mxu0 %v99
    %210 = vmatpush1.msra.mxu0 %v98
    %211 = vmatprep.subr.mxu0 %v103
    %212 = vmatpush1.msra.mxu0 %v102
    %213 = vmatprep.subr.mxu0 %v107
    %214 = vmatpush1.msra.mxu0 %v106
    %215 = vmatprep.subr.mxu0 %v111
    %216 = vmatpush1.msra.mxu0 %v110
    %217 = vmatprep.subr.mxu0 %v115
    %218 = vmatpush1.msra.mxu0 %v114
    %219 = vmatprep.subr.mxu0 0.0
    %220 = vmatpush1.msra.mxu0 0.0
    %221 = vmatprep.subr.mxu0 0.0
    %222 = vmatpush1.msra.mxu0 0.0
    %223 = vmatprep.subr.mxu0 0.0
    %224 = vmatpush1.msra.mxu0 0.0
    %225 = vmatprep.subr.mxu0 0.0
    %226 = vmatpush1.msra.mxu0 0.0
    %227 = vmatprep.subr.mxu0 0.0
    %228 = vmatpush1.msra.mxu0 0.0
    %229 = vmatprep.subr.mxu0 0.0
    %230 = vmatpush1.msra.mxu0 0.0
    %231 = vmatprep.subr.mxu0 0.0
    %232 = vmatpush1.msra.mxu0 0.0
    %233 = vmatprep.subr.mxu0 0.0
    %234 = vmatpush1.msra.mxu0 0.0
    %235 = vmatprep.subr.mxu0 0.0
    %236 = vmatpush1.msra.mxu0 0.0
    %237 = vmatprep.subr.mxu0 0.0
    %238 = vmatpush1.msra.mxu0 0.0
    %239 = vmatprep.subr.mxu0 0.0
    %240 = vmatpush1.msra.mxu0 0.0
    %241 = vmatprep.subr.mxu0 0.0
    %242 = vmatpush1.msra.mxu0 0.0
    %243 = vmatprep.subr.mxu0 0.0
    %244 = vmatpush1.msra.mxu0 0.0
    %245 = vmatprep.subr.mxu0 0.0
    %246 = vmatpush1.msra.mxu0 0.0
    %247 = vmatprep.subr.mxu0 0.0
    %248 = vmatpush1.msra.mxu0 0.0
    %249 = vmatprep.subr.mxu0 0.0
    %250 = vmatpush1.msra.mxu0 0.0
    %251 = vmatprep.mubr.f32.mxu0 0.0
    %252 = vmatmul.mubr.f32.gmra.mrb[0].mxu0 %v46
    %v253 = vpop.f32.mrb[0].mxu0
    %v254 = vadd.f32 0.0, %v253
    %v255 = vpop.f32.mrb[0].mxu0
    %v256 = vadd.f32 0.0, %v255
    %257 = vdwg.mxu0
    %v258 = vadd.f32 %v48, %v183
    %v259 = vadd.f32 %v49, %v185
    %v260 = vadd.f32 %v50, %v254
    %v261 = vadd.f32 %v51, %v256
    %v262 = vxor.u32 %v258, 2147483648
    %v263 = vxor.u32 %v259, 2147483648
    %v264 = vxor.u32 %v260, 2147483648
    %v265 = vmul.f32 %v262, 1.442695
    %v266 = vpow.pop %v265
    %v267 = vmul.f32 %v263, 1.442695
    %v268 = vpow.pop %v267
    %v269 = vmul.f32 %v264, 1.442695
    %v270 = vpow.pop %v269
    %v271 = vadd.f32 %v266, 1.0
    %v272 = vadd.f32 %v268, 1.0
    %v273 = vadd.f32 %v270, 1.0
    %v274 = vrcp.pop %v271
    %v275 = vmul.f32 1.0, %v274
    %v276 = vrcp.pop %v272
    %v277 = vmul.f32 1.0, %v276
    %v278 = vrcp.pop %v273
    %v279 = vmul.f32 1.0, %v278
    %v280 = vtanh.pop %v261
    %v281 = vmul.f32 %v277, %v47
    %v282 = vmul.f32 %v275, %v280
    %v283 = vadd.f32 %v281, %v282
    %v284 = vtanh.pop %v283
    %v285 = vmul.f32 %v279, %v284
    %286 = vst [vmem:[#allocation9] sm:$0xff] %v285
    %s287 = scalar_lea.vmem [#allocation4], 32
    %v288 = vld [vmem:[%s287] sm:$0xff]
    %v289 = vld [vmem:[%s287 + $0x8] sm:$0xff]
    %v290 = vld [vmem:[%s287 + $0x10] sm:$0xff]
    %v291 = vld [vmem:[%s287 + $0x18] sm:$0xff]
    %v292 = vld [vmem:[#allocation7] sm:$0xff]
    %v293 = vld [vmem:[#allocation7 + $0x8] sm:$0xff]
    %v294 = vld [vmem:[#allocation7 + $0x10] sm:$0xff]
    %v295 = vld [vmem:[#allocation7 + $0x18] sm:$0xff]
    %v296 = vld [vmem:[#allocation7 + $0x20] sm:$0xff]
    %v297 = vld [vmem:[#allocation7 + $0x28] sm:$0xff]
    %v298 = vld [vmem:[#allocation7 + $0x30] sm:$0xff]
    %v299 = vld [vmem:[#allocation7 + $0x38] sm:$0xff]
    %v300 = vld [vmem:[#allocation7 + $0x40] sm:$0xff]
    %v301 = vld [vmem:[#allocation7 + $0x48] sm:$0xff]
    %v302 = vld [vmem:[#allocation7 + $0x50] sm:$0xff]
    %v303 = vld [vmem:[#allocation7 + $0x58] sm:$0xff]
    %v304 = vld [vmem:[#allocation7 + $0x60] sm:$0xff]
    %v305 = vld [vmem:[#allocation7 + $0x68] sm:$0xff]
    %v306 = vld [vmem:[#allocation7 + $0x70] sm:$0xff]
    %v307 = vld [vmem:[#allocation7 + $0x78] sm:$0xff]
    %v308 = vld [vmem:[#allocation7 + $0x80] sm:$0xff]
    %v309 = vld [vmem:[#allocation7 + $0x88] sm:$0xff]
    %v310 = vld [vmem:[#allocation7 + $0x90] sm:$0xff]
    %v311 = vld [vmem:[#allocation7 + $0x98] sm:$0xff]
    %v312 = vld [vmem:[#allocation7 + $0xa0] sm:$0xff]
    %v313 = vld [vmem:[#allocation7 + $0xa8] sm:$0xff]
    %v314 = vld [vmem:[#allocation7 + $0xb0] sm:$0xff]
    %v315 = vld [vmem:[#allocation7 + $0xb8] sm:$0xff]
    %v316 = vld [vmem:[#allocation7 + $0xc0] sm:$0xff]
    %v317 = vld [vmem:[#allocation7 + $0xc8] sm:$0xff]
    %v318 = vld [vmem:[#allocation7 + $0xd0] sm:$0xff]
    %v319 = vld [vmem:[#allocation7 + $0xd8] sm:$0xff]
    %v320 = vld [vmem:[#allocation7 + $0xe0] sm:$0xff]
    %v321 = vld [vmem:[#allocation7 + $0xe8] sm:$0xff]
    %v322 = vld [vmem:[#allocation7 + $0xf0] sm:$0xff]
    %v323 = vld [vmem:[#allocation7 + $0xf8] sm:$0xff]
    %v324 = vld [vmem:[#allocation7 + $0x100] sm:$0xff]
    %v325 = vld [vmem:[#allocation7 + $0x108] sm:$0xff]
    %v326 = vld [vmem:[#allocation7 + $0x110] sm:$0xff]
    %v327 = vld [vmem:[#allocation7 + $0x118] sm:$0xff]
    %v328 = vld [vmem:[#allocation7 + $0x120] sm:$0xff]
    %v329 = vld [vmem:[#allocation7 + $0x128] sm:$0xff]
    %v330 = vld [vmem:[#allocation7 + $0x130] sm:$0xff]
    %v331 = vld [vmem:[#allocation7 + $0x138] sm:$0xff]
    %v332 = vld [vmem:[#allocation7 + $0x140] sm:$0xff]
    %v333 = vld [vmem:[#allocation7 + $0x148] sm:$0xff]
    %v334 = vld [vmem:[#allocation7 + $0x150] sm:$0xff]
    %v335 = vld [vmem:[#allocation7 + $0x158] sm:$0xff]
    %v336 = vld [vmem:[#allocation7 + $0x160] sm:$0xff]
    %v337 = vld [vmem:[#allocation7 + $0x168] sm:$0xff]
    %v338 = vld [vmem:[#allocation7 + $0x170] sm:$0xff]
    %v339 = vld [vmem:[#allocation7 + $0x178] sm:$0xff]
    %v340 = vld [vmem:[#allocation7 + $0x180] sm:$0xff]
    %v341 = vld [vmem:[#allocation7 + $0x188] sm:$0xff]
    %v342 = vld [vmem:[#allocation7 + $0x190] sm:$0xff]
    %v343 = vld [vmem:[#allocation7 + $0x198] sm:$0xff]
    %v344 = vld [vmem:[#allocation7 + $0x1a0] sm:$0xff]
    %v345 = vld [vmem:[#allocation7 + $0x1a8] sm:$0xff]
    %v346 = vld [vmem:[#allocation7 + $0x1b0] sm:$0xff]
    %v347 = vld [vmem:[#allocation7 + $0x1b8] sm:$0xff]
    %v348 = vld [vmem:[#allocation7 + $0x1c0] sm:$0xff]
    %v349 = vld [vmem:[#allocation7 + $0x1c8] sm:$0xff]
    %v350 = vld [vmem:[#allocation7 + $0x1d0] sm:$0xff]
    %v351 = vld [vmem:[#allocation7 + $0x1d8] sm:$0xff]
    %v352 = vld [vmem:[#allocation7 + $0x1e0] sm:$0xff]
    %v353 = vld [vmem:[#allocation7 + $0x1e8] sm:$0xff]
    %v354 = vld [vmem:[#allocation7 + $0x1f0] sm:$0xff]
    %v355 = vld [vmem:[#allocation7 + $0x1f8] sm:$0xff]
    %356 = vmatprep.subr.mxu0 %v293
    %357 = vmatpush1.msra.mxu0 %v292
    %358 = vmatprep.subr.mxu0 %v297
    %359 = vmatpush1.msra.mxu0 %v296
    %360 = vmatprep.subr.mxu0 %v301
    %361 = vmatpush1.msra.mxu0 %v300
    %362 = vmatprep.subr.mxu0 %v305
    %363 = vmatpush1.msra.mxu0 %v304
    %364 = vmatprep.subr.mxu0 %v309
    %365 = vmatpush1.msra.mxu0 %v308
    %366 = vmatprep.subr.mxu0 %v313
    %367 = vmatpush1.msra.mxu0 %v312
    %368 = vmatprep.subr.mxu0 %v317
    %369 = vmatpush1.msra.mxu0 %v316
    %370 = vmatprep.subr.mxu0 %v321
    %371 = vmatpush1.msra.mxu0 %v320
    %372 = vmatprep.subr.mxu0 %v325
    %373 = vmatpush1.msra.mxu0 %v324
    %374 = vmatprep.subr.mxu0 %v329
    %375 = vmatpush1.msra.mxu0 %v328
    %376 = vmatprep.subr.mxu0 %v333
    %377 = vmatpush1.msra.mxu0 %v332
    %378 = vmatprep.subr.mxu0 %v337
    %379 = vmatpush1.msra.mxu0 %v336
    %380 = vmatprep.subr.mxu0 %v341
    %381 = vmatpush1.msra.mxu0 %v340
    %382 = vmatprep.subr.mxu0 %v345
    %383 = vmatpush1.msra.mxu0 %v344
    %384 = vmatprep.subr.mxu0 %v349
    %385 = vmatpush1.msra.mxu0 %v348
    %386 = vmatprep.subr.mxu0 %v353
    %387 = vmatpush1.msra.mxu0 %v352
    %388 = vmatprep.subr.mxu0 0.0
    %389 = vmatpush1.msra.mxu0 0.0
    %390 = vmatprep.subr.mxu0 0.0
    %391 = vmatpush1.msra.mxu0 0.0
    %392 = vmatprep.subr.mxu0 0.0
    %393 = vmatpush1.msra.mxu0 0.0
    %394 = vmatprep.subr.mxu0 0.0
    %395 = vmatpush1.msra.mxu0 0.0
    %396 = vmatprep.subr.mxu0 0.0
    %397 = vmatpush1.msra.mxu0 0.0
    %398 = vmatprep.subr.mxu0 0.0
    %399 = vmatpush1.msra.mxu0 0.0
    %400 = vmatprep.subr.mxu0 0.0
    %401 = vmatpush1.msra.mxu0 0.0
    %402 = vmatprep.subr.mxu0 0.0
    %403 = vmatpush1.msra.mxu0 0.0
    %404 = vmatprep.subr.mxu0 0.0
    %405 = vmatpush1.msra.mxu0 0.0
    %406 = vmatprep.subr.mxu0 0.0
    %407 = vmatpush1.msra.mxu0 0.0
    %408 = vmatprep.subr.mxu0 0.0
    %409 = vmatpush1.msra.mxu0 0.0
    %410 = vmatprep.subr.mxu0 0.0
    %411 = vmatpush1.msra.mxu0 0.0
    %412 = vmatprep.subr.mxu0 0.0
    %413 = vmatpush1.msra.mxu0 0.0
    %414 = vmatprep.subr.mxu0 0.0
    %415 = vmatpush1.msra.mxu0 0.0
    %416 = vmatprep.subr.mxu0 0.0
    %417 = vmatpush1.msra.mxu0 0.0
    %418 = vmatprep.subr.mxu0 0.0
    %419 = vmatpush1.msra.mxu0 0.0
    %420 = vmatprep.mubr.f32.mxu0 0.0
    %421 = vmatmul.mubr.f32.gmra.mrb[0].mxu0 %v285
    %v422 = vpop.f32.mrb[0].mxu0
    %v423 = vadd.f32 0.0, %v422
    %v424 = vpop.f32.mrb[0].mxu0
    %v425 = vadd.f32 0.0, %v424
    %426 = vdwg.mxu0
    %427 = vmatprep.subr.mxu0 %v295
    %428 = vmatpush1.msra.mxu0 %v294
    %429 = vmatprep.subr.mxu0 %v299
    %430 = vmatpush1.msra.mxu0 %v298
    %431 = vmatprep.subr.mxu0 %v303
    %432 = vmatpush1.msra.mxu0 %v302
    %433 = vmatprep.subr.mxu0 %v307
    %434 = vmatpush1.msra.mxu0 %v306
    %435 = vmatprep.subr.mxu0 %v311
    %436 = vmatpush1.msra.mxu0 %v310
    %437 = vmatprep.subr.mxu0 %v315
    %438 = vmatpush1.msra.mxu0 %v314
    %439 = vmatprep.subr.mxu0 %v319
    %440 = vmatpush1.msra.mxu0 %v318
    %441 = vmatprep.subr.mxu0 %v323
    %442 = vmatpush1.msra.mxu0 %v322
    %443 = vmatprep.subr.mxu0 %v327
    %444 = vmatpush1.msra.mxu0 %v326
    %445 = vmatprep.subr.mxu0 %v331
    %446 = vmatpush1.msra.mxu0 %v330
    %447 = vmatprep.subr.mxu0 %v335
    %448 = vmatpush1.msra.mxu0 %v334
    %449 = vmatprep.subr.mxu0 %v339
    %450 = vmatpush1.msra.mxu0 %v338
    %451 = vmatprep.subr.mxu0 %v343
    %452 = vmatpush1.msra.mxu0 %v342
    %453 = vmatprep.subr.mxu0 %v347
    %454 = vmatpush1.msra.mxu0 %v346
    %455 = vmatprep.subr.mxu0 %v351
    %456 = vmatpush1.msra.mxu0 %v350
    %457 = vmatprep.subr.mxu0 %v355
    %458 = vmatpush1.msra.mxu0 %v354
    %459 = vmatprep.subr.mxu0 0.0
    %460 = vmatpush1.msra.mxu0 0.0
    %461 = vmatprep.subr.mxu0 0.0
    %462 = vmatpush1.msra.mxu0 0.0
    %463 = vmatprep.subr.mxu0 0.0
    %464 = vmatpush1.msra.mxu0 0.0
    %465 = vmatprep.subr.mxu0 0.0
    %466 = vmatpush1.msra.mxu0 0.0
    %467 = vmatprep.subr.mxu0 0.0
    %468 = vmatpush1.msra.mxu0 0.0
    %469 = vmatprep.subr.mxu0 0.0
    %470 = vmatpush1.msra.mxu0 0.0
    %471 = vmatprep.subr.mxu0 0.0
    %472 = vmatpush1.msra.mxu0 0.0
    %473 = vmatprep.subr.mxu0 0.0
    %474 = vmatpush1.msra.mxu0 0.0
    %475 = vmatprep.subr.mxu0 0.0
    %476 = vmatpush1.msra.mxu0 0.0
    %477 = vmatprep.subr.mxu0 0.0
    %478 = vmatpush1.msra.mxu0 0.0
    %479 = vmatprep.subr.mxu0 0.0
    %480 = vmatpush1.msra.mxu0 0.0
    %481 = vmatprep.subr.mxu0 0.0
    %482 = vmatpush1.msra.mxu0 0.0
    %483 = vmatprep.subr.mxu0 0.0
    %484 = vmatpush1.msra.mxu0 0.0
    %485 = vmatprep.subr.mxu0 0.0
    %486 = vmatpush1.msra.mxu0 0.0
    %487 = vmatprep.subr.mxu0 0.0
    %488 = vmatpush1.msra.mxu0 0.0
    %489 = vmatprep.subr.mxu0 0.0
    %490 = vmatpush1.msra.mxu0 0.0
    %491 = vmatprep.mubr.f32.mxu0 0.0
    %492 = vmatmul.mubr.f32.gmra.mrb[0].mxu0 %v285
    %v493 = vpop.f32.mrb[0].mxu0
    %v494 = vadd.f32 0.0, %v493
    %v495 = vpop.f32.mrb[0].mxu0
    %v496 = vadd.f32 0.0, %v495
    %497 = vdwg.mxu0
    %v498 = vadd.f32 %v288, %v423
    %v499 = vadd.f32 %v289, %v425
    %v500 = vadd.f32 %v290, %v494
    %v501 = vadd.f32 %v291, %v496
    %v502 = vxor.u32 %v498, 2147483648
    %v503 = vxor.u32 %v499, 2147483648
    %v504 = vxor.u32 %v500, 2147483648
    %v505 = vmul.f32 %v502, 1.442695
    %v506 = vpow.pop %v505
    %v507 = vmul.f32 %v503, 1.442695
    %v508 = vpow.pop %v507
    %v509 = vmul.f32 %v504, 1.442695
    %v510 = vpow.pop %v509
    %v511 = vadd.f32 %v506, 1.0
    %v512 = vadd.f32 %v508, 1.0
    %v513 = vadd.f32 %v510, 1.0
    %v514 = vrcp.pop %v511
    %v515 = vmul.f32 1.0, %v514
    %v516 = vrcp.pop %v512
    %v517 = vmul.f32 1.0, %v516
    %v518 = vrcp.pop %v513
    %v519 = vmul.f32 1.0, %v518
    %v520 = vtanh.pop %v501
    %v521 = vmul.f32 %v517, %v283
    %v522 = vmul.f32 %v515, %v520
    %v523 = vadd.f32 %v521, %v522
    %v524 = vtanh.pop %v523
    %v525 = vmul.f32 %v519, %v524
    %s526 = scalar_lea.vmem [#allocation9], 8
    %527 = vst [vmem:[%s526] sm:$0xff] %v525
    %s528 = scalar_lea.vmem [#allocation4], 64
    %v529 = vld [vmem:[%s528] sm:$0xff]
    %v530 = vld [vmem:[%s528 + $0x8] sm:$0xff]
    %v531 = vld [vmem:[%s528 + $0x10] sm:$0xff]
    %v532 = vld [vmem:[%s528 + $0x18] sm:$0xff]
    %v533 = vld [vmem:[#allocation7] sm:$0xff]
    %v534 = vld [vmem:[#allocation7 + $0x8] sm:$0xff]
    %v535 = vld [vmem:[#allocation7 + $0x10] sm:$0xff]
    %v536 = vld [vmem:[#allocation7 + $0x18] sm:$0xff]
    %v537 = vld [vmem:[#allocation7 + $0x20] sm:$0xff]
    %v538 = vld [vmem:[#allocation7 + $0x28] sm:$0xff]
    %v539 = vld [vmem:[#allocation7 + $0x30] sm:$0xff]
    %v540 = vld [vmem:[#allocation7 + $0x38] sm:$0xff]
    %v541 = vld [vmem:[#allocation7 + $0x40] sm:$0xff]
    %v542 = vld [vmem:[#allocation7 + $0x48] sm:$0xff]
    %v543 = vld [vmem:[#allocation7 + $0x50] sm:$0xff]
    %v544 = vld [vmem:[#allocation7 + $0x58] sm:$0xff]
    %v545 = vld [vmem:[#allocation7 + $0x60] sm:$0xff]
    %v546 = vld [vmem:[#allocation7 + $0x68] sm:$0xff]
    %v547 = vld [vmem:[#allocation7 + $0x70] sm:$0xff]
    %v548 = vld [vmem:[#allocation7 + $0x78] sm:$0xff]
    %v549 = vld [vmem:[#allocation7 + $0x80] sm:$0xff]
    %v550 = vld [vmem:[#allocation7 + $0x88] sm:$0xff]
    %v551 = vld [vmem:[#allocation7 + $0x90] sm:$0xff]
    %v552 = vld [vmem:[#allocation7 + $0x98] sm:$0xff]
    %v553 = vld [vmem:[#allocation7 + $0xa0] sm:$0xff]
    %v554 = vld [vmem:[#allocation7 + $0xa8] sm:$0xff]
    %v555 = vld [vmem:[#allocation7 + $0xb0] sm:$0xff]
    %v556 = vld [vmem:[#allocation7 + $0xb8] sm:$0xff]
    %v557 = vld [vmem:[#allocation7 + $0xc0] sm:$0xff]
    %v558 = vld [vmem:[#allocation7 + $0xc8] sm:$0xff]
    %v559 = vld [vmem:[#allocation7 + $0xd0] sm:$0xff]
    %v560 = vld [vmem:[#allocation7 + $0xd8] sm:$0xff]
    %v561 = vld [vmem:[#allocation7 + $0xe0] sm:$0xff]
    %v562 = vld [vmem:[#allocation7 + $0xe8] sm:$0xff]
    %v563 = vld [vmem:[#allocation7 + $0xf0] sm:$0xff]
    %v564 = vld [vmem:[#allocation7 + $0xf8] sm:$0xff]
    %v565 = vld [vmem:[#allocation7 + $0x100] sm:$0xff]
    %v566 = vld [vmem:[#allocation7 + $0x108] sm:$0xff]
    %v567 = vld [vmem:[#allocation7 + $0x110] sm:$0xff]
    %v568 = vld [vmem:[#allocation7 + $0x118] sm:$0xff]
    %v569 = vld [vmem:[#allocation7 + $0x120] sm:$0xff]
    %v570 = vld [vmem:[#allocation7 + $0x128] sm:$0xff]
    %v571 = vld [vmem:[#allocation7 + $0x130] sm:$0xff]
    %v572 = vld [vmem:[#allocation7 + $0x138] sm:$0xff]
    %v573 = vld [vmem:[#allocation7 + $0x140] sm:$0xff]
    %v574 = vld [vmem:[#allocation7 + $0x148] sm:$0xff]
    %v575 = vld [vmem:[#allocation7 + $0x150] sm:$0xff]
    %v576 = vld [vmem:[#allocation7 + $0x158] sm:$0xff]
    %v577 = vld [vmem:[#allocation7 + $0x160] sm:$0xff]
    %v578 = vld [vmem:[#allocation7 + $0x168] sm:$0xff]
    %v579 = vld [vmem:[#allocation7 + $0x170] sm:$0xff]
    %v580 = vld [vmem:[#allocation7 + $0x178] sm:$0xff]
    %v581 = vld [vmem:[#allocation7 + $0x180] sm:$0xff]
    %v582 = vld [vmem:[#allocation7 + $0x188] sm:$0xff]
    %v583 = vld [vmem:[#allocation7 + $0x190] sm:$0xff]
    %v584 = vld [vmem:[#allocation7 + $0x198] sm:$0xff]
    %v585 = vld [vmem:[#allocation7 + $0x1a0] sm:$0xff]
    %v586 = vld [vmem:[#allocation7 + $0x1a8] sm:$0xff]
    %v587 = vld [vmem:[#allocation7 + $0x1b0] sm:$0xff]
    %v588 = vld [vmem:[#allocation7 + $0x1b8] sm:$0xff]
    %v589 = vld [vmem:[#allocation7 + $0x1c0] sm:$0xff]
    %v590 = vld [vmem:[#allocation7 + $0x1c8] sm:$0xff]
    %v591 = vld [vmem:[#allocation7 + $0x1d0] sm:$0xff]
    %v592 = vld [vmem:[#allocation7 + $0x1d8] sm:$0xff]
    %v593 = vld [vmem:[#allocation7 + $0x1e0] sm:$0xff]
    %v594 = vld [vmem:[#allocation7 + $0x1e8] sm:$0xff]
    %v595 = vld [vmem:[#allocation7 + $0x1f0] sm:$0xff]
    %v596 = vld [vmem:[#allocation7 + $0x1f8] sm:$0xff]
    %597 = vmatprep.subr.mxu0 %v534
    %598 = vmatpush1.msra.mxu0 %v533
    %599 = vmatprep.subr.mxu0 %v538
    %600 = vmatpush1.msra.mxu0 %v537
    %601 = vmatprep.subr.mxu0 %v542
    %602 = vmatpush1.msra.mxu0 %v541
    %603 = vmatprep.subr.mxu0 %v546
    %604 = vmatpush1.msra.mxu0 %v545
    %605 = vmatprep.subr.mxu0 %v550
    %606 = vmatpush1.msra.mxu0 %v549
    %607 = vmatprep.subr.mxu0 %v554
    %608 = vmatpush1.msra.mxu0 %v553
    %609 = vmatprep.subr.mxu0 %v558
    %610 = vmatpush1.msra.mxu0 %v557
    %611 = vmatprep.subr.mxu0 %v562
    %612 = vmatpush1.msra.mxu0 %v561
    %613 = vmatprep.subr.mxu0 %v566
    %614 = vmatpush1.msra.mxu0 %v565
    %615 = vmatprep.subr.mxu0 %v570
    %616 = vmatpush1.msra.mxu0 %v569
    %617 = vmatprep.subr.mxu0 %v574
    %618 = vmatpush1.msra.mxu0 %v573
    %619 = vmatprep.subr.mxu0 %v578
    %620 = vmatpush1.msra.mxu0 %v577
    %621 = vmatprep.subr.mxu0 %v582
    %622 = vmatpush1.msra.mxu0 %v581
    %623 = vmatprep.subr.mxu0 %v586
    %624 = vmatpush1.msra.mxu0 %v585
    %625 = vmatprep.subr.mxu0 %v590
    %626 = vmatpush1.msra.mxu0 %v589
    %627 = vmatprep.subr.mxu0 %v594
    %628 = vmatpush1.msra.mxu0 %v593
    %629 = vmatprep.subr.mxu0 0.0
    %630 = vmatpush1.msra.mxu0 0.0
    %631 = vmatprep.subr.mxu0 0.0
    %632 = vmatpush1.msra.mxu0 0.0
    %633 = vmatprep.subr.mxu0 0.0
    %634 = vmatpush1.msra.mxu0 0.0
    %635 = vmatprep.subr.mxu0 0.0
    %636 = vmatpush1.msra.mxu0 0.0
    %637 = vmatprep.subr.mxu0 0.0
    %638 = vmatpush1.msra.mxu0 0.0
    %639 = vmatprep.subr.mxu0 0.0
    %640 = vmatpush1.msra.mxu0 0.0
    %641 = vmatprep.subr.mxu0 0.0
    %642 = vmatpush1.msra.mxu0 0.0
    %643 = vmatprep.subr.mxu0 0.0
    %644 = vmatpush1.msra.mxu0 0.0
    %645 = vmatprep.subr.mxu0 0.0
    %646 = vmatpush1.msra.mxu0 0.0
    %647 = vmatprep.subr.mxu0 0.0
    %648 = vmatpush1.msra.mxu0 0.0
    %649 = vmatprep.subr.mxu0 0.0
    %650 = vmatpush1.msra.mxu0 0.0
    %651 = vmatprep.subr.mxu0 0.0
    %652 = vmatpush1.msra.mxu0 0.0
    %653 = vmatprep.subr.mxu0 0.0
    %654 = vmatpush1.msra.mxu0 0.0
    %655 = vmatprep.subr.mxu0 0.0
    %656 = vmatpush1.msra.mxu0 0.0
    %657 = vmatprep.subr.mxu0 0.0
    %658 = vmatpush1.msra.mxu0 0.0
    %659 = vmatprep.subr.mxu0 0.0
    %660 = vmatpush1.msra.mxu0 0.0
    %661 = vmatprep.mubr.f32.mxu0 0.0
    %662 = vmatmul.mubr.f32.gmra.mrb[0].mxu0 %v525
    %v663 = vpop.f32.mrb[0].mxu0
    %v664 = vadd.f32 0.0, %v663
    %v665 = vpop.f32.mrb[0].mxu0
    %v666 = vadd.f32 0.0, %v665
    %667 = vdwg.mxu0
    %668 = vmatprep.subr.mxu0 %v536
    %669 = vmatpush1.msra.mxu0 %v535
    %670 = vmatprep.subr.mxu0 %v540
    %671 = vmatpush1.msra.mxu0 %v539
    %672 = vmatprep.subr.mxu0 %v544
    %673 = vmatpush1.msra.mxu0 %v543
    %674 = vmatprep.subr.mxu0 %v548
    %675 = vmatpush1.msra.mxu0 %v547
    %676 = vmatprep.subr.mxu0 %v552
    %677 = vmatpush1.msra.mxu0 %v551
    %678 = vmatprep.subr.mxu0 %v556
    %679 = vmatpush1.msra.mxu0 %v555
    %680 = vmatprep.subr.mxu0 %v560
    %681 = vmatpush1.msra.mxu0 %v559
    %682 = vmatprep.subr.mxu0 %v564
    %683 = vmatpush1.msra.mxu0 %v563
    %684 = vmatprep.subr.mxu0 %v568
    %685 = vmatpush1.msra.mxu0 %v567
    %686 = vmatprep.subr.mxu0 %v572
    %687 = vmatpush1.msra.mxu0 %v571
    %688 = vmatprep.subr.mxu0 %v576
    %689 = vmatpush1.msra.mxu0 %v575
    %690 = vmatprep.subr.mxu0 %v580
    %691 = vmatpush1.msra.mxu0 %v579
    %692 = vmatprep.subr.mxu0 %v584
    %693 = vmatpush1.msra.mxu0 %v583
    %694 = vmatprep.subr.mxu0 %v588
    %695 = vmatpush1.msra.mxu0 %v587
    %696 = vmatprep.subr.mxu0 %v592
    %697 = vmatpush1.msra.mxu0 %v591
    %698 = vmatprep.subr.mxu0 %v596
    %699 = vmatpush1.msra.mxu0 %v595
    %700 = vmatprep.subr.mxu0 0.0
    %701 = vmatpush1.msra.mxu0 0.0
    %702 = vmatprep.subr.mxu0 0.0
    %703 = vmatpush1.msra.mxu0 0.0
    %704 = vmatprep.subr.mxu0 0.0
    %705 = vmatpush1.msra.mxu0 0.0
    %706 = vmatprep.subr.mxu0 0.0
    %707 = vmatpush1.msra.mxu0 0.0
    %708 = vmatprep.subr.mxu0 0.0
    %709 = vmatpush1.msra.mxu0 0.0
    %710 = vmatprep.subr.mxu0 0.0
    %711 = vmatpush1.msra.mxu0 0.0
    %712 = vmatprep.subr.mxu0 0.0
    %713 = vmatpush1.msra.mxu0 0.0
    %714 = vmatprep.subr.mxu0 0.0
    %715 = vmatpush1.msra.mxu0 0.0
    %716 = vmatprep.subr.mxu0 0.0
    %717 = vmatpush1.msra.mxu0 0.0
    %718 = vmatprep.subr.mxu0 0.0
    %719 = vmatpush1.msra.mxu0 0.0
    %720 = vmatprep.subr.mxu0 0.0
    %721 = vmatpush1.msra.mxu0 0.0
    %722 = vmatprep.subr.mxu0 0.0
    %723 = vmatpush1.msra.mxu0 0.0
    %724 = vmatprep.subr.mxu0 0.0
    %725 = vmatpush1.msra.mxu0 0.0
    %726 = vmatprep.subr.mxu0 0.0
    %727 = vmatpush1.msra.mxu0 0.0
    %728 = vmatprep.subr.mxu0 0.0
    %729 = vmatpush1.msra.mxu0 0.0
    %730 = vmatprep.subr.mxu0 0.0
    %731 = vmatpush1.msra.mxu0 0.0
    %732 = vmatprep.mubr.f32.mxu0 0.0
    %733 = vmatmul.mubr.f32.gmra.mrb[0].mxu0 %v525
    %v734 = vpop.f32.mrb[0].mxu0
    %v735 = vadd.f32 0.0, %v734
    %v736 = vpop.f32.mrb[0].mxu0
    %v737 = vadd.f32 0.0, %v736
    %738 = vdwg.mxu0
    %v739 = vadd.f32 %v529, %v664
    %v740 = vadd.f32 %v530, %v666
    %v741 = vadd.f32 %v531, %v735
    %v742 = vadd.f32 %v532, %v737
    %v743 = vxor.u32 %v739, 2147483648
    %v744 = vxor.u32 %v740, 2147483648
    %v745 = vxor.u32 %v741, 2147483648
    %v746 = vmul.f32 %v743, 1.442695
    %v747 = vpow.pop %v746
    %v748 = vmul.f32 %v744, 1.442695
    %v749 = vpow.pop %v748
    %v750 = vmul.f32 %v745, 1.442695
    %v751 = vpow.pop %v750
    %v752 = vadd.f32 %v747, 1.0
    %v753 = vadd.f32 %v749, 1.0
    %v754 = vadd.f32 %v751, 1.0
    %v755 = vrcp.pop %v752
    %v756 = vmul.f32 1.0, %v755
    %v757 = vrcp.pop %v753
    %v758 = vmul.f32 1.0, %v757
    %v759 = vrcp.pop %v754
    %v760 = vmul.f32 1.0, %v759
    %v761 = vtanh.pop %v742
    %v762 = vmul.f32 %v758, %v523
    %v763 = vmul.f32 %v756, %v761
    %v764 = vadd.f32 %v762, %v763
    %v765 = vtanh.pop %v764
    %v766 = vmul.f32 %v760, %v765
    %s767 = scalar_lea.vmem [#allocation9], 16
    %768 = vst [vmem:[%s767] sm:$0xff] %v766
    %s769 = scalar_lea.vmem [#allocation4], 96
    %v770 = vld [vmem:[%s769] sm:$0xff]
    %v771 = vld [vmem:[%s769 + $0x8] sm:$0xff]
    %v772 = vld [vmem:[%s769 + $0x10] sm:$0xff]
    %v773 = vld [vmem:[%s769 + $0x18] sm:$0xff]
    %v774 = vld [vmem:[#allocation7] sm:$0xff]
    %v775 = vld [vmem:[#allocation7 + $0x8] sm:$0xff]
    %v776 = vld [vmem:[#allocation7 + $0x10] sm:$0xff]
    %v777 = vld [vmem:[#allocation7 + $0x18] sm:$0xff]
    %v778 = vld [vmem:[#allocation7 + $0x20] sm:$0xff]
    %v779 = vld [vmem:[#allocation7 + $0x28] sm:$0xff]
    %v780 = vld [vmem:[#allocation7 + $0x30] sm:$0xff]
    %v781 = vld [vmem:[#allocation7 + $0x38] sm:$0xff]
    %v782 = vld [vmem:[#allocation7 + $0x40] sm:$0xff]
    %v783 = vld [vmem:[#allocation7 + $0x48] sm:$0xff]
    %v784 = vld [vmem:[#allocation7 + $0x50] sm:$0xff]
    %v785 = vld [vmem:[#allocation7 + $0x58] sm:$0xff]
    %v786 = vld [vmem:[#allocation7 + $0x60] sm:$0xff]
    %v787 = vld [vmem:[#allocation7 + $0x68] sm:$0xff]
    %v788 = vld [vmem:[#allocation7 + $0x70] sm:$0xff]
    %v789 = vld [vmem:[#allocation7 + $0x78] sm:$0xff]
    %v790 = vld [vmem:[#allocation7 + $0x80] sm:$0xff]
    %v791 = vld [vmem:[#allocation7 + $0x88] sm:$0xff]
    %v792 = vld [vmem:[#allocation7 + $0x90] sm:$0xff]
    %v793 = vld [vmem:[#allocation7 + $0x98] sm:$0xff]
    %v794 = vld [vmem:[#allocation7 + $0xa0] sm:$0xff]
    %v795 = vld [vmem:[#allocation7 + $0xa8] sm:$0xff]
    %v796 = vld [vmem:[#allocation7 + $0xb0] sm:$0xff]
    %v797 = vld [vmem:[#allocation7 + $0xb8] sm:$0xff]
    %v798 = vld [vmem:[#allocation7 + $0xc0] sm:$0xff]
    %v799 = vld [vmem:[#allocation7 + $0xc8] sm:$0xff]
    %v800 = vld [vmem:[#allocation7 + $0xd0] sm:$0xff]
    %v801 = vld [vmem:[#allocation7 + $0xd8] sm:$0xff]
    %v802 = vld [vmem:[#allocation7 + $0xe0] sm:$0xff]
    %v803 = vld [vmem:[#allocation7 + $0xe8] sm:$0xff]
    %v804 = vld [vmem:[#allocation7 + $0xf0] sm:$0xff]
    %v805 = vld [vmem:[#allocation7 + $0xf8] sm:$0xff]
    %v806 = vld [vmem:[#allocation7 + $0x100] sm:$0xff]
    %v807 = vld [vmem:[#allocation7 + $0x108] sm:$0xff]
    %v808 = vld [vmem:[#allocation7 + $0x110] sm:$0xff]
    %v809 = vld [vmem:[#allocation7 + $0x118] sm:$0xff]
    %v810 = vld [vmem:[#allocation7 + $0x120] sm:$0xff]
    %v811 = vld [vmem:[#allocation7 + $0x128] sm:$0xff]
    %v812 = vld [vmem:[#allocation7 + $0x130] sm:$0xff]
    %v813 = vld [vmem:[#allocation7 + $0x138] sm:$0xff]
    %v814 = vld [vmem:[#allocation7 + $0x140] sm:$0xff]
    %v815 = vld [vmem:[#allocation7 + $0x148] sm:$0xff]
    %v816 = vld [vmem:[#allocation7 + $0x150] sm:$0xff]
    %v817 = vld [vmem:[#allocation7 + $0x158] sm:$0xff]
    %v818 = vld [vmem:[#allocation7 + $0x160] sm:$0xff]
    %v819 = vld [vmem:[#allocation7 + $0x168] sm:$0xff]
    %v820 = vld [vmem:[#allocation7 + $0x170] sm:$0xff]
    %v821 = vld [vmem:[#allocation7 + $0x178] sm:$0xff]
    %v822 = vld [vmem:[#allocation7 + $0x180] sm:$0xff]
    %v823 = vld [vmem:[#allocation7 + $0x188] sm:$0xff]
    %v824 = vld [vmem:[#allocation7 + $0x190] sm:$0xff]
    %v825 = vld [vmem:[#allocation7 + $0x198] sm:$0xff]
    %v826 = vld [vmem:[#allocation7 + $0x1a0] sm:$0xff]
    %v827 = vld [vmem:[#allocation7 + $0x1a8] sm:$0xff]
    %v828 = vld [vmem:[#allocation7 + $0x1b0] sm:$0xff]
    %v829 = vld [vmem:[#allocation7 + $0x1b8] sm:$0xff]
    %v830 = vld [vmem:[#allocation7 + $0x1c0] sm:$0xff]
    %v831 = vld [vmem:[#allocation7 + $0x1c8] sm:$0xff]
    %v832 = vld [vmem:[#allocation7 + $0x1d0] sm:$0xff]
    %v833 = vld [vmem:[#allocation7 + $0x1d8] sm:$0xff]
    %v834 = vld [vmem:[#allocation7 + $0x1e0] sm:$0xff]
    %v835 = vld [vmem:[#allocation7 + $0x1e8] sm:$0xff]
    %v836 = vld [vmem:[#allocation7 + $0x1f0] sm:$0xff]
    %v837 = vld [vmem:[#allocation7 + $0x1f8] sm:$0xff]
    %838 = vmatprep.subr.mxu0 %v775
    %839 = vmatpush1.msra.mxu0 %v774
    %840 = vmatprep.subr.mxu0 %v779
    %841 = vmatpush1.msra.mxu0 %v778
    %842 = vmatprep.subr.mxu0 %v783
    %843 = vmatpush1.msra.mxu0 %v782
    %844 = vmatprep.subr.mxu0 %v787
    %845 = vmatpush1.msra.mxu0 %v786
    %846 = vmatprep.subr.mxu0 %v791
    %847 = vmatpush1.msra.mxu0 %v790
    %848 = vmatprep.subr.mxu0 %v795
    %849 = vmatpush1.msra.mxu0 %v794
    %850 = vmatprep.subr.mxu0 %v799
    %851 = vmatpush1.msra.mxu0 %v798
    %852 = vmatprep.subr.mxu0 %v803
    %853 = vmatpush1.msra.mxu0 %v802
    %854 = vmatprep.subr.mxu0 %v807
    %855 = vmatpush1.msra.mxu0 %v806
    %856 = vmatprep.subr.mxu0 %v811
    %857 = vmatpush1.msra.mxu0 %v810
    %858 = vmatprep.subr.mxu0 %v815
    %859 = vmatpush1.msra.mxu0 %v814
    %860 = vmatprep.subr.mxu0 %v819
    %861 = vmatpush1.msra.mxu0 %v818
    %862 = vmatprep.subr.mxu0 %v823
    %863 = vmatpush1.msra.mxu0 %v822
    %864 = vmatprep.subr.mxu0 %v827
    %865 = vmatpush1.msra.mxu0 %v826
    %866 = vmatprep.subr.mxu0 %v831
    %867 = vmatpush1.msra.mxu0 %v830
    %868 = vmatprep.subr.mxu0 %v835
    %869 = vmatpush1.msra.mxu0 %v834
    %870 = vmatprep.subr.mxu0 0.0
    %871 = vmatpush1.msra.mxu0 0.0
    %872 = vmatprep.subr.mxu0 0.0
    %873 = vmatpush1.msra.mxu0 0.0
    %874 = vmatprep.subr.mxu0 0.0
    %875 = vmatpush1.msra.mxu0 0.0
    %876 = vmatprep.subr.mxu0 0.0
    %877 = vmatpush1.msra.mxu0 0.0
    %878 = vmatprep.subr.mxu0 0.0
    %879 = vmatpush1.msra.mxu0 0.0
    %880 = vmatprep.subr.mxu0 0.0
    %881 = vmatpush1.msra.mxu0 0.0
    %882 = vmatprep.subr.mxu0 0.0
    %883 = vmatpush1.msra.mxu0 0.0
    %884 = vmatprep.subr.mxu0 0.0
    %885 = vmatpush1.msra.mxu0 0.0
    %886 = vmatprep.subr.mxu0 0.0
    %887 = vmatpush1.msra.mxu0 0.0
    %888 = vmatprep.subr.mxu0 0.0
    %889 = vmatpush1.msra.mxu0 0.0
    %890 = vmatprep.subr.mxu0 0.0
    %891 = vmatpush1.msra.mxu0 0.0
    %892 = vmatprep.subr.mxu0 0.0
    %893 = vmatpush1.msra.mxu0 0.0
    %894 = vmatprep.subr.mxu0 0.0
    %895 = vmatpush1.msra.mxu0 0.0
    %896 = vmatprep.subr.mxu0 0.0
    %897 = vmatpush1.msra.mxu0 0.0
    %898 = vmatprep.subr.mxu0 0.0
    %899 = vmatpush1.msra.mxu0 0.0
    %900 = vmatprep.subr.mxu0 0.0
    %901 = vmatpush1.msra.mxu0 0.0
    %902 = vmatprep.mubr.f32.mxu0 0.0
    %903 = vmatmul.mubr.f32.gmra.mrb[0].mxu0 %v766
    %v904 = vpop.f32.mrb[0].mxu0
    %v905 = vadd.f32 0.0, %v904
    %v906 = vpop.f32.mrb[0].mxu0
    %v907 = vadd.f32 0.0, %v906
    %908 = vdwg.mxu0
    %909 = vmatprep.subr.mxu0 %v777
    %910 = vmatpush1.msra.mxu0 %v776
    %911 = vmatprep.subr.mxu0 %v781
    %912 = vmatpush1.msra.mxu0 %v780
    %913 = vmatprep.subr.mxu0 %v785
    %914 = vmatpush1.msra.mxu0 %v784
    %915 = vmatprep.subr.mxu0 %v789
    %916 = vmatpush1.msra.mxu0 %v788
    %917 = vmatprep.subr.mxu0 %v793
    %918 = vmatpush1.msra.mxu0 %v792
    %919 = vmatprep.subr.mxu0 %v797
    %920 = vmatpush1.msra.mxu0 %v796
    %921 = vmatprep.subr.mxu0 %v801
    %922 = vmatpush1.msra.mxu0 %v800
    %923 = vmatprep.subr.mxu0 %v805
    %924 = vmatpush1.msra.mxu0 %v804
    %925 = vmatprep.subr.mxu0 %v809
    %926 = vmatpush1.msra.mxu0 %v808
    %927 = vmatprep.subr.mxu0 %v813
    %928 = vmatpush1.msra.mxu0 %v812
    %929 = vmatprep.subr.mxu0 %v817
    %930 = vmatpush1.msra.mxu0 %v816
    %931 = vmatprep.subr.mxu0 %v821
    %932 = vmatpush1.msra.mxu0 %v820
    %933 = vmatprep.subr.mxu0 %v825
    %934 = vmatpush1.msra.mxu0 %v824
    %935 = vmatprep.subr.mxu0 %v829
    %936 = vmatpush1.msra.mxu0 %v828
    %937 = vmatprep.subr.mxu0 %v833
    %938 = vmatpush1.msra.mxu0 %v832
    %939 = vmatprep.subr.mxu0 %v837
    %940 = vmatpush1.msra.mxu0 %v836
    %941 = vmatprep.subr.mxu0 0.0
    %942 = vmatpush1.msra.mxu0 0.0
    %943 = vmatprep.subr.mxu0 0.0
    %944 = vmatpush1.msra.mxu0 0.0
    %945 = vmatprep.subr.mxu0 0.0
    %946 = vmatpush1.msra.mxu0 0.0
    %947 = vmatprep.subr.mxu0 0.0
    %948 = vmatpush1.msra.mxu0 0.0
    %949 = vmatprep.subr.mxu0 0.0
    %950 = vmatpush1.msra.mxu0 0.0
    %951 = vmatprep.subr.mxu0 0.0
    %952 = vmatpush1.msra.mxu0 0.0
    %953 = vmatprep.subr.mxu0 0.0
    %954 = vmatpush1.msra.mxu0 0.0
    %955 = vmatprep.subr.mxu0 0.0
    %956 = vmatpush1.msra.mxu0 0.0
    %957 = vmatprep.subr.mxu0 0.0
    %958 = vmatpush1.msra.mxu0 0.0
    %959 = vmatprep.subr.mxu0 0.0
    %960 = vmatpush1.msra.mxu0 0.0
    %961 = vmatprep.subr.mxu0 0.0
    %962 = vmatpush1.msra.mxu0 0.0
    %963 = vmatprep.subr.mxu0 0.0
    %964 = vmatpush1.msra.mxu0 0.0
    %965 = vmatprep.subr.mxu0 0.0
    %966 = vmatpush1.msra.mxu0 0.0
    %967 = vmatprep.subr.mxu0 0.0
    %968 = vmatpush1.msra.mxu0 0.0
    %969 = vmatprep.subr.mxu0 0.0
    %970 = vmatpush1.msra.mxu0 0.0
    %971 = vmatprep.subr.mxu0 0.0
    %972 = vmatpush1.msra.mxu0 0.0
    %973 = vmatprep.mubr.f32.mxu0 0.0
    %974 = vmatmul.mubr.f32.gmra.mrb[0].mxu0 %v766
    %v975 = vpop.f32.mrb[0].mxu0
    %v976 = vadd.f32 0.0, %v975
    %v977 = vpop.f32.mrb[0].mxu0
    %v978 = vadd.f32 0.0, %v977
    %979 = vdwg.mxu0
    %v980 = vadd.f32 %v770, %v905
    %v981 = vadd.f32 %v771, %v907
    %v982 = vadd.f32 %v772, %v976
    %v983 = vadd.f32 %v773, %v978
    %v984 = vxor.u32 %v980, 2147483648
    %v985 = vxor.u32 %v981, 2147483648
    %v986 = vxor.u32 %v982, 2147483648
    %v987 = vmul.f32 %v984, 1.442695
    %v988 = vpow.pop %v987
    %v989 = vmul.f32 %v985, 1.442695
    %v990 = vpow.pop %v989
    %v991 = vmul.f32 %v986, 1.442695
    %v992 = vpow.pop %v991
    %v993 = vadd.f32 %v988, 1.0
    %v994 = vadd.f32 %v990, 1.0
    %v995 = vadd.f32 %v992, 1.0
    %v996 = vrcp.pop %v993
    %v997 = vmul.f32 1.0, %v996
    %v998 = vrcp.pop %v994
    %v999 = vmul.f32 1.0, %v998
    %v1000 = vrcp.pop %v995
    %v1001 = vmul.f32 1.0, %v1000
    %v1002 = vtanh.pop %v983
    %v1003 = vmul.f32 %v999, %v764
    %v1004 = vmul.f32 %v997, %v1002
    %v1005 = vadd.f32 %v1003, %v1004
    %v1006 = vtanh.pop %v1005
    %v1007 = vmul.f32 %v1001, %v1006
    %s1008 = scalar_lea.vmem [#allocation9], 24
    %1009 = vst [vmem:[%s1008] sm:$0xff] %v1007
    %s1010 = scalar_lea.vmem [#allocation4], 128
    %v1011 = vld [vmem:[%s1010] sm:$0xff]
    %v1012 = vld [vmem:[%s1010 + $0x8] sm:$0xff]
    %v1013 = vld [vmem:[%s1010 + $0x10] sm:$0xff]
    %v1014 = vld [vmem:[%s1010 + $0x18] sm:$0xff]
    %v1015 = vld [vmem:[#allocation7] sm:$0xff]
    %v1016 = vld [vmem:[#allocation7 + $0x8] sm:$0xff]
    %v1017 = vld [vmem:[#allocation7 + $0x10] sm:$0xff]
    %v1018 = vld [vmem:[#allocation7 + $0x18] sm:$0xff]
    %v1019 = vld [vmem:[#allocation7 + $0x20] sm:$0xff]
    %v1020 = vld [vmem:[#allocation7 + $0x28] sm:$0xff]
    %v1021 = vld [vmem:[#allocation7 + $0x30] sm:$0xff]
    %v1022 = vld [vmem:[#allocation7 + $0x38] sm:$0xff]
    %v1023 = vld [vmem:[#allocation7 + $0x40] sm:$0xff]
    %v1024 = vld [vmem:[#allocation7 + $0x48] sm:$0xff]
    %v1025 = vld [vmem:[#allocation7 + $0x50] sm:$0xff]
    %v1026 = vld [vmem:[#allocation7 + $0x58] sm:$0xff]
    %v1027 = vld [vmem:[#allocation7 + $0x60] sm:$0xff]
    %v1028 = vld [vmem:[#allocation7 + $0x68] sm:$0xff]
    %v1029 = vld [vmem:[#allocation7 + $0x70] sm:$0xff]
    %v1030 = vld [vmem:[#allocation7 + $0x78] sm:$0xff]
    %v1031 = vld [vmem:[#allocation7 + $0x80] sm:$0xff]
    %v1032 = vld [vmem:[#allocation7 + $0x88] sm:$0xff]
    %v1033 = vld [vmem:[#allocation7 + $0x90] sm:$0xff]
    %v1034 = vld [vmem:[#allocation7 + $0x98] sm:$0xff]
    %v1035 = vld [vmem:[#allocation7 + $0xa0] sm:$0xff]
    %v1036 = vld [vmem:[#allocation7 + $0xa8] sm:$0xff]
    %v1037 = vld [vmem:[#allocation7 + $0xb0] sm:$0xff]
    %v1038 = vld [vmem:[#allocation7 + $0xb8] sm:$0xff]
    %v1039 = vld [vmem:[#allocation7 + $0xc0] sm:$0xff]
    %v1040 = vld [vmem:[#allocation7 + $0xc8] sm:$0xff]
    %v1041 = vld [vmem:[#allocation7 + $0xd0] sm:$0xff]
    %v1042 = vld [vmem:[#allocation7 + $0xd8] sm:$0xff]
    %v1043 = vld [vmem:[#allocation7 + $0xe0] sm:$0xff]
    %v1044 = vld [vmem:[#allocation7 + $0xe8] sm:$0xff]
    %v1045 = vld [vmem:[#allocation7 + $0xf0] sm:$0xff]
    %v1046 = vld [vmem:[#allocation7 + $0xf8] sm:$0xff]
    %v1047 = vld [vmem:[#allocation7 + $0x100] sm:$0xff]
    %v1048 = vld [vmem:[#allocation7 + $0x108] sm:$0xff]
    %v1049 = vld [vmem:[#allocation7 + $0x110] sm:$0xff]
    %v1050 = vld [vmem:[#allocation7 + $0x118] sm:$0xff]
    %v1051 = vld [vmem:[#allocation7 + $0x120] sm:$0xff]
    %v1052 = vld [vmem:[#allocation7 + $0x128] sm:$0xff]
    %v1053 = vld [vmem:[#allocation7 + $0x130] sm:$0xff]
    %v1054 = vld [vmem:[#allocation7 + $0x138] sm:$0xff]
    %v1055 = vld [vmem:[#allocation7 + $0x140] sm:$0xff]
    %v1056 = vld [vmem:[#allocation7 + $0x148] sm:$0xff]
    %v1057 = vld [vmem:[#allocation7 + $0x150] sm:$0xff]
    %v1058 = vld [vmem:[#allocation7 + $0x158] sm:$0xff]
    %v1059 = vld [vmem:[#allocation7 + $0x160] sm:$0xff]
    %v1060 = vld [vmem:[#allocation7 + $0x168] sm:$0xff]
    %v1061 = vld [vmem:[#allocation7 + $0x170] sm:$0xff]
    %v1062 = vld [vmem:[#allocation7 + $0x178] sm:$0xff]
    %v1063 = vld [vmem:[#allocation7 + $0x180] sm:$0xff]
    %v1064 = vld [vmem:[#allocation7 + $0x188] sm:$0xff]
    %v1065 = vld [vmem:[#allocation7 + $0x190] sm:$0xff]
    %v1066 = vld [vmem:[#allocation7 + $0x198] sm:$0xff]
    %v1067 = vld [vmem:[#allocation7 + $0x1a0] sm:$0xff]
    %v1068 = vld [vmem:[#allocation7 + $0x1a8] sm:$0xff]
    %v1069 = vld [vmem:[#allocation7 + $0x1b0] sm:$0xff]
    %v1070 = vld [vmem:[#allocation7 + $0x1b8] sm:$0xff]
    %v1071 = vld [vmem:[#allocation7 + $0x1c0] sm:$0xff]
    %v1072 = vld [vmem:[#allocation7 + $0x1c8] sm:$0xff]
    %v1073 = vld [vmem:[#allocation7 + $0x1d0] sm:$0xff]
    %v1074 = vld [vmem:[#allocation7 + $0x1d8] sm:$0xff]
    %v1075 = vld [vmem:[#allocation7 + $0x1e0] sm:$0xff]
    %v1076 = vld [vmem:[#allocation7 + $0x1e8] sm:$0xff]
    %v1077 = vld [vmem:[#allocation7 + $0x1f0] sm:$0xff]
    %v1078 = vld [vmem:[#allocation7 + $0x1f8] sm:$0xff]
    %1079 = vmatprep.subr.mxu0 %v1016
    %1080 = vmatpush1.msra.mxu0 %v1015
    %1081 = vmatprep.subr.mxu0 %v1020
    %1082 = vmatpush1.msra.mxu0 %v1019
    %1083 = vmatprep.subr.mxu0 %v1024
    %1084 = vmatpush1.msra.mxu0 %v1023
    %1085 = vmatprep.subr.mxu0 %v1028
    %1086 = vmatpush1.msra.mxu0 %v1027
    %1087 = vmatprep.subr.mxu0 %v1032
    %1088 = vmatpush1.msra.mxu0 %v1031
    %1089 = vmatprep.subr.mxu0 %v1036
    %1090 = vmatpush1.msra.mxu0 %v1035
    %1091 = vmatprep.subr.mxu0 %v1040
    %1092 = vmatpush1.msra.mxu0 %v1039
    %1093 = vmatprep.subr.mxu0 %v1044
    %1094 = vmatpush1.msra.mxu0 %v1043
    %1095 = vmatprep.subr.mxu0 %v1048
    %1096 = vmatpush1.msra.mxu0 %v1047
    %1097 = vmatprep.subr.mxu0 %v1052
    %1098 = vmatpush1.msra.mxu0 %v1051
    %1099 = vmatprep.subr.mxu0 %v1056
    %1100 = vmatpush1.msra.mxu0 %v1055
    %1101 = vmatprep.subr.mxu0 %v1060
    %1102 = vmatpush1.msra.mxu0 %v1059
    %1103 = vmatprep.subr.mxu0 %v1064
    %1104 = vmatpush1.msra.mxu0 %v1063
    %1105 = vmatprep.subr.mxu0 %v1068
    %1106 = vmatpush1.msra.mxu0 %v1067
    %1107 = vmatprep.subr.mxu0 %v1072
    %1108 = vmatpush1.msra.mxu0 %v1071
    %1109 = vmatprep.subr.mxu0 %v1076
    %1110 = vmatpush1.msra.mxu0 %v1075
    %1111 = vmatprep.subr.mxu0 0.0
    %1112 = vmatpush1.msra.mxu0 0.0
    %1113 = vmatprep.subr.mxu0 0.0
    %1114 = vmatpush1.msra.mxu0 0.0
    %1115 = vmatprep.subr.mxu0 0.0
    %1116 = vmatpush1.msra.mxu0 0.0
    %1117 = vmatprep.subr.mxu0 0.0
    %1118 = vmatpush1.msra.mxu0 0.0
    %1119 = vmatprep.subr.mxu0 0.0
    %1120 = vmatpush1.msra.mxu0 0.0
    %1121 = vmatprep.subr.mxu0 0.0
    %1122 = vmatpush1.msra.mxu0 0.0
    %1123 = vmatprep.subr.mxu0 0.0
    %1124 = vmatpush1.msra.mxu0 0.0
    %1125 = vmatprep.subr.mxu0 0.0
    %1126 = vmatpush1.msra.mxu0 0.0
    %1127 = vmatprep.subr.mxu0 0.0
    %1128 = vmatpush1.msra.mxu0 0.0
    %1129 = vmatprep.subr.mxu0 0.0
    %1130 = vmatpush1.msra.mxu0 0.0
    %1131 = vmatprep.subr.mxu0 0.0
    %1132 = vmatpush1.msra.mxu0 0.0
    %1133 = vmatprep.subr.mxu0 0.0
    %1134 = vmatpush1.msra.mxu0 0.0
    %1135 = vmatprep.subr.mxu0 0.0
    %1136 = vmatpush1.msra.mxu0 0.0
    %1137 = vmatprep.subr.mxu0 0.0
    %1138 = vmatpush1.msra.mxu0 0.0
    %1139 = vmatprep.subr.mxu0 0.0
    %1140 = vmatpush1.msra.mxu0 0.0
    %1141 = vmatprep.subr.mxu0 0.0
    %1142 = vmatpush1.msra.mxu0 0.0
    %1143 = vmatprep.mubr.f32.mxu0 0.0
    %1144 = vmatmul.mubr.f32.gmra.mrb[0].mxu0 %v1007
    %v1145 = vpop.f32.mrb[0].mxu0
    %v1146 = vadd.f32 0.0, %v1145
    %v1147 = vpop.f32.mrb[0].mxu0
    %v1148 = vadd.f32 0.0, %v1147
    %1149 = vdwg.mxu0
    %1150 = vmatprep.subr.mxu0 %v1018
    %1151 = vmatpush1.msra.mxu0 %v1017
    %1152 = vmatprep.subr.mxu0 %v1022
    %1153 = vmatpush1.msra.mxu0 %v1021
    %1154 = vmatprep.subr.mxu0 %v1026
    %1155 = vmatpush1.msra.mxu0 %v1025
    %1156 = vmatprep.subr.mxu0 %v1030
    %1157 = vmatpush1.msra.mxu0 %v1029
    %1158 = vmatprep.subr.mxu0 %v1034
    %1159 = vmatpush1.msra.mxu0 %v1033
    %1160 = vmatprep.subr.mxu0 %v1038
    %1161 = vmatpush1.msra.mxu0 %v1037
    %1162 = vmatprep.subr.mxu0 %v1042
    %1163 = vmatpush1.msra.mxu0 %v1041
    %1164 = vmatprep.subr.mxu0 %v1046
    %1165 = vmatpush1.msra.mxu0 %v1045
    %1166 = vmatprep.subr.mxu0 %v1050
    %1167 = vmatpush1.msra.mxu0 %v1049
    %1168 = vmatprep.subr.mxu0 %v1054
    %1169 = vmatpush1.msra.mxu0 %v1053
    %1170 = vmatprep.subr.mxu0 %v1058
    %1171 = vmatpush1.msra.mxu0 %v1057
    %1172 = vmatprep.subr.mxu0 %v1062
    %1173 = vmatpush1.msra.mxu0 %v1061
    %1174 = vmatprep.subr.mxu0 %v1066
    %1175 = vmatpush1.msra.mxu0 %v1065
    %1176 = vmatprep.subr.mxu0 %v1070
    %1177 = vmatpush1.msra.mxu0 %v1069
    %1178 = vmatprep.subr.mxu0 %v1074
    %1179 = vmatpush1.msra.mxu0 %v1073
    %1180 = vmatprep.subr.mxu0 %v1078
    %1181 = vmatpush1.msra.mxu0 %v1077
    %1182 = vmatprep.subr.mxu0 0.0
    %1183 = vmatpush1.msra.mxu0 0.0
    %1184 = vmatprep.subr.mxu0 0.0
    %1185 = vmatpush1.msra.mxu0 0.0
    %1186 = vmatprep.subr.mxu0 0.0
    %1187 = vmatpush1.msra.mxu0 0.0
    %1188 = vmatprep.subr.mxu0 0.0
    %1189 = vmatpush1.msra.mxu0 0.0
    %1190 = vmatprep.subr.mxu0 0.0
    %1191 = vmatpush1.msra.mxu0 0.0
    %1192 = vmatprep.subr.mxu0 0.0
    %1193 = vmatpush1.msra.mxu0 0.0
    %1194 = vmatprep.subr.mxu0 0.0
    %1195 = vmatpush1.msra.mxu0 0.0
    %1196 = vmatprep.subr.mxu0 0.0
    %1197 = vmatpush1.msra.mxu0 0.0
    %1198 = vmatprep.subr.mxu0 0.0
    %1199 = vmatpush1.msra.mxu0 0.0
    %1200 = vmatprep.subr.mxu0 0.0
    %1201 = vmatpush1.msra.mxu0 0.0
    %1202 = vmatprep.subr.mxu0 0.0
    %1203 = vmatpush1.msra.mxu0 0.0
    %1204 = vmatprep.subr.mxu0 0.0
    %1205 = vmatpush1.msra.mxu0 0.0
    %1206 = vmatprep.subr.mxu0 0.0
    %1207 = vmatpush1.msra.mxu0 0.0
    %1208 = vmatprep.subr.mxu0 0.0
    %1209 = vmatpush1.msra.mxu0 0.0
    %1210 = vmatprep.subr.mxu0 0.0
    %1211 = vmatpush1.msra.mxu0 0.0
    %1212 = vmatprep.subr.mxu0 0.0
    %1213 = vmatpush1.msra.mxu0 0.0
    %1214 = vmatprep.mubr.f32.mxu0 0.0
    %1215 = vmatmul.mubr.f32.gmra.mrb[0].mxu0 %v1007
    %v1216 = vpop.f32.mrb[0].mxu0
    %v1217 = vadd.f32 0.0, %v1216
    %v1218 = vpop.f32.mrb[0].mxu0
    %v1219 = vadd.f32 0.0, %v1218
    %1220 = vdwg.mxu0
    %v1221 = vadd.f32 %v1011, %v1146
    %v1222 = vadd.f32 %v1012, %v1148
    %v1223 = vadd.f32 %v1013, %v1217
    %v1224 = vadd.f32 %v1014, %v1219
    %v1225 = vxor.u32 %v1221, 2147483648
    %v1226 = vxor.u32 %v1222, 2147483648
    %v1227 = vxor.u32 %v1223, 2147483648
    %v1228 = vmul.f32 %v1225, 1.442695
    %v1229 = vpow.pop %v1228
    %v1230 = vmul.f32 %v1226, 1.442695
    %v1231 = vpow.pop %v1230
    %v1232 = vmul.f32 %v1227, 1.442695
    %v1233 = vpow.pop %v1232
    %v1234 = vadd.f32 %v1229, 1.0
    %v1235 = vadd.f32 %v1231, 1.0
    %v1236 = vadd.f32 %v1233, 1.0
    %v1237 = vrcp.pop %v1234
    %v1238 = vmul.f32 1.0, %v1237
    %v1239 = vrcp.pop %v1235
    %v1240 = vmul.f32 1.0, %v1239
    %v1241 = vrcp.pop %v1236
    %v1242 = vmul.f32 1.0, %v1241
    %v1243 = vtanh.pop %v1224
    %v1244 = vmul.f32 %v1240, %v1005
    %v1245 = vmul.f32 %v1238, %v1243
    %v1246 = vadd.f32 %v1244, %v1245
    %v1247 = vtanh.pop %v1246
    %v1248 = vmul.f32 %v1242, %v1247
    %s1249 = scalar_lea.vmem [#allocation9], 32
    %1250 = vst [vmem:[%s1249] sm:$0xff] %v1248
    %s1251 = scalar_lea.vmem [#allocation4], 160
    %v1252 = vld [vmem:[%s1251] sm:$0xff]
    %v1253 = vld [vmem:[%s1251 + $0x8] sm:$0xff]
    %v1254 = vld [vmem:[%s1251 + $0x10] sm:$0xff]
    %v1255 = vld [vmem:[%s1251 + $0x18] sm:$0xff]
    %v1256 = vld [vmem:[#allocation7] sm:$0xff]
    %v1257 = vld [vmem:[#allocation7 + $0x8] sm:$0xff]
    %v1258 = vld [vmem:[#allocation7 + $0x10] sm:$0xff]
    %v1259 = vld [vmem:[#allocation7 + $0x18] sm:$0xff]
    %v1260 = vld [vmem:[#allocation7 + $0x20] sm:$0xff]
    %v1261 = vld [vmem:[#allocation7 + $0x28] sm:$0xff]
    %v1262 = vld [vmem:[#allocation7 + $0x30] sm:$0xff]
    %v1263 = vld [vmem:[#allocation7 + $0x38] sm:$0xff]
    %v1264 = vld [vmem:[#allocation7 + $0x40] sm:$0xff]
    %v1265 = vld [vmem:[#allocation7 + $0x48] sm:$0xff]
    %v1266 = vld [vmem:[#allocation7 + $0x50] sm:$0xff]
    %v1267 = vld [vmem:[#allocation7 + $0x58] sm:$0xff]
    %v1268 = vld [vmem:[#allocation7 + $0x60] sm:$0xff]
    %v1269 = vld [vmem:[#allocation7 + $0x68] sm:$0xff]
    %v1270 = vld [vmem:[#allocation7 + $0x70] sm:$0xff]
    %v1271 = vld [vmem:[#allocation7 + $0x78] sm:$0xff]
    %v1272 = vld [vmem:[#allocation7 + $0x80] sm:$0xff]
    %v1273 = vld [vmem:[#allocation7 + $0x88] sm:$0xff]
    %v1274 = vld [vmem:[#allocation7 + $0x90] sm:$0xff]
    %v1275 = vld [vmem:[#allocation7 + $0x98] sm:$0xff]
    %v1276 = vld [vmem:[#allocation7 + $0xa0] sm:$0xff]
    %v1277 = vld [vmem:[#allocation7 + $0xa8] sm:$0xff]
    %v1278 = vld [vmem:[#allocation7 + $0xb0] sm:$0xff]
    %v1279 = vld [vmem:[#allocation7 + $0xb8] sm:$0xff]
    %v1280 = vld [vmem:[#allocation7 + $0xc0] sm:$0xff]
    %v1281 = vld [vmem:[#allocation7 + $0xc8] sm:$0xff]
    %v1282 = vld [vmem:[#allocation7 + $0xd0] sm:$0xff]
    %v1283 = vld [vmem:[#allocation7 + $0xd8] sm:$0xff]
    %v1284 = vld [vmem:[#allocation7 + $0xe0] sm:$0xff]
    %v1285 = vld [vmem:[#allocation7 + $0xe8] sm:$0xff]
    %v1286 = vld [vmem:[#allocation7 + $0xf0] sm:$0xff]
    %v1287 = vld [vmem:[#allocation7 + $0xf8] sm:$0xff]
    %v1288 = vld [vmem:[#allocation7 + $0x100] sm:$0xff]
    %v1289 = vld [vmem:[#allocation7 + $0x108] sm:$0xff]
    %v1290 = vld [vmem:[#allocation7 + $0x110] sm:$0xff]
    %v1291 = vld [vmem:[#allocation7 + $0x118] sm:$0xff]
    %v1292 = vld [vmem:[#allocation7 + $0x120] sm:$0xff]
    %v1293 = vld [vmem:[#allocation7 + $0x128] sm:$0xff]
    %v1294 = vld [vmem:[#allocation7 + $0x130] sm:$0xff]
    %v1295 = vld [vmem:[#allocation7 + $0x138] sm:$0xff]
    %v1296 = vld [vmem:[#allocation7 + $0x140] sm:$0xff]
    %v1297 = vld [vmem:[#allocation7 + $0x148] sm:$0xff]
    %v1298 = vld [vmem:[#allocation7 + $0x150] sm:$0xff]
    %v1299 = vld [vmem:[#allocation7 + $0x158] sm:$0xff]
    %v1300 = vld [vmem:[#allocation7 + $0x160] sm:$0xff]
    %v1301 = vld [vmem:[#allocation7 + $0x168] sm:$0xff]
    %v1302 = vld [vmem:[#allocation7 + $0x170] sm:$0xff]
    %v1303 = vld [vmem:[#allocation7 + $0x178] sm:$0xff]
    %v1304 = vld [vmem:[#allocation7 + $0x180] sm:$0xff]
    %v1305 = vld [vmem:[#allocation7 + $0x188] sm:$0xff]
    %v1306 = vld [vmem:[#allocation7 + $0x190] sm:$0xff]
    %v1307 = vld [vmem:[#allocation7 + $0x198] sm:$0xff]
    %v1308 = vld [vmem:[#allocation7 + $0x1a0] sm:$0xff]
    %v1309 = vld [vmem:[#allocation7 + $0x1a8] sm:$0xff]
    %v1310 = vld [vmem:[#allocation7 + $0x1b0] sm:$0xff]
    %v1311 = vld [vmem:[#allocation7 + $0x1b8] sm:$0xff]
    %v1312 = vld [vmem:[#allocation7 + $0x1c0] sm:$0xff]
    %v1313 = vld [vmem:[#allocation7 + $0x1c8] sm:$0xff]
    %v1314 = vld [vmem:[#allocation7 + $0x1d0] sm:$0xff]
    %v1315 = vld [vmem:[#allocation7 + $0x1d8] sm:$0xff]
    %v1316 = vld [vmem:[#allocation7 + $0x1e0] sm:$0xff]
    %v1317 = vld [vmem:[#allocation7 + $0x1e8] sm:$0xff]
    %v1318 = vld [vmem:[#allocation7 + $0x1f0] sm:$0xff]
    %v1319 = vld [vmem:[#allocation7 + $0x1f8] sm:$0xff]
    %1320 = vmatprep.subr.mxu0 %v1257
    %1321 = vmatpush1.msra.mxu0 %v1256
    %1322 = vmatprep.subr.mxu0 %v1261
    %1323 = vmatpush1.msra.mxu0 %v1260
    %1324 = vmatprep.subr.mxu0 %v1265
    %1325 = vmatpush1.msra.mxu0 %v1264
    %1326 = vmatprep.subr.mxu0 %v1269
    %1327 = vmatpush1.msra.mxu0 %v1268
    %1328 = vmatprep.subr.mxu0 %v1273
    %1329 = vmatpush1.msra.mxu0 %v1272
    %1330 = vmatprep.subr.mxu0 %v1277
    %1331 = vmatpush1.msra.mxu0 %v1276
    %1332 = vmatprep.subr.mxu0 %v1281
    %1333 = vmatpush1.msra.mxu0 %v1280
    %1334 = vmatprep.subr.mxu0 %v1285
    %1335 = vmatpush1.msra.mxu0 %v1284
    %1336 = vmatprep.subr.mxu0 %v1289
    %1337 = vmatpush1.msra.mxu0 %v1288
    %1338 = vmatprep.subr.mxu0 %v1293
    %1339 = vmatpush1.msra.mxu0 %v1292
    %1340 = vmatprep.subr.mxu0 %v1297
    %1341 = vmatpush1.msra.mxu0 %v1296
    %1342 = vmatprep.subr.mxu0 %v1301
    %1343 = vmatpush1.msra.mxu0 %v1300
    %1344 = vmatprep.subr.mxu0 %v1305
    %1345 = vmatpush1.msra.mxu0 %v1304
    %1346 = vmatprep.subr.mxu0 %v1309
    %1347 = vmatpush1.msra.mxu0 %v1308
    %1348 = vmatprep.subr.mxu0 %v1313
    %1349 = vmatpush1.msra.mxu0 %v1312
    %1350 = vmatprep.subr.mxu0 %v1317
    %1351 = vmatpush1.msra.mxu0 %v1316
    %1352 = vmatprep.subr.mxu0 0.0
    %1353 = vmatpush1.msra.mxu0 0.0
    %1354 = vmatprep.subr.mxu0 0.0
    %1355 = vmatpush1.msra.mxu0 0.0
    %1356 = vmatprep.subr.mxu0 0.0
    %1357 = vmatpush1.msra.mxu0 0.0
    %1358 = vmatprep.subr.mxu0 0.0
    %1359 = vmatpush1.msra.mxu0 0.0
    %1360 = vmatprep.subr.mxu0 0.0
    %1361 = vmatpush1.msra.mxu0 0.0
    %1362 = vmatprep.subr.mxu0 0.0
    %1363 = vmatpush1.msra.mxu0 0.0
    %1364 = vmatprep.subr.mxu0 0.0
    %1365 = vmatpush1.msra.mxu0 0.0
    %1366 = vmatprep.subr.mxu0 0.0
    %1367 = vmatpush1.msra.mxu0 0.0
    %1368 = vmatprep.subr.mxu0 0.0
    %1369 = vmatpush1.msra.mxu0 0.0
    %1370 = vmatprep.subr.mxu0 0.0
    %1371 = vmatpush1.msra.mxu0 0.0
    %1372 = vmatprep.subr.mxu0 0.0
    %1373 = vmatpush1.msra.mxu0 0.0
    %1374 = vmatprep.subr.mxu0 0.0
    %1375 = vmatpush1.msra.mxu0 0.0
    %1376 = vmatprep.subr.mxu0 0.0
    %1377 = vmatpush1.msra.mxu0 0.0
    %1378 = vmatprep.subr.mxu0 0.0
    %1379 = vmatpush1.msra.mxu0 0.0
    %1380 = vmatprep.subr.mxu0 0.0
    %1381 = vmatpush1.msra.mxu0 0.0
    %1382 = vmatprep.subr.mxu0 0.0
    %1383 = vmatpush1.msra.mxu0 0.0
    %1384 = vmatprep.mubr.f32.mxu0 0.0
    %1385 = vmatmul.mubr.f32.gmra.mrb[0].mxu0 %v1248
    %v1386 = vpop.f32.mrb[0].mxu0
    %v1387 = vadd.f32 0.0, %v1386
    %v1388 = vpop.f32.mrb[0].mxu0
    %v1389 = vadd.f32 0.0, %v1388
    %1390 = vdwg.mxu0
    %1391 = vmatprep.subr.mxu0 %v1259
    %1392 = vmatpush1.msra.mxu0 %v1258
    %1393 = vmatprep.subr.mxu0 %v1263
    %1394 = vmatpush1.msra.mxu0 %v1262
    %1395 = vmatprep.subr.mxu0 %v1267
    %1396 = vmatpush1.msra.mxu0 %v1266
    %1397 = vmatprep.subr.mxu0 %v1271
    %1398 = vmatpush1.msra.mxu0 %v1270
    %1399 = vmatprep.subr.mxu0 %v1275
    %1400 = vmatpush1.msra.mxu0 %v1274
    %1401 = vmatprep.subr.mxu0 %v1279
    %1402 = vmatpush1.msra.mxu0 %v1278
    %1403 = vmatprep.subr.mxu0 %v1283
    %1404 = vmatpush1.msra.mxu0 %v1282
    %1405 = vmatprep.subr.mxu0 %v1287
    %1406 = vmatpush1.msra.mxu0 %v1286
    %1407 = vmatprep.subr.mxu0 %v1291
    %1408 = vmatpush1.msra.mxu0 %v1290
    %1409 = vmatprep.subr.mxu0 %v1295
    %1410 = vmatpush1.msra.mxu0 %v1294
    %1411 = vmatprep.subr.mxu0 %v1299
    %1412 = vmatpush1.msra.mxu0 %v1298
    %1413 = vmatprep.subr.mxu0 %v1303
    %1414 = vmatpush1.msra.mxu0 %v1302
    %1415 = vmatprep.subr.mxu0 %v1307
    %1416 = vmatpush1.msra.mxu0 %v1306
    %1417 = vmatprep.subr.mxu0 %v1311
    %1418 = vmatpush1.msra.mxu0 %v1310
    %1419 = vmatprep.subr.mxu0 %v1315
    %1420 = vmatpush1.msra.mxu0 %v1314
    %1421 = vmatprep.subr.mxu0 %v1319
    %1422 = vmatpush1.msra.mxu0 %v1318
    %1423 = vmatprep.subr.mxu0 0.0
    %1424 = vmatpush1.msra.mxu0 0.0
    %1425 = vmatprep.subr.mxu0 0.0
    %1426 = vmatpush1.msra.mxu0 0.0
    %1427 = vmatprep.subr.mxu0 0.0
    %1428 = vmatpush1.msra.mxu0 0.0
    %1429 = vmatprep.subr.mxu0 0.0
    %1430 = vmatpush1.msra.mxu0 0.0
    %1431 = vmatprep.subr.mxu0 0.0
    %1432 = vmatpush1.msra.mxu0 0.0
    %1433 = vmatprep.subr.mxu0 0.0
    %1434 = vmatpush1.msra.mxu0 0.0
    %1435 = vmatprep.subr.mxu0 0.0
    %1436 = vmatpush1.msra.mxu0 0.0
    %1437 = vmatprep.subr.mxu0 0.0
    %1438 = vmatpush1.msra.mxu0 0.0
    %1439 = vmatprep.subr.mxu0 0.0
    %1440 = vmatpush1.msra.mxu0 0.0
    %1441 = vmatprep.subr.mxu0 0.0
    %1442 = vmatpush1.msra.mxu0 0.0
    %1443 = vmatprep.subr.mxu0 0.0
    %1444 = vmatpush1.msra.mxu0 0.0
    %1445 = vmatprep.subr.mxu0 0.0
    %1446 = vmatpush1.msra.mxu0 0.0
    %1447 = vmatprep.subr.mxu0 0.0
    %1448 = vmatpush1.msra.mxu0 0.0
    %1449 = vmatprep.subr.mxu0 0.0
    %1450 = vmatpush1.msra.mxu0 0.0
    %1451 = vmatprep.subr.mxu0 0.0
    %1452 = vmatpush1.msra.mxu0 0.0
    %1453 = vmatprep.subr.mxu0 0.0
    %1454 = vmatpush1.msra.mxu0 0.0
    %1455 = vmatprep.mubr.f32.mxu0 0.0
    %1456 = vmatmul.mubr.f32.gmra.mrb[0].mxu0 %v1248
    %v1457 = vpop.f32.mrb[0].mxu0
    %v1458 = vadd.f32 0.0, %v1457
    %v1459 = vpop.f32.mrb[0].mxu0
    %v1460 = vadd.f32 0.0, %v1459
    %1461 = vdwg.mxu0
    %v1462 = vadd.f32 %v1252, %v1387
    %v1463 = vadd.f32 %v1253, %v1389
    %v1464 = vadd.f32 %v1254, %v1458
    %v1465 = vadd.f32 %v1255, %v1460
    %v1466 = vxor.u32 %v1462, 2147483648
    %v1467 = vxor.u32 %v1463, 2147483648
    %v1468 = vxor.u32 %v1464, 2147483648
    %v1469 = vmul.f32 %v1466, 1.442695
    %v1470 = vpow.pop %v1469
    %v1471 = vmul.f32 %v1467, 1.442695
    %v1472 = vpow.pop %v1471
    %v1473 = vmul.f32 %v1468, 1.442695
    %v1474 = vpow.pop %v1473
    %v1475 = vadd.f32 %v1470, 1.0
    %v1476 = vadd.f32 %v1472, 1.0
    %v1477 = vadd.f32 %v1474, 1.0
    %v1478 = vrcp.pop %v1475
    %v1479 = vmul.f32 1.0, %v1478
    %v1480 = vrcp.pop %v1476
    %v1481 = vmul.f32 1.0, %v1480
    %v1482 = vrcp.pop %v1477
    %v1483 = vmul.f32 1.0, %v1482
    %v1484 = vtanh.pop %v1465
    %v1485 = vmul.f32 %v1481, %v1246
    %v1486 = vmul.f32 %v1479, %v1484
    %v1487 = vadd.f32 %v1485, %v1486
    %v1488 = vtanh.pop %v1487
    %v1489 = vmul.f32 %v1483, %v1488
    %s1490 = scalar_lea.vmem [#allocation9], 40
    %1491 = vst [vmem:[%s1490] sm:$0xff] %v1489
    %s1492 = scalar_lea.vmem [#allocation4], 192
    %v1493 = vld [vmem:[%s1492] sm:$0xff]
    %v1494 = vld [vmem:[%s1492 + $0x8] sm:$0xff]
    %v1495 = vld [vmem:[%s1492 + $0x10] sm:$0xff]
    %v1496 = vld [vmem:[%s1492 + $0x18] sm:$0xff]
    %v1497 = vld [vmem:[#allocation7] sm:$0xff]
    %v1498 = vld [vmem:[#allocation7 + $0x8] sm:$0xff]
    %v1499 = vld [vmem:[#allocation7 + $0x10] sm:$0xff]
    %v1500 = vld [vmem:[#allocation7 + $0x18] sm:$0xff]
    %v1501 = vld [vmem:[#allocation7 + $0x20] sm:$0xff]
    %v1502 = vld [vmem:[#allocation7 + $0x28] sm:$0xff]
    %v1503 = vld [vmem:[#allocation7 + $0x30] sm:$0xff]
    %v1504 = vld [vmem:[#allocation7 + $0x38] sm:$0xff]
    %v1505 = vld [vmem:[#allocation7 + $0x40] sm:$0xff]
    %v1506 = vld [vmem:[#allocation7 + $0x48] sm:$0xff]
    %v1507 = vld [vmem:[#allocation7 + $0x50] sm:$0xff]
    %v1508 = vld [vmem:[#allocation7 + $0x58] sm:$0xff]
    %v1509 = vld [vmem:[#allocation7 + $0x60] sm:$0xff]
    %v1510 = vld [vmem:[#allocation7 + $0x68] sm:$0xff]
    %v1511 = vld [vmem:[#allocation7 + $0x70] sm:$0xff]
    %v1512 = vld [vmem:[#allocation7 + $0x78] sm:$0xff]
    %v1513 = vld [vmem:[#allocation7 + $0x80] sm:$0xff]
    %v1514 = vld [vmem:[#allocation7 + $0x88] sm:$0xff]
    %v1515 = vld [vmem:[#allocation7 + $0x90] sm:$0xff]
    %v1516 = vld [vmem:[#allocation7 + $0x98] sm:$0xff]
    %v1517 = vld [vmem:[#allocation7 + $0xa0] sm:$0xff]
    %v1518 = vld [vmem:[#allocation7 + $0xa8] sm:$0xff]
    %v1519 = vld [vmem:[#allocation7 + $0xb0] sm:$0xff]
    %v1520 = vld [vmem:[#allocation7 + $0xb8] sm:$0xff]
    %v1521 = vld [vmem:[#allocation7 + $0xc0] sm:$0xff]
    %v1522 = vld [vmem:[#allocation7 + $0xc8] sm:$0xff]
    %v1523 = vld [vmem:[#allocation7 + $0xd0] sm:$0xff]
    %v1524 = vld [vmem:[#allocation7 + $0xd8] sm:$0xff]
    %v1525 = vld [vmem:[#allocation7 + $0xe0] sm:$0xff]
    %v1526 = vld [vmem:[#allocation7 + $0xe8] sm:$0xff]
    %v1527 = vld [vmem:[#allocation7 + $0xf0] sm:$0xff]
    %v1528 = vld [vmem:[#allocation7 + $0xf8] sm:$0xff]
    %v1529 = vld [vmem:[#allocation7 + $0x100] sm:$0xff]
    %v1530 = vld [vmem:[#allocation7 + $0x108] sm:$0xff]
    %v1531 = vld [vmem:[#allocation7 + $0x110] sm:$0xff]
    %v1532 = vld [vmem:[#allocation7 + $0x118] sm:$0xff]
    %v1533 = vld [vmem:[#allocation7 + $0x120] sm:$0xff]
    %v1534 = vld [vmem:[#allocation7 + $0x128] sm:$0xff]
    %v1535 = vld [vmem:[#allocation7 + $0x130] sm:$0xff]
    %v1536 = vld [vmem:[#allocation7 + $0x138] sm:$0xff]
    %v1537 = vld [vmem:[#allocation7 + $0x140] sm:$0xff]
    %v1538 = vld [vmem:[#allocation7 + $0x148] sm:$0xff]
    %v1539 = vld [vmem:[#allocation7 + $0x150] sm:$0xff]
    %v1540 = vld [vmem:[#allocation7 + $0x158] sm:$0xff]
    %v1541 = vld [vmem:[#allocation7 + $0x160] sm:$0xff]
    %v1542 = vld [vmem:[#allocation7 + $0x168] sm:$0xff]
    %v1543 = vld [vmem:[#allocation7 + $0x170] sm:$0xff]
    %v1544 = vld [vmem:[#allocation7 + $0x178] sm:$0xff]
    %v1545 = vld [vmem:[#allocation7 + $0x180] sm:$0xff]
    %v1546 = vld [vmem:[#allocation7 + $0x188] sm:$0xff]
    %v1547 = vld [vmem:[#allocation7 + $0x190] sm:$0xff]
    %v1548 = vld [vmem:[#allocation7 + $0x198] sm:$0xff]
    %v1549 = vld [vmem:[#allocation7 + $0x1a0] sm:$0xff]
    %v1550 = vld [vmem:[#allocation7 + $0x1a8] sm:$0xff]
    %v1551 = vld [vmem:[#allocation7 + $0x1b0] sm:$0xff]
    %v1552 = vld [vmem:[#allocation7 + $0x1b8] sm:$0xff]
    %v1553 = vld [vmem:[#allocation7 + $0x1c0] sm:$0xff]
    %v1554 = vld [vmem:[#allocation7 + $0x1c8] sm:$0xff]
    %v1555 = vld [vmem:[#allocation7 + $0x1d0] sm:$0xff]
    %v1556 = vld [vmem:[#allocation7 + $0x1d8] sm:$0xff]
    %v1557 = vld [vmem:[#allocation7 + $0x1e0] sm:$0xff]
    %v1558 = vld [vmem:[#allocation7 + $0x1e8] sm:$0xff]
    %v1559 = vld [vmem:[#allocation7 + $0x1f0] sm:$0xff]
    %v1560 = vld [vmem:[#allocation7 + $0x1f8] sm:$0xff]
    %1561 = vmatprep.subr.mxu0 %v1498
    %1562 = vmatpush1.msra.mxu0 %v1497
    %1563 = vmatprep.subr.mxu0 %v1502
    %1564 = vmatpush1.msra.mxu0 %v1501
    %1565 = vmatprep.subr.mxu0 %v1506
    %1566 = vmatpush1.msra.mxu0 %v1505
    %1567 = vmatprep.subr.mxu0 %v1510
    %1568 = vmatpush1.msra.mxu0 %v1509
    %1569 = vmatprep.subr.mxu0 %v1514
    %1570 = vmatpush1.msra.mxu0 %v1513
    %1571 = vmatprep.subr.mxu0 %v1518
    %1572 = vmatpush1.msra.mxu0 %v1517
    %1573 = vmatprep.subr.mxu0 %v1522
    %1574 = vmatpush1.msra.mxu0 %v1521
    %1575 = vmatprep.subr.mxu0 %v1526
    %1576 = vmatpush1.msra.mxu0 %v1525
    %1577 = vmatprep.subr.mxu0 %v1530
    %1578 = vmatpush1.msra.mxu0 %v1529
    %1579 = vmatprep.subr.mxu0 %v1534
    %1580 = vmatpush1.msra.mxu0 %v1533
    %1581 = vmatprep.subr.mxu0 %v1538
    %1582 = vmatpush1.msra.mxu0 %v1537
    %1583 = vmatprep.subr.mxu0 %v1542
    %1584 = vmatpush1.msra.mxu0 %v1541
    %1585 = vmatprep.subr.mxu0 %v1546
    %1586 = vmatpush1.msra.mxu0 %v1545
    %1587 = vmatprep.subr.mxu0 %v1550
    %1588 = vmatpush1.msra.mxu0 %v1549
    %1589 = vmatprep.subr.mxu0 %v1554
    %1590 = vmatpush1.msra.mxu0 %v1553
    %1591 = vmatprep.subr.mxu0 %v1558
    %1592 = vmatpush1.msra.mxu0 %v1557
    %1593 = vmatprep.subr.mxu0 0.0
    %1594 = vmatpush1.msra.mxu0 0.0
    %1595 = vmatprep.subr.mxu0 0.0
    %1596 = vmatpush1.msra.mxu0 0.0
    %1597 = vmatprep.subr.mxu0 0.0
    %1598 = vmatpush1.msra.mxu0 0.0
    %1599 = vmatprep.subr.mxu0 0.0
    %1600 = vmatpush1.msra.mxu0 0.0
    %1601 = vmatprep.subr.mxu0 0.0
    %1602 = vmatpush1.msra.mxu0 0.0
    %1603 = vmatprep.subr.mxu0 0.0
    %1604 = vmatpush1.msra.mxu0 0.0
    %1605 = vmatprep.subr.mxu0 0.0
    %1606 = vmatpush1.msra.mxu0 0.0
    %1607 = vmatprep.subr.mxu0 0.0
    %1608 = vmatpush1.msra.mxu0 0.0
    %1609 = vmatprep.subr.mxu0 0.0
    %1610 = vmatpush1.msra.mxu0 0.0
    %1611 = vmatprep.subr.mxu0 0.0
    %1612 = vmatpush1.msra.mxu0 0.0
    %1613 = vmatprep.subr.mxu0 0.0
    %1614 = vmatpush1.msra.mxu0 0.0
    %1615 = vmatprep.subr.mxu0 0.0
    %1616 = vmatpush1.msra.mxu0 0.0
    %1617 = vmatprep.subr.mxu0 0.0
    %1618 = vmatpush1.msra.mxu0 0.0
    %1619 = vmatprep.subr.mxu0 0.0
    %1620 = vmatpush1.msra.mxu0 0.0
    %1621 = vmatprep.subr.mxu0 0.0
    %1622 = vmatpush1.msra.mxu0 0.0
    %1623 = vmatprep.subr.mxu0 0.0
    %1624 = vmatpush1.msra.mxu0 0.0
    %1625 = vmatprep.mubr.f32.mxu0 0.0
    %1626 = vmatmul.mubr.f32.gmra.mrb[0].mxu0 %v1489
    %v1627 = vpop.f32.mrb[0].mxu0
    %v1628 = vadd.f32 0.0, %v1627
    %v1629 = vpop.f32.mrb[0].mxu0
    %v1630 = vadd.f32 0.0, %v1629
    %1631 = vdwg.mxu0
    %1632 = vmatprep.subr.mxu0 %v1500
    %1633 = vmatpush1.msra.mxu0 %v1499
    %1634 = vmatprep.subr.mxu0 %v1504
    %1635 = vmatpush1.msra.mxu0 %v1503
    %1636 = vmatprep.subr.mxu0 %v1508
    %1637 = vmatpush1.msra.mxu0 %v1507
    %1638 = vmatprep.subr.mxu0 %v1512
    %1639 = vmatpush1.msra.mxu0 %v1511
    %1640 = vmatprep.subr.mxu0 %v1516
    %1641 = vmatpush1.msra.mxu0 %v1515
    %1642 = vmatprep.subr.mxu0 %v1520
    %1643 = vmatpush1.msra.mxu0 %v1519
    %1644 = vmatprep.subr.mxu0 %v1524
    %1645 = vmatpush1.msra.mxu0 %v1523
    %1646 = vmatprep.subr.mxu0 %v1528
    %1647 = vmatpush1.msra.mxu0 %v1527
    %1648 = vmatprep.subr.mxu0 %v1532
    %1649 = vmatpush1.msra.mxu0 %v1531
    %1650 = vmatprep.subr.mxu0 %v1536
    %1651 = vmatpush1.msra.mxu0 %v1535
    %1652 = vmatprep.subr.mxu0 %v1540
    %1653 = vmatpush1.msra.mxu0 %v1539
    %1654 = vmatprep.subr.mxu0 %v1544
    %1655 = vmatpush1.msra.mxu0 %v1543
    %1656 = vmatprep.subr.mxu0 %v1548
    %1657 = vmatpush1.msra.mxu0 %v1547
    %1658 = vmatprep.subr.mxu0 %v1552
    %1659 = vmatpush1.msra.mxu0 %v1551
    %1660 = vmatprep.subr.mxu0 %v1556
    %1661 = vmatpush1.msra.mxu0 %v1555
    %1662 = vmatprep.subr.mxu0 %v1560
    %1663 = vmatpush1.msra.mxu0 %v1559
    %1664 = vmatprep.subr.mxu0 0.0
    %1665 = vmatpush1.msra.mxu0 0.0
    %1666 = vmatprep.subr.mxu0 0.0
    %1667 = vmatpush1.msra.mxu0 0.0
    %1668 = vmatprep.subr.mxu0 0.0
    %1669 = vmatpush1.msra.mxu0 0.0
    %1670 = vmatprep.subr.mxu0 0.0
    %1671 = vmatpush1.msra.mxu0 0.0
    %1672 = vmatprep.subr.mxu0 0.0
    %1673 = vmatpush1.msra.mxu0 0.0
    %1674 = vmatprep.subr.mxu0 0.0
    %1675 = vmatpush1.msra.mxu0 0.0
    %1676 = vmatprep.subr.mxu0 0.0
    %1677 = vmatpush1.msra.mxu0 0.0
    %1678 = vmatprep.subr.mxu0 0.0
    %1679 = vmatpush1.msra.mxu0 0.0
    %1680 = vmatprep.subr.mxu0 0.0
    %1681 = vmatpush1.msra.mxu0 0.0
    %1682 = vmatprep.subr.mxu0 0.0
    %1683 = vmatpush1.msra.mxu0 0.0
    %1684 = vmatprep.subr.mxu0 0.0
    %1685 = vmatpush1.msra.mxu0 0.0
    %1686 = vmatprep.subr.mxu0 0.0
    %1687 = vmatpush1.msra.mxu0 0.0
    %1688 = vmatprep.subr.mxu0 0.0
    %1689 = vmatpush1.msra.mxu0 0.0
    %1690 = vmatprep.subr.mxu0 0.0
    %1691 = vmatpush1.msra.mxu0 0.0
    %1692 = vmatprep.subr.mxu0 0.0
    %1693 = vmatpush1.msra.mxu0 0.0
    %1694 = vmatprep.subr.mxu0 0.0
    %1695 = vmatpush1.msra.mxu0 0.0
    %1696 = vmatprep.mubr.f32.mxu0 0.0
    %1697 = vmatmul.mubr.f32.gmra.mrb[0].mxu0 %v1489
    %v1698 = vpop.f32.mrb[0].mxu0
    %v1699 = vadd.f32 0.0, %v1698
    %v1700 = vpop.f32.mrb[0].mxu0
    %v1701 = vadd.f32 0.0, %v1700
    %1702 = vdwg.mxu0
    %v1703 = vadd.f32 %v1493, %v1628
    %v1704 = vadd.f32 %v1494, %v1630
    %v1705 = vadd.f32 %v1495, %v1699
    %v1706 = vadd.f32 %v1496, %v1701
    %v1707 = vxor.u32 %v1703, 2147483648
    %v1708 = vxor.u32 %v1704, 2147483648
    %v1709 = vxor.u32 %v1705, 2147483648
    %v1710 = vmul.f32 %v1707, 1.442695
    %v1711 = vpow.pop %v1710
    %v1712 = vmul.f32 %v1708, 1.442695
    %v1713 = vpow.pop %v1712
    %v1714 = vmul.f32 %v1709, 1.442695
    %v1715 = vpow.pop %v1714
    %v1716 = vadd.f32 %v1711, 1.0
    %v1717 = vadd.f32 %v1713, 1.0
    %v1718 = vadd.f32 %v1715, 1.0
    %v1719 = vrcp.pop %v1716
    %v1720 = vmul.f32 1.0, %v1719
    %v1721 = vrcp.pop %v1717
    %v1722 = vmul.f32 1.0, %v1721
    %v1723 = vrcp.pop %v1718
    %v1724 = vmul.f32 1.0, %v1723
    %v1725 = vtanh.pop %v1706
    %v1726 = vmul.f32 %v1722, %v1487
    %v1727 = vmul.f32 %v1720, %v1725
    %v1728 = vadd.f32 %v1726, %v1727
    %v1729 = vtanh.pop %v1728
    %v1730 = vmul.f32 %v1724, %v1729
    %s1731 = scalar_lea.vmem [#allocation9], 48
    %1732 = vst [vmem:[%s1731] sm:$0xff] %v1730
    %s1733 = scalar_lea.vmem [#allocation4], 224
    %v1734 = vld [vmem:[%s1733] sm:$0xff]
    %v1735 = vld [vmem:[%s1733 + $0x8] sm:$0xff]
    %v1736 = vld [vmem:[%s1733 + $0x10] sm:$0xff]
    %v1737 = vld [vmem:[%s1733 + $0x18] sm:$0xff]
    %v1738 = vld [vmem:[#allocation7] sm:$0xff]
    %v1739 = vld [vmem:[#allocation7 + $0x8] sm:$0xff]
    %v1740 = vld [vmem:[#allocation7 + $0x10] sm:$0xff]
    %v1741 = vld [vmem:[#allocation7 + $0x18] sm:$0xff]
    %v1742 = vld [vmem:[#allocation7 + $0x20] sm:$0xff]
    %v1743 = vld [vmem:[#allocation7 + $0x28] sm:$0xff]
    %v1744 = vld [vmem:[#allocation7 + $0x30] sm:$0xff]
    %v1745 = vld [vmem:[#allocation7 + $0x38] sm:$0xff]
    %v1746 = vld [vmem:[#allocation7 + $0x40] sm:$0xff]
    %v1747 = vld [vmem:[#allocation7 + $0x48] sm:$0xff]
    %v1748 = vld [vmem:[#allocation7 + $0x50] sm:$0xff]
    %v1749 = vld [vmem:[#allocation7 + $0x58] sm:$0xff]
    %v1750 = vld [vmem:[#allocation7 + $0x60] sm:$0xff]
    %v1751 = vld [vmem:[#allocation7 + $0x68] sm:$0xff]
    %v1752 = vld [vmem:[#allocation7 + $0x70] sm:$0xff]
    %v1753 = vld [vmem:[#allocation7 + $0x78] sm:$0xff]
    %v1754 = vld [vmem:[#allocation7 + $0x80] sm:$0xff]
    %v1755 = vld [vmem:[#allocation7 + $0x88] sm:$0xff]
    %v1756 = vld [vmem:[#allocation7 + $0x90] sm:$0xff]
    %v1757 = vld [vmem:[#allocation7 + $0x98] sm:$0xff]
    %v1758 = vld [vmem:[#allocation7 + $0xa0] sm:$0xff]
    %v1759 = vld [vmem:[#allocation7 + $0xa8] sm:$0xff]
    %v1760 = vld [vmem:[#allocation7 + $0xb0] sm:$0xff]
    %v1761 = vld [vmem:[#allocation7 + $0xb8] sm:$0xff]
    %v1762 = vld [vmem:[#allocation7 + $0xc0] sm:$0xff]
    %v1763 = vld [vmem:[#allocation7 + $0xc8] sm:$0xff]
    %v1764 = vld [vmem:[#allocation7 + $0xd0] sm:$0xff]
    %v1765 = vld [vmem:[#allocation7 + $0xd8] sm:$0xff]
    %v1766 = vld [vmem:[#allocation7 + $0xe0] sm:$0xff]
    %v1767 = vld [vmem:[#allocation7 + $0xe8] sm:$0xff]
    %v1768 = vld [vmem:[#allocation7 + $0xf0] sm:$0xff]
    %v1769 = vld [vmem:[#allocation7 + $0xf8] sm:$0xff]
    %v1770 = vld [vmem:[#allocation7 + $0x100] sm:$0xff]
    %v1771 = vld [vmem:[#allocation7 + $0x108] sm:$0xff]
    %v1772 = vld [vmem:[#allocation7 + $0x110] sm:$0xff]
    %v1773 = vld [vmem:[#allocation7 + $0x118] sm:$0xff]
    %v1774 = vld [vmem:[#allocation7 + $0x120] sm:$0xff]
    %v1775 = vld [vmem:[#allocation7 + $0x128] sm:$0xff]
    %v1776 = vld [vmem:[#allocation7 + $0x130] sm:$0xff]
    %v1777 = vld [vmem:[#allocation7 + $0x138] sm:$0xff]
    %v1778 = vld [vmem:[#allocation7 + $0x140] sm:$0xff]
    %v1779 = vld [vmem:[#allocation7 + $0x148] sm:$0xff]
    %v1780 = vld [vmem:[#allocation7 + $0x150] sm:$0xff]
    %v1781 = vld [vmem:[#allocation7 + $0x158] sm:$0xff]
    %v1782 = vld [vmem:[#allocation7 + $0x160] sm:$0xff]
    %v1783 = vld [vmem:[#allocation7 + $0x168] sm:$0xff]
    %v1784 = vld [vmem:[#allocation7 + $0x170] sm:$0xff]
    %v1785 = vld [vmem:[#allocation7 + $0x178] sm:$0xff]
    %v1786 = vld [vmem:[#allocation7 + $0x180] sm:$0xff]
    %v1787 = vld [vmem:[#allocation7 + $0x188] sm:$0xff]
    %v1788 = vld [vmem:[#allocation7 + $0x190] sm:$0xff]
    %v1789 = vld [vmem:[#allocation7 + $0x198] sm:$0xff]
    %v1790 = vld [vmem:[#allocation7 + $0x1a0] sm:$0xff]
    %v1791 = vld [vmem:[#allocation7 + $0x1a8] sm:$0xff]
    %v1792 = vld [vmem:[#allocation7 + $0x1b0] sm:$0xff]
    %v1793 = vld [vmem:[#allocation7 + $0x1b8] sm:$0xff]
    %v1794 = vld [vmem:[#allocation7 + $0x1c0] sm:$0xff]
    %v1795 = vld [vmem:[#allocation7 + $0x1c8] sm:$0xff]
    %v1796 = vld [vmem:[#allocation7 + $0x1d0] sm:$0xff]
    %v1797 = vld [vmem:[#allocation7 + $0x1d8] sm:$0xff]
    %v1798 = vld [vmem:[#allocation7 + $0x1e0] sm:$0xff]
    %v1799 = vld [vmem:[#allocation7 + $0x1e8] sm:$0xff]
    %v1800 = vld [vmem:[#allocation7 + $0x1f0] sm:$0xff]
    %v1801 = vld [vmem:[#allocation7 + $0x1f8] sm:$0xff]
    %1802 = vmatprep.subr.mxu0 %v1739
    %1803 = vmatpush1.msra.mxu0 %v1738
    %1804 = vmatprep.subr.mxu0 %v1743
    %1805 = vmatpush1.msra.mxu0 %v1742
    %1806 = vmatprep.subr.mxu0 %v1747
    %1807 = vmatpush1.msra.mxu0 %v1746
    %1808 = vmatprep.subr.mxu0 %v1751
    %1809 = vmatpush1.msra.mxu0 %v1750
    %1810 = vmatprep.subr.mxu0 %v1755
    %1811 = vmatpush1.msra.mxu0 %v1754
    %1812 = vmatprep.subr.mxu0 %v1759
    %1813 = vmatpush1.msra.mxu0 %v1758
    %1814 = vmatprep.subr.mxu0 %v1763
    %1815 = vmatpush1.msra.mxu0 %v1762
    %1816 = vmatprep.subr.mxu0 %v1767
    %1817 = vmatpush1.msra.mxu0 %v1766
    %1818 = vmatprep.subr.mxu0 %v1771
    %1819 = vmatpush1.msra.mxu0 %v1770
    %1820 = vmatprep.subr.mxu0 %v1775
    %1821 = vmatpush1.msra.mxu0 %v1774
    %1822 = vmatprep.subr.mxu0 %v1779
    %1823 = vmatpush1.msra.mxu0 %v1778
    %1824 = vmatprep.subr.mxu0 %v1783
    %1825 = vmatpush1.msra.mxu0 %v1782
    %1826 = vmatprep.subr.mxu0 %v1787
    %1827 = vmatpush1.msra.mxu0 %v1786
    %1828 = vmatprep.subr.mxu0 %v1791
    %1829 = vmatpush1.msra.mxu0 %v1790
    %1830 = vmatprep.subr.mxu0 %v1795
    %1831 = vmatpush1.msra.mxu0 %v1794
    %1832 = vmatprep.subr.mxu0 %v1799
    %1833 = vmatpush1.msra.mxu0 %v1798
    %1834 = vmatprep.subr.mxu0 0.0
    %1835 = vmatpush1.msra.mxu0 0.0
    %1836 = vmatprep.subr.mxu0 0.0
    %1837 = vmatpush1.msra.mxu0 0.0
    %1838 = vmatprep.subr.mxu0 0.0
    %1839 = vmatpush1.msra.mxu0 0.0
    %1840 = vmatprep.subr.mxu0 0.0
    %1841 = vmatpush1.msra.mxu0 0.0
    %1842 = vmatprep.subr.mxu0 0.0
    %1843 = vmatpush1.msra.mxu0 0.0
    %1844 = vmatprep.subr.mxu0 0.0
    %1845 = vmatpush1.msra.mxu0 0.0
    %1846 = vmatprep.subr.mxu0 0.0
    %1847 = vmatpush1.msra.mxu0 0.0
    %1848 = vmatprep.subr.mxu0 0.0
    %1849 = vmatpush1.msra.mxu0 0.0
    %1850 = vmatprep.subr.mxu0 0.0
    %1851 = vmatpush1.msra.mxu0 0.0
    %1852 = vmatprep.subr.mxu0 0.0
    %1853 = vmatpush1.msra.mxu0 0.0
    %1854 = vmatprep.subr.mxu0 0.0
    %1855 = vmatpush1.msra.mxu0 0.0
    %1856 = vmatprep.subr.mxu0 0.0
    %1857 = vmatpush1.msra.mxu0 0.0
    %1858 = vmatprep.subr.mxu0 0.0
    %1859 = vmatpush1.msra.mxu0 0.0
    %1860 = vmatprep.subr.mxu0 0.0
    %1861 = vmatpush1.msra.mxu0 0.0
    %1862 = vmatprep.subr.mxu0 0.0
    %1863 = vmatpush1.msra.mxu0 0.0
    %1864 = vmatprep.subr.mxu0 0.0
    %1865 = vmatpush1.msra.mxu0 0.0
    %1866 = vmatprep.mubr.f32.mxu0 0.0
    %1867 = vmatmul.mubr.f32.gmra.mrb[0].mxu0 %v1730
    %v1868 = vpop.f32.mrb[0].mxu0
    %v1869 = vadd.f32 0.0, %v1868
    %v1870 = vpop.f32.mrb[0].mxu0
    %v1871 = vadd.f32 0.0, %v1870
    %1872 = vdwg.mxu0
    %1873 = vmatprep.subr.mxu0 %v1741
    %1874 = vmatpush1.msra.mxu0 %v1740
    %1875 = vmatprep.subr.mxu0 %v1745
    %1876 = vmatpush1.msra.mxu0 %v1744
    %1877 = vmatprep.subr.mxu0 %v1749
    %1878 = vmatpush1.msra.mxu0 %v1748
    %1879 = vmatprep.subr.mxu0 %v1753
    %1880 = vmatpush1.msra.mxu0 %v1752
    %1881 = vmatprep.subr.mxu0 %v1757
    %1882 = vmatpush1.msra.mxu0 %v1756
    %1883 = vmatprep.subr.mxu0 %v1761
    %1884 = vmatpush1.msra.mxu0 %v1760
    %1885 = vmatprep.subr.mxu0 %v1765
    %1886 = vmatpush1.msra.mxu0 %v1764
    %1887 = vmatprep.subr.mxu0 %v1769
    %1888 = vmatpush1.msra.mxu0 %v1768
    %1889 = vmatprep.subr.mxu0 %v1773
    %1890 = vmatpush1.msra.mxu0 %v1772
    %1891 = vmatprep.subr.mxu0 %v1777
    %1892 = vmatpush1.msra.mxu0 %v1776
    %1893 = vmatprep.subr.mxu0 %v1781
    %1894 = vmatpush1.msra.mxu0 %v1780
    %1895 = vmatprep.subr.mxu0 %v1785
    %1896 = vmatpush1.msra.mxu0 %v1784
    %1897 = vmatprep.subr.mxu0 %v1789
    %1898 = vmatpush1.msra.mxu0 %v1788
    %1899 = vmatprep.subr.mxu0 %v1793
    %1900 = vmatpush1.msra.mxu0 %v1792
    %1901 = vmatprep.subr.mxu0 %v1797
    %1902 = vmatpush1.msra.mxu0 %v1796
    %1903 = vmatprep.subr.mxu0 %v1801
    %1904 = vmatpush1.msra.mxu0 %v1800
    %1905 = vmatprep.subr.mxu0 0.0
    %1906 = vmatpush1.msra.mxu0 0.0
    %1907 = vmatprep.subr.mxu0 0.0
    %1908 = vmatpush1.msra.mxu0 0.0
    %1909 = vmatprep.subr.mxu0 0.0
    %1910 = vmatpush1.msra.mxu0 0.0
    %1911 = vmatprep.subr.mxu0 0.0
    %1912 = vmatpush1.msra.mxu0 0.0
    %1913 = vmatprep.subr.mxu0 0.0
    %1914 = vmatpush1.msra.mxu0 0.0
    %1915 = vmatprep.subr.mxu0 0.0
    %1916 = vmatpush1.msra.mxu0 0.0
    %1917 = vmatprep.subr.mxu0 0.0
    %1918 = vmatpush1.msra.mxu0 0.0
    %1919 = vmatprep.subr.mxu0 0.0
    %1920 = vmatpush1.msra.mxu0 0.0
    %1921 = vmatprep.subr.mxu0 0.0
    %1922 = vmatpush1.msra.mxu0 0.0
    %1923 = vmatprep.subr.mxu0 0.0
    %1924 = vmatpush1.msra.mxu0 0.0
    %1925 = vmatprep.subr.mxu0 0.0
    %1926 = vmatpush1.msra.mxu0 0.0
    %1927 = vmatprep.subr.mxu0 0.0
    %1928 = vmatpush1.msra.mxu0 0.0
    %1929 = vmatprep.subr.mxu0 0.0
    %1930 = vmatpush1.msra.mxu0 0.0
    %1931 = vmatprep.subr.mxu0 0.0
    %1932 = vmatpush1.msra.mxu0 0.0
    %1933 = vmatprep.subr.mxu0 0.0
    %1934 = vmatpush1.msra.mxu0 0.0
    %1935 = vmatprep.subr.mxu0 0.0
    %1936 = vmatpush1.msra.mxu0 0.0
    %1937 = vmatprep.mubr.f32.mxu0 0.0
    %1938 = vmatmul.mubr.f32.gmra.mrb[0].mxu0 %v1730
    %v1939 = vpop.f32.mrb[0].mxu0
    %v1940 = vadd.f32 0.0, %v1939
    %v1941 = vpop.f32.mrb[0].mxu0
    %v1942 = vadd.f32 0.0, %v1941
    %1943 = vdwg.mxu0
    %v1944 = vadd.f32 %v1734, %v1869
    %v1945 = vadd.f32 %v1735, %v1871
    %v1946 = vadd.f32 %v1736, %v1940
    %v1947 = vadd.f32 %v1737, %v1942
    %v1948 = vxor.u32 %v1944, 2147483648
    %v1949 = vxor.u32 %v1945, 2147483648
    %v1950 = vxor.u32 %v1946, 2147483648
    %v1951 = vmul.f32 %v1948, 1.442695
    %v1952 = vpow.pop %v1951
    %v1953 = vmul.f32 %v1949, 1.442695
    %v1954 = vpow.pop %v1953
    %v1955 = vmul.f32 %v1950, 1.442695
    %v1956 = vpow.pop %v1955
    %v1957 = vadd.f32 %v1952, 1.0
    %v1958 = vadd.f32 %v1954, 1.0
    %v1959 = vadd.f32 %v1956, 1.0
    %v1960 = vrcp.pop %v1957
    %v1961 = vmul.f32 1.0, %v1960
    %v1962 = vrcp.pop %v1958
    %v1963 = vmul.f32 1.0, %v1962
    %v1964 = vrcp.pop %v1959
    %v1965 = vmul.f32 1.0, %v1964
    %v1966 = vtanh.pop %v1947
    %v1967 = vmul.f32 %v1963, %v1728
    %v1968 = vmul.f32 %v1961, %v1966
    %v1969 = vadd.f32 %v1967, %v1968
    %v1970 = vtanh.pop %v1969
    %v1971 = vmul.f32 %v1965, %v1970
    %s1972 = scalar_lea.vmem [#allocation9], 56
    %1973 = vst [vmem:[%s1972] sm:$0xff] %v1971
    %1974 = vst [vmem:[#allocation2] sm:$0xff] %v1971
    %1975 = vst [vmem:[#allocation3] sm:$0xff] %v1969
    // Predicated region
    $region22: #{tpu_custom_call.1} parent=1 // pred_check
      _
    $region23: #{tpu_custom_call.1} parent=1 // pred_check_branch
      %1977 = sbr.rel (0) target = $region25
    $region24: #{tpu_custom_call.1} parent=1 // pred_region
      %s1979 = ssub.s32 1024, 1024
      %1980 = vsyncadd [#allocation6], %s1979
      %s1981 = sshll.u32 [#allocation9], 4
      %s1982 = int_to_ptr.vmem [resolvable:$true] %s1981
      %1987 = dma.vmem_to_hbm [thread:$0]  %s1982, 1024, %s2, [#allocation6], 128, 128, 8
    $region25: #{tpu_custom_call.1} parent=1 // pred_fallthru
      _
    // Predicated region
    $region26: #{tpu_custom_call.1} parent=1 // pred_check
      _
    $region27: #{tpu_custom_call.1} parent=1 // pred_check_branch
      %1989 = sbr.rel (0) target = $region29
    $region28: #{tpu_custom_call.1} parent=1 // pred_region
      %1990 = dma.done [#allocation6], 1024
    $region29: #{tpu_custom_call.1} parent=1 // pred_fallthru
      _
    %1991 = vsyncpa [#allocation5], 1
    %1992 = vsyncpa [#allocation8], 1
    %1993 = vsyncpa [#allocation6], 1

</llo_original>
